<compile_context>
chip_gen: v5e
topology: v5e:2x2
jax: 0.10.0
libtpu: 0.0.40
codegen_flags: <defaults>
</compile_context>

<pallas_src>
import jax
import jax.numpy as jnp
import numpy as np
from jax import lax
from jax.experimental import pallas as pl
from jax.experimental.pallas import tpu as pltpu


# --------------------------- fused Pallas kernel ------------------------------

def policy_kernel(x_ref, state_ref,
                  cw1_ref, cb1_ref, cw2_ref, cb2_ref,
                  wfa_ref, wfs_ref, bf_ref,
                  mw1_ref, mb1_ref, mw2_ref, mb2_ref,
                  o_ref, y1p_ref, y2_ref):
    """Whole Policy forward in one kernel.

    x_ref:   [B, 5, 5, 64]  space-to-depth(4x4) image, top/left zero-padded.
    y1p_ref: [B, 5, 5, 32]  scratch: conv1 output in space-to-depth(2x2) layout
                            (channels = (row parity, col parity, C1)), padded.
    y2_ref:  [B, 16, 16]    scratch: conv2 output rows (b, oy*4+ox, C2).
    """
    f32, bf16 = jnp.float32, jnp.bfloat16
    B = x_ref.shape[0]

    # ---- conv1: 2x2 block-conv over 4x4 space-to-depth blocks (K = 4*4*4 = 64).
    # Output channels are produced directly in the space-to-depth layout that
    # conv2 consumes, so no parity split / strided access is ever needed.
    y1p_ref[...] = jnp.zeros(y1p_ref.shape, y1p_ref.dtype)      # zero the pad ring
    for b in range(B):
        for yb in range(4):                                      # y1 block row
            acc = None
            for by in range(2):
                for bx in range(2):
                    xs = x_ref[b, yb + by, bx:bx + 4, :].astype(bf16)      # [4, 64]
                    d = jnp.dot(xs, cw1_ref[by * 2 + bx],
                                preferred_element_type=f32)                # [4, 32]
                    acc = d if acc is None else acc + d
            y1p_ref[b, yb + 1, 1:5, :] = jnp.maximum(acc + cb1_ref[...], 0.0)

    # ---- conv2: 2x2 block-conv over the padded space-to-depth y1 (K = 2*2*8 = 32).
    for b in range(B):
        for oy in range(4):
            acc = None
            for by in range(2):
                for bx in range(2):
                    xs = y1p_ref[b, oy + by, bx:bx + 4, :].astype(bf16)    # [4, 32]
                    d = jnp.dot(xs, cw2_ref[by * 2 + bx],
                                preferred_element_type=f32)                # [4, 16]
                    acc = d if acc is None else acc + d
            y2_ref[b, 4 * oy:4 * oy + 4, :] = jnp.maximum(acc + cb2_ref[...], 0.0)

    # ---- head: feature = relu(flat @ Wfa + state @ Wfs + bf); 2-layer MLP.
    # The PyTorch NCHW flatten is folded into Wfa's row order at prep time, so
    # y2 is consumed row-by-row without any in-kernel reshape/transpose.
    feat = jnp.dot(state_ref[...].astype(bf16), wfs_ref[...],
                   preferred_element_type=f32)                             # [B, 32]
    for s in range(16):
        feat = feat + jnp.dot(y2_ref[:, s, :].astype(bf16), wfa_ref[s],
                              preferred_element_type=f32)
    feat = jnp.maximum(feat + bf_ref[...], 0.0)

    h = jnp.maximum(jnp.dot(feat.astype(bf16), mw1_ref[...],
                            preferred_element_type=f32) + mb1_ref[...], 0.0)
    out = jnp.dot(h.astype(bf16), mw2_ref[...],
                  preferred_element_type=f32) + mb2_ref[...]
    o_ref[...] = out.astype(o_ref.dtype)


# --------------------------- host-side weight prep ----------------------------

def prepare_params(params):
    """Repack PyTorch-layout weights into the kernel's layouts (runs once, host)."""
    c1w = np.asarray(params["conv1_w"], np.float32)   # [8, 4, 3, 3]  OIHW
    c1b = np.asarray(params["conv1_b"], np.float32)   # [8]
    c2w = np.asarray(params["conv2_w"], np.float32)   # [16, 8, 3, 3]
    c2b = np.asarray(params["conv2_b"], np.float32)   # [16]
    wfa = np.asarray(params["w_fa"], np.float32)      # [256, 32]
    wfs = np.asarray(params["w_fs"], np.float32)      # [8, 32]
    bf_ = np.asarray(params["b_f"], np.float32)       # [32]
    w1 = np.asarray(params["w1"], np.float32)         # [32, 32]
    b1 = np.asarray(params["b1"], np.float32)         # [32]
    w2 = np.asarray(params["w2"], np.float32)         # [32, 4]
    b2 = np.asarray(params["b2"], np.float32)         # [4]
    oc1, ic1 = c1w.shape[:2]                          # 8, 4
    oc2, ic2 = c2w.shape[:2]                          # 16, 8

    # conv1 as 2x2 block-conv over 4x4 space-to-depth blocks.  Original tap
    # index i (rows 2*oy - 1 + i) maps, per output parity d, to
    # (block offset, within-block row) = (0, 3) if 2d-1+i < 0 else (1, 2d-1+i).
    def tap4(d, t):
        e = 2 * d - 1 + t
        return (0, 3) if e < 0 else (1, e)

    cw1 = np.zeros((2, 2, 4, 4, ic1, 2, 2, oc1), np.float32)
    for dy in range(2):
        for i in range(3):
            by, ry = tap4(dy, i)
            for dx in range(2):
                for j in range(3):
                    bx, rx = tap4(dx, j)
                    cw1[by, bx, ry, rx, :, dy, dx, :] = c1w[:, :, i, j].T
    cw1 = cw1.reshape(4, 4 * 4 * ic1, 4 * oc1)        # [tap, 64, 32]
    cb1 = np.tile(c1b, 4)[None, :]                    # [1, 32] (dy, dx, C1)

    # conv2 as 2x2 block-conv over 2x2 space-to-depth y1 blocks.
    tap2 = {0: (0, 1), 1: (1, 0), 2: (1, 1)}          # 3x3 tap -> (block, parity)
    cw2 = np.zeros((2, 2, 2, 2, ic2, oc2), np.float32)
    for i in range(3):
        by, dy = tap2[i]
        for j in range(3):
            bx, dx = tap2[j]
            cw2[by, bx, dy, dx, :, :] = c2w[:, :, i, j].T
    cw2 = cw2.reshape(4, 4 * ic2, oc2)                # [tap, 32, 16]
    cb2 = c2b[None, :]                                # [1, 16]

    # Fold the PyTorch NCHW flatten (index = c2*16 + oy*4 + ox) into Wfa:
    # block s = oy*4 + ox consumes the [C2]-channel y2 row at that position.
    wfa_blk = wfa.reshape(oc2, 16, wfa.shape[1]).transpose(1, 0, 2)  # [16, 16, 32]

    bf16, f32 = jnp.bfloat16, jnp.float32
    return {
        "cw1": jnp.asarray(cw1, bf16), "cb1": jnp.asarray(cb1, f32),
        "cw2": jnp.asarray(cw2, bf16), "cb2": jnp.asarray(cb2, f32),
        "wfa": jnp.asarray(wfa_blk, bf16),
        "wfs": jnp.asarray(wfs, bf16), "bf": jnp.asarray(bf_[None, :], f32),
        "mw1": jnp.asarray(w1, bf16), "mb1": jnp.asarray(b1[None, :], f32),
        "mw2": jnp.asarray(w2, bf16), "mb2": jnp.asarray(b2[None, :], f32),
    }


# --------------------------- forward wrapper ----------------------------------

@jax.jit
def policy_forward(kp, state, image):
    """image: [B, 4, 16, 16] NCHW (PyTorch), state: [B, 8] -> action [B, 4]."""
    B, C, H, W = image.shape
    # space-to-depth(4): [B, H/4, W/4, (ry, rx, c) = 64], then top/left zero pad
    # (bottom/right padding of the stride-2 convs is never read). Cheap fused
    # XLA layout plumbing; everything else happens inside the single kernel.
    x = image.reshape(B, C, H // 4, 4, W // 4, 4)
    x = jnp.transpose(x, (0, 2, 4, 3, 5, 1)).reshape(B, H // 4, W // 4, 16 * C)
    x = jnp.pad(x, ((0, 0), (1, 0), (1, 0), (0, 0)))            # [B, 5, 5, 64]

    vmem = lambda: pl.BlockSpec(memory_space=pltpu.MemorySpace.VMEM)
    return pl.pallas_call(
        policy_kernel,
        out_shape=jax.ShapeDtypeStruct((B, 4), jnp.float32),
        in_specs=[vmem() for _ in range(13)],
        out_specs=vmem(),
        scratch_shapes=[
            pltpu.VMEM((B, 5, 5, 32), jnp.float32),   # padded y1 (s2d layout)
            pltpu.VMEM((B, 16, 16), jnp.float32),     # y2 rows (b, oy*4+ox, C2)
        ],
    )(x, state,
      kp["cw1"], kp["cb1"], kp["cw2"], kp["cb2"],
      kp["wfa"], kp["wfs"], kp["bf"],
      kp["mw1"], kp["mb1"], kp["mw2"], kp["mb2"])


# --------------------------- pure-JAX reference --------------------------------

def policy_reference(params, state, image):
    dn = ("NCHW", "OIHW", "NCHW")
    y1 = lax.conv_general_dilated(image, params["conv1_w"], (2, 2),
                                  ((1, 1), (1, 1)), dimension_numbers=dn)
    y1 = jnp.maximum(y1 + params["conv1_b"][None, :, None, None], 0.0)
    y2 = lax.conv_general_dilated(y1, params["conv2_w"], (2, 2),
                                  ((1, 1), (1, 1)), dimension_numbers=dn)
    y2 = jnp.maximum(y2 + params["conv2_b"][None, :, None, None], 0.0)
    flat = y2.reshape(y2.shape[0], -1)
    feat = jnp.maximum(flat @ params["w_fa"] + state @ params["w_fs"]
                       + params["b_f"], 0.0)
    h = jnp.maximum(feat @ params["w1"] + params["b1"], 0.0)
    return h @ params["w2"] + params["b2"]


# --------------------------- parameter init -----------------------------------

def init_params(key):
    ks = jax.random.split(key, 10)

    def dense(k, shape, fan_in):
        return jax.random.normal(k, shape, jnp.float32) / np.sqrt(fan_in)

    C_in, C1, C2 = 4, 8, 16
    S, F, H1, A = 8, 32, 32, 4
    flat_dim = C2 * 4 * 4                              # 16x16 image, two stride-2 convs

    return {
        "conv1_w": dense(ks[0], (C1, C_in, 3, 3), C_in * 9),
        "conv1_b": dense(ks[1], (C1,), C_in * 9),
        "conv2_w": dense(ks[2], (C2, C1, 3, 3), C1 * 9),
        "conv2_b": dense(ks[3], (C2,), C1 * 9),
        "w_fa": dense(ks[4], (flat_dim, F), flat_dim + S),
        "w_fs": dense(ks[5], (S, F), flat_dim + S),
        "b_f": dense(ks[6], (F,), flat_dim + S),
        "w1": dense(ks[7], (F, H1), F),
        "b1": jnp.zeros((H1,), jnp.float32),
        "w2": dense(ks[8], (H1, A), H1),
        "b2": jnp.zeros((A,), jnp.float32),
    }


# --------------------------- main ----------------------------------------------

if __name__ == "__main__":
    key = jax.random.PRNGKey(0)
    k_p, k_s, k_i = jax.random.split(key, 3)

    params = init_params(k_p)
    state = jax.random.normal(k_s, (2, 8), jnp.float32)          # [B, S]
    image = jax.random.normal(k_i, (2, 4, 16, 16), jnp.float32)  # NCHW

    kp = prepare_params(params)                                   # one-time prep
    out = jax.block_until_ready(policy_forward(kp, state, image))
    ref = jax.block_until_ready(policy_reference(params, state, image))

    # Tolerance sized for bf16 MXU operands (f32 accumulation) vs f32 reference.
    np.testing.assert_allclose(np.asarray(out), np.asarray(ref),
                               rtol=2e-2, atol=5e-2)
    print("KERNEL_OK")
</pallas_src>

<mosaic_0001>
module attributes {stable_mosaic.version = 11 : i64} {
  func.func @policy_kernel(%arg0: memref<2x5x5x64xf32, #tpu.memory_space<vmem>>, %arg1: memref<2x8xf32, #tpu.memory_space<vmem>>, %arg2: memref<4x64x32xbf16, #tpu.memory_space<vmem>>, %arg3: memref<1x32xf32, #tpu.memory_space<vmem>>, %arg4: memref<4x32x16xbf16, #tpu.memory_space<vmem>>, %arg5: memref<1x16xf32, #tpu.memory_space<vmem>>, %arg6: memref<16x16x32xbf16, #tpu.memory_space<vmem>>, %arg7: memref<8x32xbf16, #tpu.memory_space<vmem>>, %arg8: memref<1x32xf32, #tpu.memory_space<vmem>>, %arg9: memref<32x32xbf16, #tpu.memory_space<vmem>>, %arg10: memref<1x32xf32, #tpu.memory_space<vmem>>, %arg11: memref<32x4xbf16, #tpu.memory_space<vmem>>, %arg12: memref<1x4xf32, #tpu.memory_space<vmem>>, %arg13: memref<2x4xf32, #tpu.memory_space<vmem>>, %arg14: memref<2x5x5x32xf32, #tpu.memory_space<vmem>>, %arg15: memref<2x16x16xf32, #tpu.memory_space<vmem>>) attributes {dimension_semantics = [], scalar_prefetch = 0 : i64, scratch_operands = 2 : i64, tpu.core_type = #tpu.core_type<tc>} {
    %cst = arith.constant 0.000000e+00 : f32
    %0 = vector.broadcast %cst : f32 to vector<2x5x5x32xf32>
    %c0 = arith.constant 0 : index
    %c0_0 = arith.constant 0 : index
    %c0_1 = arith.constant 0 : index
    %c0_2 = arith.constant 0 : index
    %1 = vector.load %arg14[%c0, %c0_0, %c0_1, %c0_2] : memref<2x5x5x32xf32, #tpu.memory_space<vmem>>, vector<2x5x5x32xf32>
    tpu.vector_store %arg14[%c0, %c0_0, %c0_1, %c0_2], %0 {strides = array<i32>} : memref<2x5x5x32xf32, #tpu.memory_space<vmem>>, vector<2x5x5x32xf32>,
    %c0_3 = arith.constant 0 : index
    %c0_4 = arith.constant 0 : index
    %c0_5 = arith.constant 0 : index
    %c0_6 = arith.constant 0 : index
    %2 = vector.load %arg0[%c0_3, %c0_4, %c0_5, %c0_6] : memref<2x5x5x64xf32, #tpu.memory_space<vmem>>, vector<1x1x4x64xf32>
    %3 = vector.shape_cast %2 : vector<1x1x4x64xf32> to vector<4x64xf32>
    %4 = arith.truncf %3 : vector<4x64xf32> to vector<4x64xbf16>
    %c0_7 = arith.constant 0 : index
    %c0_8 = arith.constant 0 : index
    %c0_9 = arith.constant 0 : index
    %5 = vector.load %arg2[%c0_7, %c0_8, %c0_9] : memref<4x64x32xbf16, #tpu.memory_space<vmem>>, vector<1x64x32xbf16>
    %6 = vector.shape_cast %5 : vector<1x64x32xbf16> to vector<64x32xbf16>
    %cst_10 = arith.constant dense<0.000000e+00> : vector<4x32xf32>
    %7 = tpu.matmul %4, %6, %cst_10 {dimension_numbers = #tpu.dot_dimension_numbers<[1], [0], [0], [1], [0, 0, 1, 1], [], []>} : vector<4x64xbf16>, vector<64x32xbf16>, vector<4x32xf32> -> vector<4x32xf32>
    %c0_11 = arith.constant 0 : index
    %c0_12 = arith.constant 0 : index
    %c1 = arith.constant 1 : index
    %c0_13 = arith.constant 0 : index
    %8 = vector.load %arg0[%c0_11, %c0_12, %c1, %c0_13] : memref<2x5x5x64xf32, #tpu.memory_space<vmem>>, vector<1x1x4x64xf32>
    %9 = vector.shape_cast %8 : vector<1x1x4x64xf32> to vector<4x64xf32>
    %10 = arith.truncf %9 : vector<4x64xf32> to vector<4x64xbf16>
    %c1_14 = arith.constant 1 : index
    %c0_15 = arith.constant 0 : index
    %c0_16 = arith.constant 0 : index
    %11 = vector.load %arg2[%c1_14, %c0_15, %c0_16] : memref<4x64x32xbf16, #tpu.memory_space<vmem>>, vector<1x64x32xbf16>
    %12 = vector.shape_cast %11 : vector<1x64x32xbf16> to vector<64x32xbf16>
    %cst_17 = arith.constant dense<0.000000e+00> : vector<4x32xf32>
    %13 = tpu.matmul %10, %12, %cst_17 {dimension_numbers = #tpu.dot_dimension_numbers<[1], [0], [0], [1], [0, 0, 1, 1], [], []>} : vector<4x64xbf16>, vector<64x32xbf16>, vector<4x32xf32> -> vector<4x32xf32>
    %14 = arith.addf %7, %13 : vector<4x32xf32>
    %c0_18 = arith.constant 0 : index
    %c1_19 = arith.constant 1 : index
    %c0_20 = arith.constant 0 : index
    %c0_21 = arith.constant 0 : index
    %15 = vector.load %arg0[%c0_18, %c1_19, %c0_20, %c0_21] : memref<2x5x5x64xf32, #tpu.memory_space<vmem>>, vector<1x1x4x64xf32>
    %16 = vector.shape_cast %15 : vector<1x1x4x64xf32> to vector<4x64xf32>
    %17 = arith.truncf %16 : vector<4x64xf32> to vector<4x64xbf16>
    %c2 = arith.constant 2 : index
    %c0_22 = arith.constant 0 : index
    %c0_23 = arith.constant 0 : index
    %18 = vector.load %arg2[%c2, %c0_22, %c0_23] : memref<4x64x32xbf16, #tpu.memory_space<vmem>>, vector<1x64x32xbf16>
    %19 = vector.shape_cast %18 : vector<1x64x32xbf16> to vector<64x32xbf16>
    %cst_24 = arith.constant dense<0.000000e+00> : vector<4x32xf32>
    %20 = tpu.matmul %17, %19, %cst_24 {dimension_numbers = #tpu.dot_dimension_numbers<[1], [0], [0], [1], [0, 0, 1, 1], [], []>} : vector<4x64xbf16>, vector<64x32xbf16>, vector<4x32xf32> -> vector<4x32xf32>
    %21 = arith.addf %14, %20 : vector<4x32xf32>
    %c0_25 = arith.constant 0 : index
    %c1_26 = arith.constant 1 : index
    %c1_27 = arith.constant 1 : index
    %c0_28 = arith.constant 0 : index
    %22 = vector.load %arg0[%c0_25, %c1_26, %c1_27, %c0_28] : memref<2x5x5x64xf32, #tpu.memory_space<vmem>>, vector<1x1x4x64xf32>
    %23 = vector.shape_cast %22 : vector<1x1x4x64xf32> to vector<4x64xf32>
    %24 = arith.truncf %23 : vector<4x64xf32> to vector<4x64xbf16>
    %c3 = arith.constant 3 : index
    %c0_29 = arith.constant 0 : index
    %c0_30 = arith.constant 0 : index
    %25 = vector.load %arg2[%c3, %c0_29, %c0_30] : memref<4x64x32xbf16, #tpu.memory_space<vmem>>, vector<1x64x32xbf16>
    %26 = vector.shape_cast %25 : vector<1x64x32xbf16> to vector<64x32xbf16>
    %cst_31 = arith.constant dense<0.000000e+00> : vector<4x32xf32>
    %27 = tpu.matmul %24, %26, %cst_31 {dimension_numbers = #tpu.dot_dimension_numbers<[1], [0], [0], [1], [0, 0, 1, 1], [], []>} : vector<4x64xbf16>, vector<64x32xbf16>, vector<4x32xf32> -> vector<4x32xf32>
    %28 = arith.addf %21, %27 : vector<4x32xf32>
    %c0_32 = arith.constant 0 : index
    %c0_33 = arith.constant 0 : index
    %29 = vector.load %arg3[%c0_32, %c0_33] : memref<1x32xf32, #tpu.memory_space<vmem>>, vector<1x32xf32>
    %30 = vector.broadcast %29 : vector<1x32xf32> to vector<4x32xf32>
    %31 = arith.addf %28, %30 : vector<4x32xf32>
    %cst_34 = arith.constant 0.000000e+00 : f32
    %32 = vector.broadcast %cst_34 : f32 to vector<4x32xf32>
    %33 = arith.maximumf %31, %32 : vector<4x32xf32>
    %c0_35 = arith.constant 0 : index
    %c1_36 = arith.constant 1 : index
    %c1_37 = arith.constant 1 : index
    %c0_38 = arith.constant 0 : index
    %34 = vector.load %arg14[%c0_35, %c1_36, %c1_37, %c0_38] : memref<2x5x5x32xf32, #tpu.memory_space<vmem>>, vector<1x1x4x32xf32>
    %35 = vector.shape_cast %34 : vector<1x1x4x32xf32> to vector<4x32xf32>
    %36 = vector.shape_cast %33 : vector<4x32xf32> to vector<1x1x4x32xf32>
    tpu.vector_store %arg14[%c0_35, %c1_36, %c1_37, %c0_38], %36 {strides = array<i32>} : memref<2x5x5x32xf32, #tpu.memory_space<vmem>>, vector<1x1x4x32xf32>,
    %c0_39 = arith.constant 0 : index
    %c1_40 = arith.constant 1 : index
    %c0_41 = arith.constant 0 : index
    %c0_42 = arith.constant 0 : index
    %37 = vector.load %arg0[%c0_39, %c1_40, %c0_41, %c0_42] : memref<2x5x5x64xf32, #tpu.memory_space<vmem>>, vector<1x1x4x64xf32>
    %38 = vector.shape_cast %37 : vector<1x1x4x64xf32> to vector<4x64xf32>
    %39 = arith.truncf %38 : vector<4x64xf32> to vector<4x64xbf16>
    %c0_43 = arith.constant 0 : index
    %c0_44 = arith.constant 0 : index
    %c0_45 = arith.constant 0 : index
    %40 = vector.load %arg2[%c0_43, %c0_44, %c0_45] : memref<4x64x32xbf16, #tpu.memory_space<vmem>>, vector<1x64x32xbf16>
    %41 = vector.shape_cast %40 : vector<1x64x32xbf16> to vector<64x32xbf16>
    %cst_46 = arith.constant dense<0.000000e+00> : vector<4x32xf32>
    %42 = tpu.matmul %39, %41, %cst_46 {dimension_numbers = #tpu.dot_dimension_numbers<[1], [0], [0], [1], [0, 0, 1, 1], [], []>} : vector<4x64xbf16>, vector<64x32xbf16>, vector<4x32xf32> -> vector<4x32xf32>
    %c0_47 = arith.constant 0 : index
    %c1_48 = arith.constant 1 : index
    %c1_49 = arith.constant 1 : index
    %c0_50 = arith.constant 0 : index
    %43 = vector.load %arg0[%c0_47, %c1_48, %c1_49, %c0_50] : memref<2x5x5x64xf32, #tpu.memory_space<vmem>>, vector<1x1x4x64xf32>
    %44 = vector.shape_cast %43 : vector<1x1x4x64xf32> to vector<4x64xf32>
    %45 = arith.truncf %44 : vector<4x64xf32> to vector<4x64xbf16>
    %c1_51 = arith.constant 1 : index
    %c0_52 = arith.constant 0 : index
    %c0_53 = arith.constant 0 : index
    %46 = vector.load %arg2[%c1_51, %c0_52, %c0_53] : memref<4x64x32xbf16, #tpu.memory_space<vmem>>, vector<1x64x32xbf16>
    %47 = vector.shape_cast %46 : vector<1x64x32xbf16> to vector<64x32xbf16>
    %cst_54 = arith.constant dense<0.000000e+00> : vector<4x32xf32>
    %48 = tpu.matmul %45, %47, %cst_54 {dimension_numbers = #tpu.dot_dimension_numbers<[1], [0], [0], [1], [0, 0, 1, 1], [], []>} : vector<4x64xbf16>, vector<64x32xbf16>, vector<4x32xf32> -> vector<4x32xf32>
    %49 = arith.addf %42, %48 : vector<4x32xf32>
    %c0_55 = arith.constant 0 : index
    %c2_56 = arith.constant 2 : index
    %c0_57 = arith.constant 0 : index
    %c0_58 = arith.constant 0 : index
    %50 = vector.load %arg0[%c0_55, %c2_56, %c0_57, %c0_58] : memref<2x5x5x64xf32, #tpu.memory_space<vmem>>, vector<1x1x4x64xf32>
    %51 = vector.shape_cast %50 : vector<1x1x4x64xf32> to vector<4x64xf32>
    %52 = arith.truncf %51 : vector<4x64xf32> to vector<4x64xbf16>
    %c2_59 = arith.constant 2 : index
    %c0_60 = arith.constant 0 : index
    %c0_61 = arith.constant 0 : index
    %53 = vector.load %arg2[%c2_59, %c0_60, %c0_61] : memref<4x64x32xbf16, #tpu.memory_space<vmem>>, vector<1x64x32xbf16>
    %54 = vector.shape_cast %53 : vector<1x64x32xbf16> to vector<64x32xbf16>
    %cst_62 = arith.constant dense<0.000000e+00> : vector<4x32xf32>
    %55 = tpu.matmul %52, %54, %cst_62 {dimension_numbers = #tpu.dot_dimension_numbers<[1], [0], [0], [1], [0, 0, 1, 1], [], []>} : vector<4x64xbf16>, vector<64x32xbf16>, vector<4x32xf32> -> vector<4x32xf32>
    %56 = arith.addf %49, %55 : vector<4x32xf32>
    %c0_63 = arith.constant 0 : index
    %c2_64 = arith.constant 2 : index
    %c1_65 = arith.constant 1 : index
    %c0_66 = arith.constant 0 : index
    %57 = vector.load %arg0[%c0_63, %c2_64, %c1_65, %c0_66] : memref<2x5x5x64xf32, #tpu.memory_space<vmem>>, vector<1x1x4x64xf32>
    %58 = vector.shape_cast %57 : vector<1x1x4x64xf32> to vector<4x64xf32>
    %59 = arith.truncf %58 : vector<4x64xf32> to vector<4x64xbf16>
    %c3_67 = arith.constant 3 : index
    %c0_68 = arith.constant 0 : index
    %c0_69 = arith.constant 0 : index
    %60 = vector.load %arg2[%c3_67, %c0_68, %c0_69] : memref<4x64x32xbf16, #tpu.memory_space<vmem>>, vector<1x64x32xbf16>
    %61 = vector.shape_cast %60 : vector<1x64x32xbf16> to vector<64x32xbf16>
    %cst_70 = arith.constant dense<0.000000e+00> : vector<4x32xf32>
    %62 = tpu.matmul %59, %61, %cst_70 {dimension_numbers = #tpu.dot_dimension_numbers<[1], [0], [0], [1], [0, 0, 1, 1], [], []>} : vector<4x64xbf16>, vector<64x32xbf16>, vector<4x32xf32> -> vector<4x32xf32>
    %63 = arith.addf %56, %62 : vector<4x32xf32>
    %c0_71 = arith.constant 0 : index
    %c0_72 = arith.constant 0 : index
    %64 = vector.load %arg3[%c0_71, %c0_72] : memref<1x32xf32, #tpu.memory_space<vmem>>, vector<1x32xf32>
    %65 = vector.broadcast %64 : vector<1x32xf32> to vector<4x32xf32>
    %66 = arith.addf %63, %65 : vector<4x32xf32>
    %cst_73 = arith.constant 0.000000e+00 : f32
    %67 = vector.broadcast %cst_73 : f32 to vector<4x32xf32>
    %68 = arith.maximumf %66, %67 : vector<4x32xf32>
    %c0_74 = arith.constant 0 : index
    %c2_75 = arith.constant 2 : index
    %c1_76 = arith.constant 1 : index
    %c0_77 = arith.constant 0 : index
    %69 = vector.load %arg14[%c0_74, %c2_75, %c1_76, %c0_77] : memref<2x5x5x32xf32, #tpu.memory_space<vmem>>, vector<1x1x4x32xf32>
    %70 = vector.shape_cast %69 : vector<1x1x4x32xf32> to vector<4x32xf32>
    %71 = vector.shape_cast %68 : vector<4x32xf32> to vector<1x1x4x32xf32>
    tpu.vector_store %arg14[%c0_74, %c2_75, %c1_76, %c0_77], %71 {strides = array<i32>} : memref<2x5x5x32xf32, #tpu.memory_space<vmem>>, vector<1x1x4x32xf32>,
    %c0_78 = arith.constant 0 : index
    %c2_79 = arith.constant 2 : index
    %c0_80 = arith.constant 0 : index
    %c0_81 = arith.constant 0 : index
    %72 = vector.load %arg0[%c0_78, %c2_79, %c0_80, %c0_81] : memref<2x5x5x64xf32, #tpu.memory_space<vmem>>, vector<1x1x4x64xf32>
    %73 = vector.shape_cast %72 : vector<1x1x4x64xf32> to vector<4x64xf32>
    %74 = arith.truncf %73 : vector<4x64xf32> to vector<4x64xbf16>
    %c0_82 = arith.constant 0 : index
    %c0_83 = arith.constant 0 : index
    %c0_84 = arith.constant 0 : index
    %75 = vector.load %arg2[%c0_82, %c0_83, %c0_84] : memref<4x64x32xbf16, #tpu.memory_space<vmem>>, vector<1x64x32xbf16>
    %76 = vector.shape_cast %75 : vector<1x64x32xbf16> to vector<64x32xbf16>
    %cst_85 = arith.constant dense<0.000000e+00> : vector<4x32xf32>
    %77 = tpu.matmul %74, %76, %cst_85 {dimension_numbers = #tpu.dot_dimension_numbers<[1], [0], [0], [1], [0, 0, 1, 1], [], []>} : vector<4x64xbf16>, vector<64x32xbf16>, vector<4x32xf32> -> vector<4x32xf32>
    %c0_86 = arith.constant 0 : index
    %c2_87 = arith.constant 2 : index
    %c1_88 = arith.constant 1 : index
    %c0_89 = arith.constant 0 : index
    %78 = vector.load %arg0[%c0_86, %c2_87, %c1_88, %c0_89] : memref<2x5x5x64xf32, #tpu.memory_space<vmem>>, vector<1x1x4x64xf32>
    %79 = vector.shape_cast %78 : vector<1x1x4x64xf32> to vector<4x64xf32>
    %80 = arith.truncf %79 : vector<4x64xf32> to vector<4x64xbf16>
    %c1_90 = arith.constant 1 : index
    %c0_91 = arith.constant 0 : index
    %c0_92 = arith.constant 0 : index
    %81 = vector.load %arg2[%c1_90, %c0_91, %c0_92] : memref<4x64x32xbf16, #tpu.memory_space<vmem>>, vector<1x64x32xbf16>
    %82 = vector.shape_cast %81 : vector<1x64x32xbf16> to vector<64x32xbf16>
    %cst_93 = arith.constant dense<0.000000e+00> : vector<4x32xf32>
    %83 = tpu.matmul %80, %82, %cst_93 {dimension_numbers = #tpu.dot_dimension_numbers<[1], [0], [0], [1], [0, 0, 1, 1], [], []>} : vector<4x64xbf16>, vector<64x32xbf16>, vector<4x32xf32> -> vector<4x32xf32>
    %84 = arith.addf %77, %83 : vector<4x32xf32>
    %c0_94 = arith.constant 0 : index
    %c3_95 = arith.constant 3 : index
    %c0_96 = arith.constant 0 : index
    %c0_97 = arith.constant 0 : index
    %85 = vector.load %arg0[%c0_94, %c3_95, %c0_96, %c0_97] : memref<2x5x5x64xf32, #tpu.memory_space<vmem>>, vector<1x1x4x64xf32>
    %86 = vector.shape_cast %85 : vector<1x1x4x64xf32> to vector<4x64xf32>
    %87 = arith.truncf %86 : vector<4x64xf32> to vector<4x64xbf16>
    %c2_98 = arith.constant 2 : index
    %c0_99 = arith.constant 0 : index
    %c0_100 = arith.constant 0 : index
    %88 = vector.load %arg2[%c2_98, %c0_99, %c0_100] : memref<4x64x32xbf16, #tpu.memory_space<vmem>>, vector<1x64x32xbf16>
    %89 = vector.shape_cast %88 : vector<1x64x32xbf16> to vector<64x32xbf16>
    %cst_101 = arith.constant dense<0.000000e+00> : vector<4x32xf32>
    %90 = tpu.matmul %87, %89, %cst_101 {dimension_numbers = #tpu.dot_dimension_numbers<[1], [0], [0], [1], [0, 0, 1, 1], [], []>} : vector<4x64xbf16>, vector<64x32xbf16>, vector<4x32xf32> -> vector<4x32xf32>
    %91 = arith.addf %84, %90 : vector<4x32xf32>
    %c0_102 = arith.constant 0 : index
    %c3_103 = arith.constant 3 : index
    %c1_104 = arith.constant 1 : index
    %c0_105 = arith.constant 0 : index
    %92 = vector.load %arg0[%c0_102, %c3_103, %c1_104, %c0_105] : memref<2x5x5x64xf32, #tpu.memory_space<vmem>>, vector<1x1x4x64xf32>
    %93 = vector.shape_cast %92 : vector<1x1x4x64xf32> to vector<4x64xf32>
    %94 = arith.truncf %93 : vector<4x64xf32> to vector<4x64xbf16>
    %c3_106 = arith.constant 3 : index
    %c0_107 = arith.constant 0 : index
    %c0_108 = arith.constant 0 : index
    %95 = vector.load %arg2[%c3_106, %c0_107, %c0_108] : memref<4x64x32xbf16, #tpu.memory_space<vmem>>, vector<1x64x32xbf16>
    %96 = vector.shape_cast %95 : vector<1x64x32xbf16> to vector<64x32xbf16>
    %cst_109 = arith.constant dense<0.000000e+00> : vector<4x32xf32>
    %97 = tpu.matmul %94, %96, %cst_109 {dimension_numbers = #tpu.dot_dimension_numbers<[1], [0], [0], [1], [0, 0, 1, 1], [], []>} : vector<4x64xbf16>, vector<64x32xbf16>, vector<4x32xf32> -> vector<4x32xf32>
    %98 = arith.addf %91, %97 : vector<4x32xf32>
    %c0_110 = arith.constant 0 : index
    %c0_111 = arith.constant 0 : index
    %99 = vector.load %arg3[%c0_110, %c0_111] : memref<1x32xf32, #tpu.memory_space<vmem>>, vector<1x32xf32>
    %100 = vector.broadcast %99 : vector<1x32xf32> to vector<4x32xf32>
    %101 = arith.addf %98, %100 : vector<4x32xf32>
    %cst_112 = arith.constant 0.000000e+00 : f32
    %102 = vector.broadcast %cst_112 : f32 to vector<4x32xf32>
    %103 = arith.maximumf %101, %102 : vector<4x32xf32>
    %c0_113 = arith.constant 0 : index
    %c3_114 = arith.constant 3 : index
    %c1_115 = arith.constant 1 : index
    %c0_116 = arith.constant 0 : index
    %104 = vector.load %arg14[%c0_113, %c3_114, %c1_115, %c0_116] : memref<2x5x5x32xf32, #tpu.memory_space<vmem>>, vector<1x1x4x32xf32>
    %105 = vector.shape_cast %104 : vector<1x1x4x32xf32> to vector<4x32xf32>
    %106 = vector.shape_cast %103 : vector<4x32xf32> to vector<1x1x4x32xf32>
    tpu.vector_store %arg14[%c0_113, %c3_114, %c1_115, %c0_116], %106 {strides = array<i32>} : memref<2x5x5x32xf32, #tpu.memory_space<vmem>>, vector<1x1x4x32xf32>,
    %c0_117 = arith.constant 0 : index
    %c3_118 = arith.constant 3 : index
    %c0_119 = arith.constant 0 : index
    %c0_120 = arith.constant 0 : index
    %107 = vector.load %arg0[%c0_117, %c3_118, %c0_119, %c0_120] : memref<2x5x5x64xf32, #tpu.memory_space<vmem>>, vector<1x1x4x64xf32>
    %108 = vector.shape_cast %107 : vector<1x1x4x64xf32> to vector<4x64xf32>
    %109 = arith.truncf %108 : vector<4x64xf32> to vector<4x64xbf16>
    %c0_121 = arith.constant 0 : index
    %c0_122 = arith.constant 0 : index
    %c0_123 = arith.constant 0 : index
    %110 = vector.load %arg2[%c0_121, %c0_122, %c0_123] : memref<4x64x32xbf16, #tpu.memory_space<vmem>>, vector<1x64x32xbf16>
    %111 = vector.shape_cast %110 : vector<1x64x32xbf16> to vector<64x32xbf16>
    %cst_124 = arith.constant dense<0.000000e+00> : vector<4x32xf32>
    %112 = tpu.matmul %109, %111, %cst_124 {dimension_numbers = #tpu.dot_dimension_numbers<[1], [0], [0], [1], [0, 0, 1, 1], [], []>} : vector<4x64xbf16>, vector<64x32xbf16>, vector<4x32xf32> -> vector<4x32xf32>
    %c0_125 = arith.constant 0 : index
    %c3_126 = arith.constant 3 : index
    %c1_127 = arith.constant 1 : index
    %c0_128 = arith.constant 0 : index
    %113 = vector.load %arg0[%c0_125, %c3_126, %c1_127, %c0_128] : memref<2x5x5x64xf32, #tpu.memory_space<vmem>>, vector<1x1x4x64xf32>
    %114 = vector.shape_cast %113 : vector<1x1x4x64xf32> to vector<4x64xf32>
    %115 = arith.truncf %114 : vector<4x64xf32> to vector<4x64xbf16>
    %c1_129 = arith.constant 1 : index
    %c0_130 = arith.constant 0 : index
    %c0_131 = arith.constant 0 : index
    %116 = vector.load %arg2[%c1_129, %c0_130, %c0_131] : memref<4x64x32xbf16, #tpu.memory_space<vmem>>, vector<1x64x32xbf16>
    %117 = vector.shape_cast %116 : vector<1x64x32xbf16> to vector<64x32xbf16>
    %cst_132 = arith.constant dense<0.000000e+00> : vector<4x32xf32>
    %118 = tpu.matmul %115, %117, %cst_132 {dimension_numbers = #tpu.dot_dimension_numbers<[1], [0], [0], [1], [0, 0, 1, 1], [], []>} : vector<4x64xbf16>, vector<64x32xbf16>, vector<4x32xf32> -> vector<4x32xf32>
    %119 = arith.addf %112, %118 : vector<4x32xf32>
    %c0_133 = arith.constant 0 : index
    %c4 = arith.constant 4 : index
    %c0_134 = arith.constant 0 : index
    %c0_135 = arith.constant 0 : index
    %120 = vector.load %arg0[%c0_133, %c4, %c0_134, %c0_135] : memref<2x5x5x64xf32, #tpu.memory_space<vmem>>, vector<1x1x4x64xf32>
    %121 = vector.shape_cast %120 : vector<1x1x4x64xf32> to vector<4x64xf32>
    %122 = arith.truncf %121 : vector<4x64xf32> to vector<4x64xbf16>
    %c2_136 = arith.constant 2 : index
    %c0_137 = arith.constant 0 : index
    %c0_138 = arith.constant 0 : index
    %123 = vector.load %arg2[%c2_136, %c0_137, %c0_138] : memref<4x64x32xbf16, #tpu.memory_space<vmem>>, vector<1x64x32xbf16>
    %124 = vector.shape_cast %123 : vector<1x64x32xbf16> to vector<64x32xbf16>
    %cst_139 = arith.constant dense<0.000000e+00> : vector<4x32xf32>
    %125 = tpu.matmul %122, %124, %cst_139 {dimension_numbers = #tpu.dot_dimension_numbers<[1], [0], [0], [1], [0, 0, 1, 1], [], []>} : vector<4x64xbf16>, vector<64x32xbf16>, vector<4x32xf32> -> vector<4x32xf32>
    %126 = arith.addf %119, %125 : vector<4x32xf32>
    %c0_140 = arith.constant 0 : index
    %c4_141 = arith.constant 4 : index
    %c1_142 = arith.constant 1 : index
    %c0_143 = arith.constant 0 : index
    %127 = vector.load %arg0[%c0_140, %c4_141, %c1_142, %c0_143] : memref<2x5x5x64xf32, #tpu.memory_space<vmem>>, vector<1x1x4x64xf32>
    %128 = vector.shape_cast %127 : vector<1x1x4x64xf32> to vector<4x64xf32>
    %129 = arith.truncf %128 : vector<4x64xf32> to vector<4x64xbf16>
    %c3_144 = arith.constant 3 : index
    %c0_145 = arith.constant 0 : index
    %c0_146 = arith.constant 0 : index
    %130 = vector.load %arg2[%c3_144, %c0_145, %c0_146] : memref<4x64x32xbf16, #tpu.memory_space<vmem>>, vector<1x64x32xbf16>
    %131 = vector.shape_cast %130 : vector<1x64x32xbf16> to vector<64x32xbf16>
    %cst_147 = arith.constant dense<0.000000e+00> : vector<4x32xf32>
    %132 = tpu.matmul %129, %131, %cst_147 {dimension_numbers = #tpu.dot_dimension_numbers<[1], [0], [0], [1], [0, 0, 1, 1], [], []>} : vector<4x64xbf16>, vector<64x32xbf16>, vector<4x32xf32> -> vector<4x32xf32>
    %133 = arith.addf %126, %132 : vector<4x32xf32>
    %c0_148 = arith.constant 0 : index
    %c0_149 = arith.constant 0 : index
    %134 = vector.load %arg3[%c0_148, %c0_149] : memref<1x32xf32, #tpu.memory_space<vmem>>, vector<1x32xf32>
    %135 = vector.broadcast %134 : vector<1x32xf32> to vector<4x32xf32>
    %136 = arith.addf %133, %135 : vector<4x32xf32>
    %cst_150 = arith.constant 0.000000e+00 : f32
    %137 = vector.broadcast %cst_150 : f32 to vector<4x32xf32>
    %138 = arith.maximumf %136, %137 : vector<4x32xf32>
    %c0_151 = arith.constant 0 : index
    %c4_152 = arith.constant 4 : index
    %c1_153 = arith.constant 1 : index
    %c0_154 = arith.constant 0 : index
    %139 = vector.load %arg14[%c0_151, %c4_152, %c1_153, %c0_154] : memref<2x5x5x32xf32, #tpu.memory_space<vmem>>, vector<1x1x4x32xf32>
    %140 = vector.shape_cast %139 : vector<1x1x4x32xf32> to vector<4x32xf32>
    %141 = vector.shape_cast %138 : vector<4x32xf32> to vector<1x1x4x32xf32>
    tpu.vector_store %arg14[%c0_151, %c4_152, %c1_153, %c0_154], %141 {strides = array<i32>} : memref<2x5x5x32xf32, #tpu.memory_space<vmem>>, vector<1x1x4x32xf32>,
    %c1_155 = arith.constant 1 : index
    %c0_156 = arith.constant 0 : index
    %c0_157 = arith.constant 0 : index
    %c0_158 = arith.constant 0 : index
    %142 = vector.load %arg0[%c1_155, %c0_156, %c0_157, %c0_158] : memref<2x5x5x64xf32, #tpu.memory_space<vmem>>, vector<1x1x4x64xf32>
    %143 = vector.shape_cast %142 : vector<1x1x4x64xf32> to vector<4x64xf32>
    %144 = arith.truncf %143 : vector<4x64xf32> to vector<4x64xbf16>
    %c0_159 = arith.constant 0 : index
    %c0_160 = arith.constant 0 : index
    %c0_161 = arith.constant 0 : index
    %145 = vector.load %arg2[%c0_159, %c0_160, %c0_161] : memref<4x64x32xbf16, #tpu.memory_space<vmem>>, vector<1x64x32xbf16>
    %146 = vector.shape_cast %145 : vector<1x64x32xbf16> to vector<64x32xbf16>
    %cst_162 = arith.constant dense<0.000000e+00> : vector<4x32xf32>
    %147 = tpu.matmul %144, %146, %cst_162 {dimension_numbers = #tpu.dot_dimension_numbers<[1], [0], [0], [1], [0, 0, 1, 1], [], []>} : vector<4x64xbf16>, vector<64x32xbf16>, vector<4x32xf32> -> vector<4x32xf32>
    %c1_163 = arith.constant 1 : index
    %c0_164 = arith.constant 0 : index
    %c1_165 = arith.constant 1 : index
    %c0_166 = arith.constant 0 : index
    %148 = vector.load %arg0[%c1_163, %c0_164, %c1_165, %c0_166] : memref<2x5x5x64xf32, #tpu.memory_space<vmem>>, vector<1x1x4x64xf32>
    %149 = vector.shape_cast %148 : vector<1x1x4x64xf32> to vector<4x64xf32>
    %150 = arith.truncf %149 : vector<4x64xf32> to vector<4x64xbf16>
    %c1_167 = arith.constant 1 : index
    %c0_168 = arith.constant 0 : index
    %c0_169 = arith.constant 0 : index
    %151 = vector.load %arg2[%c1_167, %c0_168, %c0_169] : memref<4x64x32xbf16, #tpu.memory_space<vmem>>, vector<1x64x32xbf16>
    %152 = vector.shape_cast %151 : vector<1x64x32xbf16> to vector<64x32xbf16>
    %cst_170 = arith.constant dense<0.000000e+00> : vector<4x32xf32>
    %153 = tpu.matmul %150, %152, %cst_170 {dimension_numbers = #tpu.dot_dimension_numbers<[1], [0], [0], [1], [0, 0, 1, 1], [], []>} : vector<4x64xbf16>, vector<64x32xbf16>, vector<4x32xf32> -> vector<4x32xf32>
    %154 = arith.addf %147, %153 : vector<4x32xf32>
    %c1_171 = arith.constant 1 : index
    %c1_172 = arith.constant 1 : index
    %c0_173 = arith.constant 0 : index
    %c0_174 = arith.constant 0 : index
    %155 = vector.load %arg0[%c1_171, %c1_172, %c0_173, %c0_174] : memref<2x5x5x64xf32, #tpu.memory_space<vmem>>, vector<1x1x4x64xf32>
    %156 = vector.shape_cast %155 : vector<1x1x4x64xf32> to vector<4x64xf32>
    %157 = arith.truncf %156 : vector<4x64xf32> to vector<4x64xbf16>
    %c2_175 = arith.constant 2 : index
    %c0_176 = arith.constant 0 : index
    %c0_177 = arith.constant 0 : index
    %158 = vector.load %arg2[%c2_175, %c0_176, %c0_177] : memref<4x64x32xbf16, #tpu.memory_space<vmem>>, vector<1x64x32xbf16>
    %159 = vector.shape_cast %158 : vector<1x64x32xbf16> to vector<64x32xbf16>
    %cst_178 = arith.constant dense<0.000000e+00> : vector<4x32xf32>
    %160 = tpu.matmul %157, %159, %cst_178 {dimension_numbers = #tpu.dot_dimension_numbers<[1], [0], [0], [1], [0, 0, 1, 1], [], []>} : vector<4x64xbf16>, vector<64x32xbf16>, vector<4x32xf32> -> vector<4x32xf32>
    %161 = arith.addf %154, %160 : vector<4x32xf32>
    %c1_179 = arith.constant 1 : index
    %c1_180 = arith.constant 1 : index
    %c1_181 = arith.constant 1 : index
    %c0_182 = arith.constant 0 : index
    %162 = vector.load %arg0[%c1_179, %c1_180, %c1_181, %c0_182] : memref<2x5x5x64xf32, #tpu.memory_space<vmem>>, vector<1x1x4x64xf32>
    %163 = vector.shape_cast %162 : vector<1x1x4x64xf32> to vector<4x64xf32>
    %164 = arith.truncf %163 : vector<4x64xf32> to vector<4x64xbf16>
    %c3_183 = arith.constant 3 : index
    %c0_184 = arith.constant 0 : index
    %c0_185 = arith.constant 0 : index
    %165 = vector.load %arg2[%c3_183, %c0_184, %c0_185] : memref<4x64x32xbf16, #tpu.memory_space<vmem>>, vector<1x64x32xbf16>
    %166 = vector.shape_cast %165 : vector<1x64x32xbf16> to vector<64x32xbf16>
    %cst_186 = arith.constant dense<0.000000e+00> : vector<4x32xf32>
    %167 = tpu.matmul %164, %166, %cst_186 {dimension_numbers = #tpu.dot_dimension_numbers<[1], [0], [0], [1], [0, 0, 1, 1], [], []>} : vector<4x64xbf16>, vector<64x32xbf16>, vector<4x32xf32> -> vector<4x32xf32>
    %168 = arith.addf %161, %167 : vector<4x32xf32>
    %c0_187 = arith.constant 0 : index
    %c0_188 = arith.constant 0 : index
    %169 = vector.load %arg3[%c0_187, %c0_188] : memref<1x32xf32, #tpu.memory_space<vmem>>, vector<1x32xf32>
    %170 = vector.broadcast %169 : vector<1x32xf32> to vector<4x32xf32>
    %171 = arith.addf %168, %170 : vector<4x32xf32>
    %cst_189 = arith.constant 0.000000e+00 : f32
    %172 = vector.broadcast %cst_189 : f32 to vector<4x32xf32>
    %173 = arith.maximumf %171, %172 : vector<4x32xf32>
    %c1_190 = arith.constant 1 : index
    %c1_191 = arith.constant 1 : index
    %c1_192 = arith.constant 1 : index
    %c0_193 = arith.constant 0 : index
    %174 = vector.load %arg14[%c1_190, %c1_191, %c1_192, %c0_193] : memref<2x5x5x32xf32, #tpu.memory_space<vmem>>, vector<1x1x4x32xf32>
    %175 = vector.shape_cast %174 : vector<1x1x4x32xf32> to vector<4x32xf32>
    %176 = vector.shape_cast %173 : vector<4x32xf32> to vector<1x1x4x32xf32>
    tpu.vector_store %arg14[%c1_190, %c1_191, %c1_192, %c0_193], %176 {strides = array<i32>} : memref<2x5x5x32xf32, #tpu.memory_space<vmem>>, vector<1x1x4x32xf32>,
    %c1_194 = arith.constant 1 : index
    %c1_195 = arith.constant 1 : index
    %c0_196 = arith.constant 0 : index
    %c0_197 = arith.constant 0 : index
    %177 = vector.load %arg0[%c1_194, %c1_195, %c0_196, %c0_197] : memref<2x5x5x64xf32, #tpu.memory_space<vmem>>, vector<1x1x4x64xf32>
    %178 = vector.shape_cast %177 : vector<1x1x4x64xf32> to vector<4x64xf32>
    %179 = arith.truncf %178 : vector<4x64xf32> to vector<4x64xbf16>
    %c0_198 = arith.constant 0 : index
    %c0_199 = arith.constant 0 : index
    %c0_200 = arith.constant 0 : index
    %180 = vector.load %arg2[%c0_198, %c0_199, %c0_200] : memref<4x64x32xbf16, #tpu.memory_space<vmem>>, vector<1x64x32xbf16>
    %181 = vector.shape_cast %180 : vector<1x64x32xbf16> to vector<64x32xbf16>
    %cst_201 = arith.constant dense<0.000000e+00> : vector<4x32xf32>
    %182 = tpu.matmul %179, %181, %cst_201 {dimension_numbers = #tpu.dot_dimension_numbers<[1], [0], [0], [1], [0, 0, 1, 1], [], []>} : vector<4x64xbf16>, vector<64x32xbf16>, vector<4x32xf32> -> vector<4x32xf32>
    %c1_202 = arith.constant 1 : index
    %c1_203 = arith.constant 1 : index
    %c1_204 = arith.constant 1 : index
    %c0_205 = arith.constant 0 : index
    %183 = vector.load %arg0[%c1_202, %c1_203, %c1_204, %c0_205] : memref<2x5x5x64xf32, #tpu.memory_space<vmem>>, vector<1x1x4x64xf32>
    %184 = vector.shape_cast %183 : vector<1x1x4x64xf32> to vector<4x64xf32>
    %185 = arith.truncf %184 : vector<4x64xf32> to vector<4x64xbf16>
    %c1_206 = arith.constant 1 : index
    %c0_207 = arith.constant 0 : index
    %c0_208 = arith.constant 0 : index
    %186 = vector.load %arg2[%c1_206, %c0_207, %c0_208] : memref<4x64x32xbf16, #tpu.memory_space<vmem>>, vector<1x64x32xbf16>
    %187 = vector.shape_cast %186 : vector<1x64x32xbf16> to vector<64x32xbf16>
    %cst_209 = arith.constant dense<0.000000e+00> : vector<4x32xf32>
    %188 = tpu.matmul %185, %187, %cst_209 {dimension_numbers = #tpu.dot_dimension_numbers<[1], [0], [0], [1], [0, 0, 1, 1], [], []>} : vector<4x64xbf16>, vector<64x32xbf16>, vector<4x32xf32> -> vector<4x32xf32>
    %189 = arith.addf %182, %188 : vector<4x32xf32>
    %c1_210 = arith.constant 1 : index
    %c2_211 = arith.constant 2 : index
    %c0_212 = arith.constant 0 : index
    %c0_213 = arith.constant 0 : index
    %190 = vector.load %arg0[%c1_210, %c2_211, %c0_212, %c0_213] : memref<2x5x5x64xf32, #tpu.memory_space<vmem>>, vector<1x1x4x64xf32>
    %191 = vector.shape_cast %190 : vector<1x1x4x64xf32> to vector<4x64xf32>
    %192 = arith.truncf %191 : vector<4x64xf32> to vector<4x64xbf16>
    %c2_214 = arith.constant 2 : index
    %c0_215 = arith.constant 0 : index
    %c0_216 = arith.constant 0 : index
    %193 = vector.load %arg2[%c2_214, %c0_215, %c0_216] : memref<4x64x32xbf16, #tpu.memory_space<vmem>>, vector<1x64x32xbf16>
    %194 = vector.shape_cast %193 : vector<1x64x32xbf16> to vector<64x32xbf16>
    %cst_217 = arith.constant dense<0.000000e+00> : vector<4x32xf32>
    %195 = tpu.matmul %192, %194, %cst_217 {dimension_numbers = #tpu.dot_dimension_numbers<[1], [0], [0], [1], [0, 0, 1, 1], [], []>} : vector<4x64xbf16>, vector<64x32xbf16>, vector<4x32xf32> -> vector<4x32xf32>
    %196 = arith.addf %189, %195 : vector<4x32xf32>
    %c1_218 = arith.constant 1 : index
    %c2_219 = arith.constant 2 : index
    %c1_220 = arith.constant 1 : index
    %c0_221 = arith.constant 0 : index
    %197 = vector.load %arg0[%c1_218, %c2_219, %c1_220, %c0_221] : memref<2x5x5x64xf32, #tpu.memory_space<vmem>>, vector<1x1x4x64xf32>
    %198 = vector.shape_cast %197 : vector<1x1x4x64xf32> to vector<4x64xf32>
    %199 = arith.truncf %198 : vector<4x64xf32> to vector<4x64xbf16>
    %c3_222 = arith.constant 3 : index
    %c0_223 = arith.constant 0 : index
    %c0_224 = arith.constant 0 : index
    %200 = vector.load %arg2[%c3_222, %c0_223, %c0_224] : memref<4x64x32xbf16, #tpu.memory_space<vmem>>, vector<1x64x32xbf16>
    %201 = vector.shape_cast %200 : vector<1x64x32xbf16> to vector<64x32xbf16>
    %cst_225 = arith.constant dense<0.000000e+00> : vector<4x32xf32>
    %202 = tpu.matmul %199, %201, %cst_225 {dimension_numbers = #tpu.dot_dimension_numbers<[1], [0], [0], [1], [0, 0, 1, 1], [], []>} : vector<4x64xbf16>, vector<64x32xbf16>, vector<4x32xf32> -> vector<4x32xf32>
    %203 = arith.addf %196, %202 : vector<4x32xf32>
    %c0_226 = arith.constant 0 : index
    %c0_227 = arith.constant 0 : index
    %204 = vector.load %arg3[%c0_226, %c0_227] : memref<1x32xf32, #tpu.memory_space<vmem>>, vector<1x32xf32>
    %205 = vector.broadcast %204 : vector<1x32xf32> to vector<4x32xf32>
    %206 = arith.addf %203, %205 : vector<4x32xf32>
    %cst_228 = arith.constant 0.000000e+00 : f32
    %207 = vector.broadcast %cst_228 : f32 to vector<4x32xf32>
    %208 = arith.maximumf %206, %207 : vector<4x32xf32>
    %c1_229 = arith.constant 1 : index
    %c2_230 = arith.constant 2 : index
    %c1_231 = arith.constant 1 : index
    %c0_232 = arith.constant 0 : index
    %209 = vector.load %arg14[%c1_229, %c2_230, %c1_231, %c0_232] : memref<2x5x5x32xf32, #tpu.memory_space<vmem>>, vector<1x1x4x32xf32>
    %210 = vector.shape_cast %209 : vector<1x1x4x32xf32> to vector<4x32xf32>
    %211 = vector.shape_cast %208 : vector<4x32xf32> to vector<1x1x4x32xf32>
    tpu.vector_store %arg14[%c1_229, %c2_230, %c1_231, %c0_232], %211 {strides = array<i32>} : memref<2x5x5x32xf32, #tpu.memory_space<vmem>>, vector<1x1x4x32xf32>,
    %c1_233 = arith.constant 1 : index
    %c2_234 = arith.constant 2 : index
    %c0_235 = arith.constant 0 : index
    %c0_236 = arith.constant 0 : index
    %212 = vector.load %arg0[%c1_233, %c2_234, %c0_235, %c0_236] : memref<2x5x5x64xf32, #tpu.memory_space<vmem>>, vector<1x1x4x64xf32>
    %213 = vector.shape_cast %212 : vector<1x1x4x64xf32> to vector<4x64xf32>
    %214 = arith.truncf %213 : vector<4x64xf32> to vector<4x64xbf16>
    %c0_237 = arith.constant 0 : index
    %c0_238 = arith.constant 0 : index
    %c0_239 = arith.constant 0 : index
    %215 = vector.load %arg2[%c0_237, %c0_238, %c0_239] : memref<4x64x32xbf16, #tpu.memory_space<vmem>>, vector<1x64x32xbf16>
    %216 = vector.shape_cast %215 : vector<1x64x32xbf16> to vector<64x32xbf16>
    %cst_240 = arith.constant dense<0.000000e+00> : vector<4x32xf32>
    %217 = tpu.matmul %214, %216, %cst_240 {dimension_numbers = #tpu.dot_dimension_numbers<[1], [0], [0], [1], [0, 0, 1, 1], [], []>} : vector<4x64xbf16>, vector<64x32xbf16>, vector<4x32xf32> -> vector<4x32xf32>
    %c1_241 = arith.constant 1 : index
    %c2_242 = arith.constant 2 : index
    %c1_243 = arith.constant 1 : index
    %c0_244 = arith.constant 0 : index
    %218 = vector.load %arg0[%c1_241, %c2_242, %c1_243, %c0_244] : memref<2x5x5x64xf32, #tpu.memory_space<vmem>>, vector<1x1x4x64xf32>
    %219 = vector.shape_cast %218 : vector<1x1x4x64xf32> to vector<4x64xf32>
    %220 = arith.truncf %219 : vector<4x64xf32> to vector<4x64xbf16>
    %c1_245 = arith.constant 1 : index
    %c0_246 = arith.constant 0 : index
    %c0_247 = arith.constant 0 : index
    %221 = vector.load %arg2[%c1_245, %c0_246, %c0_247] : memref<4x64x32xbf16, #tpu.memory_space<vmem>>, vector<1x64x32xbf16>
    %222 = vector.shape_cast %221 : vector<1x64x32xbf16> to vector<64x32xbf16>
    %cst_248 = arith.constant dense<0.000000e+00> : vector<4x32xf32>
    %223 = tpu.matmul %220, %222, %cst_248 {dimension_numbers = #tpu.dot_dimension_numbers<[1], [0], [0], [1], [0, 0, 1, 1], [], []>} : vector<4x64xbf16>, vector<64x32xbf16>, vector<4x32xf32> -> vector<4x32xf32>
    %224 = arith.addf %217, %223 : vector<4x32xf32>
    %c1_249 = arith.constant 1 : index
    %c3_250 = arith.constant 3 : index
    %c0_251 = arith.constant 0 : index
    %c0_252 = arith.constant 0 : index
    %225 = vector.load %arg0[%c1_249, %c3_250, %c0_251, %c0_252] : memref<2x5x5x64xf32, #tpu.memory_space<vmem>>, vector<1x1x4x64xf32>
    %226 = vector.shape_cast %225 : vector<1x1x4x64xf32> to vector<4x64xf32>
    %227 = arith.truncf %226 : vector<4x64xf32> to vector<4x64xbf16>
    %c2_253 = arith.constant 2 : index
    %c0_254 = arith.constant 0 : index
    %c0_255 = arith.constant 0 : index
    %228 = vector.load %arg2[%c2_253, %c0_254, %c0_255] : memref<4x64x32xbf16, #tpu.memory_space<vmem>>, vector<1x64x32xbf16>
    %229 = vector.shape_cast %228 : vector<1x64x32xbf16> to vector<64x32xbf16>
    %cst_256 = arith.constant dense<0.000000e+00> : vector<4x32xf32>
    %230 = tpu.matmul %227, %229, %cst_256 {dimension_numbers = #tpu.dot_dimension_numbers<[1], [0], [0], [1], [0, 0, 1, 1], [], []>} : vector<4x64xbf16>, vector<64x32xbf16>, vector<4x32xf32> -> vector<4x32xf32>
    %231 = arith.addf %224, %230 : vector<4x32xf32>
    %c1_257 = arith.constant 1 : index
    %c3_258 = arith.constant 3 : index
    %c1_259 = arith.constant 1 : index
    %c0_260 = arith.constant 0 : index
    %232 = vector.load %arg0[%c1_257, %c3_258, %c1_259, %c0_260] : memref<2x5x5x64xf32, #tpu.memory_space<vmem>>, vector<1x1x4x64xf32>
    %233 = vector.shape_cast %232 : vector<1x1x4x64xf32> to vector<4x64xf32>
    %234 = arith.truncf %233 : vector<4x64xf32> to vector<4x64xbf16>
    %c3_261 = arith.constant 3 : index
    %c0_262 = arith.constant 0 : index
    %c0_263 = arith.constant 0 : index
    %235 = vector.load %arg2[%c3_261, %c0_262, %c0_263] : memref<4x64x32xbf16, #tpu.memory_space<vmem>>, vector<1x64x32xbf16>
    %236 = vector.shape_cast %235 : vector<1x64x32xbf16> to vector<64x32xbf16>
    %cst_264 = arith.constant dense<0.000000e+00> : vector<4x32xf32>
    %237 = tpu.matmul %234, %236, %cst_264 {dimension_numbers = #tpu.dot_dimension_numbers<[1], [0], [0], [1], [0, 0, 1, 1], [], []>} : vector<4x64xbf16>, vector<64x32xbf16>, vector<4x32xf32> -> vector<4x32xf32>
    %238 = arith.addf %231, %237 : vector<4x32xf32>
    %c0_265 = arith.constant 0 : index
    %c0_266 = arith.constant 0 : index
    %239 = vector.load %arg3[%c0_265, %c0_266] : memref<1x32xf32, #tpu.memory_space<vmem>>, vector<1x32xf32>
    %240 = vector.broadcast %239 : vector<1x32xf32> to vector<4x32xf32>
    %241 = arith.addf %238, %240 : vector<4x32xf32>
    %cst_267 = arith.constant 0.000000e+00 : f32
    %242 = vector.broadcast %cst_267 : f32 to vector<4x32xf32>
    %243 = arith.maximumf %241, %242 : vector<4x32xf32>
    %c1_268 = arith.constant 1 : index
    %c3_269 = arith.constant 3 : index
    %c1_270 = arith.constant 1 : index
    %c0_271 = arith.constant 0 : index
    %244 = vector.load %arg14[%c1_268, %c3_269, %c1_270, %c0_271] : memref<2x5x5x32xf32, #tpu.memory_space<vmem>>, vector<1x1x4x32xf32>
    %245 = vector.shape_cast %244 : vector<1x1x4x32xf32> to vector<4x32xf32>
    %246 = vector.shape_cast %243 : vector<4x32xf32> to vector<1x1x4x32xf32>
    tpu.vector_store %arg14[%c1_268, %c3_269, %c1_270, %c0_271], %246 {strides = array<i32>} : memref<2x5x5x32xf32, #tpu.memory_space<vmem>>, vector<1x1x4x32xf32>,
    %c1_272 = arith.constant 1 : index
    %c3_273 = arith.constant 3 : index
    %c0_274 = arith.constant 0 : index
    %c0_275 = arith.constant 0 : index
    %247 = vector.load %arg0[%c1_272, %c3_273, %c0_274, %c0_275] : memref<2x5x5x64xf32, #tpu.memory_space<vmem>>, vector<1x1x4x64xf32>
    %248 = vector.shape_cast %247 : vector<1x1x4x64xf32> to vector<4x64xf32>
    %249 = arith.truncf %248 : vector<4x64xf32> to vector<4x64xbf16>
    %c0_276 = arith.constant 0 : index
    %c0_277 = arith.constant 0 : index
    %c0_278 = arith.constant 0 : index
    %250 = vector.load %arg2[%c0_276, %c0_277, %c0_278] : memref<4x64x32xbf16, #tpu.memory_space<vmem>>, vector<1x64x32xbf16>
    %251 = vector.shape_cast %250 : vector<1x64x32xbf16> to vector<64x32xbf16>
    %cst_279 = arith.constant dense<0.000000e+00> : vector<4x32xf32>
    %252 = tpu.matmul %249, %251, %cst_279 {dimension_numbers = #tpu.dot_dimension_numbers<[1], [0], [0], [1], [0, 0, 1, 1], [], []>} : vector<4x64xbf16>, vector<64x32xbf16>, vector<4x32xf32> -> vector<4x32xf32>
    %c1_280 = arith.constant 1 : index
    %c3_281 = arith.constant 3 : index
    %c1_282 = arith.constant 1 : index
    %c0_283 = arith.constant 0 : index
    %253 = vector.load %arg0[%c1_280, %c3_281, %c1_282, %c0_283] : memref<2x5x5x64xf32, #tpu.memory_space<vmem>>, vector<1x1x4x64xf32>
    %254 = vector.shape_cast %253 : vector<1x1x4x64xf32> to vector<4x64xf32>
    %255 = arith.truncf %254 : vector<4x64xf32> to vector<4x64xbf16>
    %c1_284 = arith.constant 1 : index
    %c0_285 = arith.constant 0 : index
    %c0_286 = arith.constant 0 : index
    %256 = vector.load %arg2[%c1_284, %c0_285, %c0_286] : memref<4x64x32xbf16, #tpu.memory_space<vmem>>, vector<1x64x32xbf16>
    %257 = vector.shape_cast %256 : vector<1x64x32xbf16> to vector<64x32xbf16>
    %cst_287 = arith.constant dense<0.000000e+00> : vector<4x32xf32>
    %258 = tpu.matmul %255, %257, %cst_287 {dimension_numbers = #tpu.dot_dimension_numbers<[1], [0], [0], [1], [0, 0, 1, 1], [], []>} : vector<4x64xbf16>, vector<64x32xbf16>, vector<4x32xf32> -> vector<4x32xf32>
    %259 = arith.addf %252, %258 : vector<4x32xf32>
    %c1_288 = arith.constant 1 : index
    %c4_289 = arith.constant 4 : index
    %c0_290 = arith.constant 0 : index
    %c0_291 = arith.constant 0 : index
    %260 = vector.load %arg0[%c1_288, %c4_289, %c0_290, %c0_291] : memref<2x5x5x64xf32, #tpu.memory_space<vmem>>, vector<1x1x4x64xf32>
    %261 = vector.shape_cast %260 : vector<1x1x4x64xf32> to vector<4x64xf32>
    %262 = arith.truncf %261 : vector<4x64xf32> to vector<4x64xbf16>
    %c2_292 = arith.constant 2 : index
    %c0_293 = arith.constant 0 : index
    %c0_294 = arith.constant 0 : index
    %263 = vector.load %arg2[%c2_292, %c0_293, %c0_294] : memref<4x64x32xbf16, #tpu.memory_space<vmem>>, vector<1x64x32xbf16>
    %264 = vector.shape_cast %263 : vector<1x64x32xbf16> to vector<64x32xbf16>
    %cst_295 = arith.constant dense<0.000000e+00> : vector<4x32xf32>
    %265 = tpu.matmul %262, %264, %cst_295 {dimension_numbers = #tpu.dot_dimension_numbers<[1], [0], [0], [1], [0, 0, 1, 1], [], []>} : vector<4x64xbf16>, vector<64x32xbf16>, vector<4x32xf32> -> vector<4x32xf32>
    %266 = arith.addf %259, %265 : vector<4x32xf32>
    %c1_296 = arith.constant 1 : index
    %c4_297 = arith.constant 4 : index
    %c1_298 = arith.constant 1 : index
    %c0_299 = arith.constant 0 : index
    %267 = vector.load %arg0[%c1_296, %c4_297, %c1_298, %c0_299] : memref<2x5x5x64xf32, #tpu.memory_space<vmem>>, vector<1x1x4x64xf32>
    %268 = vector.shape_cast %267 : vector<1x1x4x64xf32> to vector<4x64xf32>
    %269 = arith.truncf %268 : vector<4x64xf32> to vector<4x64xbf16>
    %c3_300 = arith.constant 3 : index
    %c0_301 = arith.constant 0 : index
    %c0_302 = arith.constant 0 : index
    %270 = vector.load %arg2[%c3_300, %c0_301, %c0_302] : memref<4x64x32xbf16, #tpu.memory_space<vmem>>, vector<1x64x32xbf16>
    %271 = vector.shape_cast %270 : vector<1x64x32xbf16> to vector<64x32xbf16>
    %cst_303 = arith.constant dense<0.000000e+00> : vector<4x32xf32>
    %272 = tpu.matmul %269, %271, %cst_303 {dimension_numbers = #tpu.dot_dimension_numbers<[1], [0], [0], [1], [0, 0, 1, 1], [], []>} : vector<4x64xbf16>, vector<64x32xbf16>, vector<4x32xf32> -> vector<4x32xf32>
    %273 = arith.addf %266, %272 : vector<4x32xf32>
    %c0_304 = arith.constant 0 : index
    %c0_305 = arith.constant 0 : index
    %274 = vector.load %arg3[%c0_304, %c0_305] : memref<1x32xf32, #tpu.memory_space<vmem>>, vector<1x32xf32>
    %275 = vector.broadcast %274 : vector<1x32xf32> to vector<4x32xf32>
    %276 = arith.addf %273, %275 : vector<4x32xf32>
    %cst_306 = arith.constant 0.000000e+00 : f32
    %277 = vector.broadcast %cst_306 : f32 to vector<4x32xf32>
    %278 = arith.maximumf %276, %277 : vector<4x32xf32>
    %c1_307 = arith.constant 1 : index
    %c4_308 = arith.constant 4 : index
    %c1_309 = arith.constant 1 : index
    %c0_310 = arith.constant 0 : index
    %279 = vector.load %arg14[%c1_307, %c4_308, %c1_309, %c0_310] : memref<2x5x5x32xf32, #tpu.memory_space<vmem>>, vector<1x1x4x32xf32>
    %280 = vector.shape_cast %279 : vector<1x1x4x32xf32> to vector<4x32xf32>
    %281 = vector.shape_cast %278 : vector<4x32xf32> to vector<1x1x4x32xf32>
    tpu.vector_store %arg14[%c1_307, %c4_308, %c1_309, %c0_310], %281 {strides = array<i32>} : memref<2x5x5x32xf32, #tpu.memory_space<vmem>>, vector<1x1x4x32xf32>,
    %c0_311 = arith.constant 0 : index
    %c0_312 = arith.constant 0 : index
    %c0_313 = arith.constant 0 : index
    %c0_314 = arith.constant 0 : index
    %282 = vector.load %arg14[%c0_311, %c0_312, %c0_313, %c0_314] : memref<2x5x5x32xf32, #tpu.memory_space<vmem>>, vector<1x1x4x32xf32>
    %283 = vector.shape_cast %282 : vector<1x1x4x32xf32> to vector<4x32xf32>
    %284 = arith.truncf %283 : vector<4x32xf32> to vector<4x32xbf16>
    %c0_315 = arith.constant 0 : index
    %c0_316 = arith.constant 0 : index
    %c0_317 = arith.constant 0 : index
    %285 = vector.load %arg4[%c0_315, %c0_316, %c0_317] : memref<4x32x16xbf16, #tpu.memory_space<vmem>>, vector<1x32x16xbf16>
    %286 = vector.shape_cast %285 : vector<1x32x16xbf16> to vector<32x16xbf16>
    %cst_318 = arith.constant dense<0.000000e+00> : vector<4x16xf32>
    %287 = tpu.matmul %284, %286, %cst_318 {dimension_numbers = #tpu.dot_dimension_numbers<[1], [0], [0], [1], [0, 0, 1, 1], [], []>} : vector<4x32xbf16>, vector<32x16xbf16>, vector<4x16xf32> -> vector<4x16xf32>
    %c0_319 = arith.constant 0 : index
    %c0_320 = arith.constant 0 : index
    %c1_321 = arith.constant 1 : index
    %c0_322 = arith.constant 0 : index
    %288 = vector.load %arg14[%c0_319, %c0_320, %c1_321, %c0_322] : memref<2x5x5x32xf32, #tpu.memory_space<vmem>>, vector<1x1x4x32xf32>
    %289 = vector.shape_cast %288 : vector<1x1x4x32xf32> to vector<4x32xf32>
    %290 = arith.truncf %289 : vector<4x32xf32> to vector<4x32xbf16>
    %c1_323 = arith.constant 1 : index
    %c0_324 = arith.constant 0 : index
    %c0_325 = arith.constant 0 : index
    %291 = vector.load %arg4[%c1_323, %c0_324, %c0_325] : memref<4x32x16xbf16, #tpu.memory_space<vmem>>, vector<1x32x16xbf16>
    %292 = vector.shape_cast %291 : vector<1x32x16xbf16> to vector<32x16xbf16>
    %cst_326 = arith.constant dense<0.000000e+00> : vector<4x16xf32>
    %293 = tpu.matmul %290, %292, %cst_326 {dimension_numbers = #tpu.dot_dimension_numbers<[1], [0], [0], [1], [0, 0, 1, 1], [], []>} : vector<4x32xbf16>, vector<32x16xbf16>, vector<4x16xf32> -> vector<4x16xf32>
    %294 = arith.addf %287, %293 : vector<4x16xf32>
    %c0_327 = arith.constant 0 : index
    %c1_328 = arith.constant 1 : index
    %c0_329 = arith.constant 0 : index
    %c0_330 = arith.constant 0 : index
    %295 = vector.load %arg14[%c0_327, %c1_328, %c0_329, %c0_330] : memref<2x5x5x32xf32, #tpu.memory_space<vmem>>, vector<1x1x4x32xf32>
    %296 = vector.shape_cast %295 : vector<1x1x4x32xf32> to vector<4x32xf32>
    %297 = arith.truncf %296 : vector<4x32xf32> to vector<4x32xbf16>
    %c2_331 = arith.constant 2 : index
    %c0_332 = arith.constant 0 : index
    %c0_333 = arith.constant 0 : index
    %298 = vector.load %arg4[%c2_331, %c0_332, %c0_333] : memref<4x32x16xbf16, #tpu.memory_space<vmem>>, vector<1x32x16xbf16>
    %299 = vector.shape_cast %298 : vector<1x32x16xbf16> to vector<32x16xbf16>
    %cst_334 = arith.constant dense<0.000000e+00> : vector<4x16xf32>
    %300 = tpu.matmul %297, %299, %cst_334 {dimension_numbers = #tpu.dot_dimension_numbers<[1], [0], [0], [1], [0, 0, 1, 1], [], []>} : vector<4x32xbf16>, vector<32x16xbf16>, vector<4x16xf32> -> vector<4x16xf32>
    %301 = arith.addf %294, %300 : vector<4x16xf32>
    %c0_335 = arith.constant 0 : index
    %c1_336 = arith.constant 1 : index
    %c1_337 = arith.constant 1 : index
    %c0_338 = arith.constant 0 : index
    %302 = vector.load %arg14[%c0_335, %c1_336, %c1_337, %c0_338] : memref<2x5x5x32xf32, #tpu.memory_space<vmem>>, vector<1x1x4x32xf32>
    %303 = vector.shape_cast %302 : vector<1x1x4x32xf32> to vector<4x32xf32>
    %304 = arith.truncf %303 : vector<4x32xf32> to vector<4x32xbf16>
    %c3_339 = arith.constant 3 : index
    %c0_340 = arith.constant 0 : index
    %c0_341 = arith.constant 0 : index
    %305 = vector.load %arg4[%c3_339, %c0_340, %c0_341] : memref<4x32x16xbf16, #tpu.memory_space<vmem>>, vector<1x32x16xbf16>
    %306 = vector.shape_cast %305 : vector<1x32x16xbf16> to vector<32x16xbf16>
    %cst_342 = arith.constant dense<0.000000e+00> : vector<4x16xf32>
    %307 = tpu.matmul %304, %306, %cst_342 {dimension_numbers = #tpu.dot_dimension_numbers<[1], [0], [0], [1], [0, 0, 1, 1], [], []>} : vector<4x32xbf16>, vector<32x16xbf16>, vector<4x16xf32> -> vector<4x16xf32>
    %308 = arith.addf %301, %307 : vector<4x16xf32>
    %c0_343 = arith.constant 0 : index
    %c0_344 = arith.constant 0 : index
    %309 = vector.load %arg5[%c0_343, %c0_344] : memref<1x16xf32, #tpu.memory_space<vmem>>, vector<1x16xf32>
    %310 = vector.broadcast %309 : vector<1x16xf32> to vector<4x16xf32>
    %311 = arith.addf %308, %310 : vector<4x16xf32>
    %cst_345 = arith.constant 0.000000e+00 : f32
    %312 = vector.broadcast %cst_345 : f32 to vector<4x16xf32>
    %313 = arith.maximumf %311, %312 : vector<4x16xf32>
    %c0_346 = arith.constant 0 : index
    %c0_347 = arith.constant 0 : index
    %c0_348 = arith.constant 0 : index
    %314 = vector.load %arg15[%c0_346, %c0_347, %c0_348] : memref<2x16x16xf32, #tpu.memory_space<vmem>>, vector<1x4x16xf32>
    %315 = vector.shape_cast %314 : vector<1x4x16xf32> to vector<4x16xf32>
    %316 = vector.shape_cast %313 : vector<4x16xf32> to vector<1x4x16xf32>
    tpu.vector_store %arg15[%c0_346, %c0_347, %c0_348], %316 {strides = array<i32>} : memref<2x16x16xf32, #tpu.memory_space<vmem>>, vector<1x4x16xf32>,
    %c0_349 = arith.constant 0 : index
    %c1_350 = arith.constant 1 : index
    %c0_351 = arith.constant 0 : index
    %c0_352 = arith.constant 0 : index
    %317 = vector.load %arg14[%c0_349, %c1_350, %c0_351, %c0_352] : memref<2x5x5x32xf32, #tpu.memory_space<vmem>>, vector<1x1x4x32xf32>
    %318 = vector.shape_cast %317 : vector<1x1x4x32xf32> to vector<4x32xf32>
    %319 = arith.truncf %318 : vector<4x32xf32> to vector<4x32xbf16>
    %c0_353 = arith.constant 0 : index
    %c0_354 = arith.constant 0 : index
    %c0_355 = arith.constant 0 : index
    %320 = vector.load %arg4[%c0_353, %c0_354, %c0_355] : memref<4x32x16xbf16, #tpu.memory_space<vmem>>, vector<1x32x16xbf16>
    %321 = vector.shape_cast %320 : vector<1x32x16xbf16> to vector<32x16xbf16>
    %cst_356 = arith.constant dense<0.000000e+00> : vector<4x16xf32>
    %322 = tpu.matmul %319, %321, %cst_356 {dimension_numbers = #tpu.dot_dimension_numbers<[1], [0], [0], [1], [0, 0, 1, 1], [], []>} : vector<4x32xbf16>, vector<32x16xbf16>, vector<4x16xf32> -> vector<4x16xf32>
    %c0_357 = arith.constant 0 : index
    %c1_358 = arith.constant 1 : index
    %c1_359 = arith.constant 1 : index
    %c0_360 = arith.constant 0 : index
    %323 = vector.load %arg14[%c0_357, %c1_358, %c1_359, %c0_360] : memref<2x5x5x32xf32, #tpu.memory_space<vmem>>, vector<1x1x4x32xf32>
    %324 = vector.shape_cast %323 : vector<1x1x4x32xf32> to vector<4x32xf32>
    %325 = arith.truncf %324 : vector<4x32xf32> to vector<4x32xbf16>
    %c1_361 = arith.constant 1 : index
    %c0_362 = arith.constant 0 : index
    %c0_363 = arith.constant 0 : index
    %326 = vector.load %arg4[%c1_361, %c0_362, %c0_363] : memref<4x32x16xbf16, #tpu.memory_space<vmem>>, vector<1x32x16xbf16>
    %327 = vector.shape_cast %326 : vector<1x32x16xbf16> to vector<32x16xbf16>
    %cst_364 = arith.constant dense<0.000000e+00> : vector<4x16xf32>
    %328 = tpu.matmul %325, %327, %cst_364 {dimension_numbers = #tpu.dot_dimension_numbers<[1], [0], [0], [1], [0, 0, 1, 1], [], []>} : vector<4x32xbf16>, vector<32x16xbf16>, vector<4x16xf32> -> vector<4x16xf32>
    %329 = arith.addf %322, %328 : vector<4x16xf32>
    %c0_365 = arith.constant 0 : index
    %c2_366 = arith.constant 2 : index
    %c0_367 = arith.constant 0 : index
    %c0_368 = arith.constant 0 : index
    %330 = vector.load %arg14[%c0_365, %c2_366, %c0_367, %c0_368] : memref<2x5x5x32xf32, #tpu.memory_space<vmem>>, vector<1x1x4x32xf32>
    %331 = vector.shape_cast %330 : vector<1x1x4x32xf32> to vector<4x32xf32>
    %332 = arith.truncf %331 : vector<4x32xf32> to vector<4x32xbf16>
    %c2_369 = arith.constant 2 : index
    %c0_370 = arith.constant 0 : index
    %c0_371 = arith.constant 0 : index
    %333 = vector.load %arg4[%c2_369, %c0_370, %c0_371] : memref<4x32x16xbf16, #tpu.memory_space<vmem>>, vector<1x32x16xbf16>
    %334 = vector.shape_cast %333 : vector<1x32x16xbf16> to vector<32x16xbf16>
    %cst_372 = arith.constant dense<0.000000e+00> : vector<4x16xf32>
    %335 = tpu.matmul %332, %334, %cst_372 {dimension_numbers = #tpu.dot_dimension_numbers<[1], [0], [0], [1], [0, 0, 1, 1], [], []>} : vector<4x32xbf16>, vector<32x16xbf16>, vector<4x16xf32> -> vector<4x16xf32>
    %336 = arith.addf %329, %335 : vector<4x16xf32>
    %c0_373 = arith.constant 0 : index
    %c2_374 = arith.constant 2 : index
    %c1_375 = arith.constant 1 : index
    %c0_376 = arith.constant 0 : index
    %337 = vector.load %arg14[%c0_373, %c2_374, %c1_375, %c0_376] : memref<2x5x5x32xf32, #tpu.memory_space<vmem>>, vector<1x1x4x32xf32>
    %338 = vector.shape_cast %337 : vector<1x1x4x32xf32> to vector<4x32xf32>
    %339 = arith.truncf %338 : vector<4x32xf32> to vector<4x32xbf16>
    %c3_377 = arith.constant 3 : index
    %c0_378 = arith.constant 0 : index
    %c0_379 = arith.constant 0 : index
    %340 = vector.load %arg4[%c3_377, %c0_378, %c0_379] : memref<4x32x16xbf16, #tpu.memory_space<vmem>>, vector<1x32x16xbf16>
    %341 = vector.shape_cast %340 : vector<1x32x16xbf16> to vector<32x16xbf16>
    %cst_380 = arith.constant dense<0.000000e+00> : vector<4x16xf32>
    %342 = tpu.matmul %339, %341, %cst_380 {dimension_numbers = #tpu.dot_dimension_numbers<[1], [0], [0], [1], [0, 0, 1, 1], [], []>} : vector<4x32xbf16>, vector<32x16xbf16>, vector<4x16xf32> -> vector<4x16xf32>
    %343 = arith.addf %336, %342 : vector<4x16xf32>
    %c0_381 = arith.constant 0 : index
    %c0_382 = arith.constant 0 : index
    %344 = vector.load %arg5[%c0_381, %c0_382] : memref<1x16xf32, #tpu.memory_space<vmem>>, vector<1x16xf32>
    %345 = vector.broadcast %344 : vector<1x16xf32> to vector<4x16xf32>
    %346 = arith.addf %343, %345 : vector<4x16xf32>
    %cst_383 = arith.constant 0.000000e+00 : f32
    %347 = vector.broadcast %cst_383 : f32 to vector<4x16xf32>
    %348 = arith.maximumf %346, %347 : vector<4x16xf32>
    %c0_384 = arith.constant 0 : index
    %c4_385 = arith.constant 4 : index
    %c0_386 = arith.constant 0 : index
    %349 = vector.load %arg15[%c0_384, %c4_385, %c0_386] : memref<2x16x16xf32, #tpu.memory_space<vmem>>, vector<1x4x16xf32>
    %350 = vector.shape_cast %349 : vector<1x4x16xf32> to vector<4x16xf32>
    %351 = vector.shape_cast %348 : vector<4x16xf32> to vector<1x4x16xf32>
    tpu.vector_store %arg15[%c0_384, %c4_385, %c0_386], %351 {strides = array<i32>} : memref<2x16x16xf32, #tpu.memory_space<vmem>>, vector<1x4x16xf32>,
    %c0_387 = arith.constant 0 : index
    %c2_388 = arith.constant 2 : index
    %c0_389 = arith.constant 0 : index
    %c0_390 = arith.constant 0 : index
    %352 = vector.load %arg14[%c0_387, %c2_388, %c0_389, %c0_390] : memref<2x5x5x32xf32, #tpu.memory_space<vmem>>, vector<1x1x4x32xf32>
    %353 = vector.shape_cast %352 : vector<1x1x4x32xf32> to vector<4x32xf32>
    %354 = arith.truncf %353 : vector<4x32xf32> to vector<4x32xbf16>
    %c0_391 = arith.constant 0 : index
    %c0_392 = arith.constant 0 : index
    %c0_393 = arith.constant 0 : index
    %355 = vector.load %arg4[%c0_391, %c0_392, %c0_393] : memref<4x32x16xbf16, #tpu.memory_space<vmem>>, vector<1x32x16xbf16>
    %356 = vector.shape_cast %355 : vector<1x32x16xbf16> to vector<32x16xbf16>
    %cst_394 = arith.constant dense<0.000000e+00> : vector<4x16xf32>
    %357 = tpu.matmul %354, %356, %cst_394 {dimension_numbers = #tpu.dot_dimension_numbers<[1], [0], [0], [1], [0, 0, 1, 1], [], []>} : vector<4x32xbf16>, vector<32x16xbf16>, vector<4x16xf32> -> vector<4x16xf32>
    %c0_395 = arith.constant 0 : index
    %c2_396 = arith.constant 2 : index
    %c1_397 = arith.constant 1 : index
    %c0_398 = arith.constant 0 : index
    %358 = vector.load %arg14[%c0_395, %c2_396, %c1_397, %c0_398] : memref<2x5x5x32xf32, #tpu.memory_space<vmem>>, vector<1x1x4x32xf32>
    %359 = vector.shape_cast %358 : vector<1x1x4x32xf32> to vector<4x32xf32>
    %360 = arith.truncf %359 : vector<4x32xf32> to vector<4x32xbf16>
    %c1_399 = arith.constant 1 : index
    %c0_400 = arith.constant 0 : index
    %c0_401 = arith.constant 0 : index
    %361 = vector.load %arg4[%c1_399, %c0_400, %c0_401] : memref<4x32x16xbf16, #tpu.memory_space<vmem>>, vector<1x32x16xbf16>
    %362 = vector.shape_cast %361 : vector<1x32x16xbf16> to vector<32x16xbf16>
    %cst_402 = arith.constant dense<0.000000e+00> : vector<4x16xf32>
    %363 = tpu.matmul %360, %362, %cst_402 {dimension_numbers = #tpu.dot_dimension_numbers<[1], [0], [0], [1], [0, 0, 1, 1], [], []>} : vector<4x32xbf16>, vector<32x16xbf16>, vector<4x16xf32> -> vector<4x16xf32>
    %364 = arith.addf %357, %363 : vector<4x16xf32>
    %c0_403 = arith.constant 0 : index
    %c3_404 = arith.constant 3 : index
    %c0_405 = arith.constant 0 : index
    %c0_406 = arith.constant 0 : index
    %365 = vector.load %arg14[%c0_403, %c3_404, %c0_405, %c0_406] : memref<2x5x5x32xf32, #tpu.memory_space<vmem>>, vector<1x1x4x32xf32>
    %366 = vector.shape_cast %365 : vector<1x1x4x32xf32> to vector<4x32xf32>
    %367 = arith.truncf %366 : vector<4x32xf32> to vector<4x32xbf16>
    %c2_407 = arith.constant 2 : index
    %c0_408 = arith.constant 0 : index
    %c0_409 = arith.constant 0 : index
    %368 = vector.load %arg4[%c2_407, %c0_408, %c0_409] : memref<4x32x16xbf16, #tpu.memory_space<vmem>>, vector<1x32x16xbf16>
    %369 = vector.shape_cast %368 : vector<1x32x16xbf16> to vector<32x16xbf16>
    %cst_410 = arith.constant dense<0.000000e+00> : vector<4x16xf32>
    %370 = tpu.matmul %367, %369, %cst_410 {dimension_numbers = #tpu.dot_dimension_numbers<[1], [0], [0], [1], [0, 0, 1, 1], [], []>} : vector<4x32xbf16>, vector<32x16xbf16>, vector<4x16xf32> -> vector<4x16xf32>
    %371 = arith.addf %364, %370 : vector<4x16xf32>
    %c0_411 = arith.constant 0 : index
    %c3_412 = arith.constant 3 : index
    %c1_413 = arith.constant 1 : index
    %c0_414 = arith.constant 0 : index
    %372 = vector.load %arg14[%c0_411, %c3_412, %c1_413, %c0_414] : memref<2x5x5x32xf32, #tpu.memory_space<vmem>>, vector<1x1x4x32xf32>
    %373 = vector.shape_cast %372 : vector<1x1x4x32xf32> to vector<4x32xf32>
    %374 = arith.truncf %373 : vector<4x32xf32> to vector<4x32xbf16>
    %c3_415 = arith.constant 3 : index
    %c0_416 = arith.constant 0 : index
    %c0_417 = arith.constant 0 : index
    %375 = vector.load %arg4[%c3_415, %c0_416, %c0_417] : memref<4x32x16xbf16, #tpu.memory_space<vmem>>, vector<1x32x16xbf16>
    %376 = vector.shape_cast %375 : vector<1x32x16xbf16> to vector<32x16xbf16>
    %cst_418 = arith.constant dense<0.000000e+00> : vector<4x16xf32>
    %377 = tpu.matmul %374, %376, %cst_418 {dimension_numbers = #tpu.dot_dimension_numbers<[1], [0], [0], [1], [0, 0, 1, 1], [], []>} : vector<4x32xbf16>, vector<32x16xbf16>, vector<4x16xf32> -> vector<4x16xf32>
    %378 = arith.addf %371, %377 : vector<4x16xf32>
    %c0_419 = arith.constant 0 : index
    %c0_420 = arith.constant 0 : index
    %379 = vector.load %arg5[%c0_419, %c0_420] : memref<1x16xf32, #tpu.memory_space<vmem>>, vector<1x16xf32>
    %380 = vector.broadcast %379 : vector<1x16xf32> to vector<4x16xf32>
    %381 = arith.addf %378, %380 : vector<4x16xf32>
    %cst_421 = arith.constant 0.000000e+00 : f32
    %382 = vector.broadcast %cst_421 : f32 to vector<4x16xf32>
    %383 = arith.maximumf %381, %382 : vector<4x16xf32>
    %c0_422 = arith.constant 0 : index
    %c8 = arith.constant 8 : index
    %c0_423 = arith.constant 0 : index
    %384 = vector.load %arg15[%c0_422, %c8, %c0_423] : memref<2x16x16xf32, #tpu.memory_space<vmem>>, vector<1x4x16xf32>
    %385 = vector.shape_cast %384 : vector<1x4x16xf32> to vector<4x16xf32>
    %386 = vector.shape_cast %383 : vector<4x16xf32> to vector<1x4x16xf32>
    tpu.vector_store %arg15[%c0_422, %c8, %c0_423], %386 {strides = array<i32>} : memref<2x16x16xf32, #tpu.memory_space<vmem>>, vector<1x4x16xf32>,
    %c0_424 = arith.constant 0 : index
    %c3_425 = arith.constant 3 : index
    %c0_426 = arith.constant 0 : index
    %c0_427 = arith.constant 0 : index
    %387 = vector.load %arg14[%c0_424, %c3_425, %c0_426, %c0_427] : memref<2x5x5x32xf32, #tpu.memory_space<vmem>>, vector<1x1x4x32xf32>
    %388 = vector.shape_cast %387 : vector<1x1x4x32xf32> to vector<4x32xf32>
    %389 = arith.truncf %388 : vector<4x32xf32> to vector<4x32xbf16>
    %c0_428 = arith.constant 0 : index
    %c0_429 = arith.constant 0 : index
    %c0_430 = arith.constant 0 : index
    %390 = vector.load %arg4[%c0_428, %c0_429, %c0_430] : memref<4x32x16xbf16, #tpu.memory_space<vmem>>, vector<1x32x16xbf16>
    %391 = vector.shape_cast %390 : vector<1x32x16xbf16> to vector<32x16xbf16>
    %cst_431 = arith.constant dense<0.000000e+00> : vector<4x16xf32>
    %392 = tpu.matmul %389, %391, %cst_431 {dimension_numbers = #tpu.dot_dimension_numbers<[1], [0], [0], [1], [0, 0, 1, 1], [], []>} : vector<4x32xbf16>, vector<32x16xbf16>, vector<4x16xf32> -> vector<4x16xf32>
    %c0_432 = arith.constant 0 : index
    %c3_433 = arith.constant 3 : index
    %c1_434 = arith.constant 1 : index
    %c0_435 = arith.constant 0 : index
    %393 = vector.load %arg14[%c0_432, %c3_433, %c1_434, %c0_435] : memref<2x5x5x32xf32, #tpu.memory_space<vmem>>, vector<1x1x4x32xf32>
    %394 = vector.shape_cast %393 : vector<1x1x4x32xf32> to vector<4x32xf32>
    %395 = arith.truncf %394 : vector<4x32xf32> to vector<4x32xbf16>
    %c1_436 = arith.constant 1 : index
    %c0_437 = arith.constant 0 : index
    %c0_438 = arith.constant 0 : index
    %396 = vector.load %arg4[%c1_436, %c0_437, %c0_438] : memref<4x32x16xbf16, #tpu.memory_space<vmem>>, vector<1x32x16xbf16>
    %397 = vector.shape_cast %396 : vector<1x32x16xbf16> to vector<32x16xbf16>
    %cst_439 = arith.constant dense<0.000000e+00> : vector<4x16xf32>
    %398 = tpu.matmul %395, %397, %cst_439 {dimension_numbers = #tpu.dot_dimension_numbers<[1], [0], [0], [1], [0, 0, 1, 1], [], []>} : vector<4x32xbf16>, vector<32x16xbf16>, vector<4x16xf32> -> vector<4x16xf32>
    %399 = arith.addf %392, %398 : vector<4x16xf32>
    %c0_440 = arith.constant 0 : index
    %c4_441 = arith.constant 4 : index
    %c0_442 = arith.constant 0 : index
    %c0_443 = arith.constant 0 : index
    %400 = vector.load %arg14[%c0_440, %c4_441, %c0_442, %c0_443] : memref<2x5x5x32xf32, #tpu.memory_space<vmem>>, vector<1x1x4x32xf32>
    %401 = vector.shape_cast %400 : vector<1x1x4x32xf32> to vector<4x32xf32>
    %402 = arith.truncf %401 : vector<4x32xf32> to vector<4x32xbf16>
    %c2_444 = arith.constant 2 : index
    %c0_445 = arith.constant 0 : index
    %c0_446 = arith.constant 0 : index
    %403 = vector.load %arg4[%c2_444, %c0_445, %c0_446] : memref<4x32x16xbf16, #tpu.memory_space<vmem>>, vector<1x32x16xbf16>
    %404 = vector.shape_cast %403 : vector<1x32x16xbf16> to vector<32x16xbf16>
    %cst_447 = arith.constant dense<0.000000e+00> : vector<4x16xf32>
    %405 = tpu.matmul %402, %404, %cst_447 {dimension_numbers = #tpu.dot_dimension_numbers<[1], [0], [0], [1], [0, 0, 1, 1], [], []>} : vector<4x32xbf16>, vector<32x16xbf16>, vector<4x16xf32> -> vector<4x16xf32>
    %406 = arith.addf %399, %405 : vector<4x16xf32>
    %c0_448 = arith.constant 0 : index
    %c4_449 = arith.constant 4 : index
    %c1_450 = arith.constant 1 : index
    %c0_451 = arith.constant 0 : index
    %407 = vector.load %arg14[%c0_448, %c4_449, %c1_450, %c0_451] : memref<2x5x5x32xf32, #tpu.memory_space<vmem>>, vector<1x1x4x32xf32>
    %408 = vector.shape_cast %407 : vector<1x1x4x32xf32> to vector<4x32xf32>
    %409 = arith.truncf %408 : vector<4x32xf32> to vector<4x32xbf16>
    %c3_452 = arith.constant 3 : index
    %c0_453 = arith.constant 0 : index
    %c0_454 = arith.constant 0 : index
    %410 = vector.load %arg4[%c3_452, %c0_453, %c0_454] : memref<4x32x16xbf16, #tpu.memory_space<vmem>>, vector<1x32x16xbf16>
    %411 = vector.shape_cast %410 : vector<1x32x16xbf16> to vector<32x16xbf16>
    %cst_455 = arith.constant dense<0.000000e+00> : vector<4x16xf32>
    %412 = tpu.matmul %409, %411, %cst_455 {dimension_numbers = #tpu.dot_dimension_numbers<[1], [0], [0], [1], [0, 0, 1, 1], [], []>} : vector<4x32xbf16>, vector<32x16xbf16>, vector<4x16xf32> -> vector<4x16xf32>
    %413 = arith.addf %406, %412 : vector<4x16xf32>
    %c0_456 = arith.constant 0 : index
    %c0_457 = arith.constant 0 : index
    %414 = vector.load %arg5[%c0_456, %c0_457] : memref<1x16xf32, #tpu.memory_space<vmem>>, vector<1x16xf32>
    %415 = vector.broadcast %414 : vector<1x16xf32> to vector<4x16xf32>
    %416 = arith.addf %413, %415 : vector<4x16xf32>
    %cst_458 = arith.constant 0.000000e+00 : f32
    %417 = vector.broadcast %cst_458 : f32 to vector<4x16xf32>
    %418 = arith.maximumf %416, %417 : vector<4x16xf32>
    %c0_459 = arith.constant 0 : index
    %c12 = arith.constant 12 : index
    %c0_460 = arith.constant 0 : index
    %419 = vector.load %arg15[%c0_459, %c12, %c0_460] : memref<2x16x16xf32, #tpu.memory_space<vmem>>, vector<1x4x16xf32>
    %420 = vector.shape_cast %419 : vector<1x4x16xf32> to vector<4x16xf32>
    %421 = vector.shape_cast %418 : vector<4x16xf32> to vector<1x4x16xf32>
    tpu.vector_store %arg15[%c0_459, %c12, %c0_460], %421 {strides = array<i32>} : memref<2x16x16xf32, #tpu.memory_space<vmem>>, vector<1x4x16xf32>,
    %c1_461 = arith.constant 1 : index
    %c0_462 = arith.constant 0 : index
    %c0_463 = arith.constant 0 : index
    %c0_464 = arith.constant 0 : index
    %422 = vector.load %arg14[%c1_461, %c0_462, %c0_463, %c0_464] : memref<2x5x5x32xf32, #tpu.memory_space<vmem>>, vector<1x1x4x32xf32>
    %423 = vector.shape_cast %422 : vector<1x1x4x32xf32> to vector<4x32xf32>
    %424 = arith.truncf %423 : vector<4x32xf32> to vector<4x32xbf16>
    %c0_465 = arith.constant 0 : index
    %c0_466 = arith.constant 0 : index
    %c0_467 = arith.constant 0 : index
    %425 = vector.load %arg4[%c0_465, %c0_466, %c0_467] : memref<4x32x16xbf16, #tpu.memory_space<vmem>>, vector<1x32x16xbf16>
    %426 = vector.shape_cast %425 : vector<1x32x16xbf16> to vector<32x16xbf16>
    %cst_468 = arith.constant dense<0.000000e+00> : vector<4x16xf32>
    %427 = tpu.matmul %424, %426, %cst_468 {dimension_numbers = #tpu.dot_dimension_numbers<[1], [0], [0], [1], [0, 0, 1, 1], [], []>} : vector<4x32xbf16>, vector<32x16xbf16>, vector<4x16xf32> -> vector<4x16xf32>
    %c1_469 = arith.constant 1 : index
    %c0_470 = arith.constant 0 : index
    %c1_471 = arith.constant 1 : index
    %c0_472 = arith.constant 0 : index
    %428 = vector.load %arg14[%c1_469, %c0_470, %c1_471, %c0_472] : memref<2x5x5x32xf32, #tpu.memory_space<vmem>>, vector<1x1x4x32xf32>
    %429 = vector.shape_cast %428 : vector<1x1x4x32xf32> to vector<4x32xf32>
    %430 = arith.truncf %429 : vector<4x32xf32> to vector<4x32xbf16>
    %c1_473 = arith.constant 1 : index
    %c0_474 = arith.constant 0 : index
    %c0_475 = arith.constant 0 : index
    %431 = vector.load %arg4[%c1_473, %c0_474, %c0_475] : memref<4x32x16xbf16, #tpu.memory_space<vmem>>, vector<1x32x16xbf16>
    %432 = vector.shape_cast %431 : vector<1x32x16xbf16> to vector<32x16xbf16>
    %cst_476 = arith.constant dense<0.000000e+00> : vector<4x16xf32>
    %433 = tpu.matmul %430, %432, %cst_476 {dimension_numbers = #tpu.dot_dimension_numbers<[1], [0], [0], [1], [0, 0, 1, 1], [], []>} : vector<4x32xbf16>, vector<32x16xbf16>, vector<4x16xf32> -> vector<4x16xf32>
    %434 = arith.addf %427, %433 : vector<4x16xf32>
    %c1_477 = arith.constant 1 : index
    %c1_478 = arith.constant 1 : index
    %c0_479 = arith.constant 0 : index
    %c0_480 = arith.constant 0 : index
    %435 = vector.load %arg14[%c1_477, %c1_478, %c0_479, %c0_480] : memref<2x5x5x32xf32, #tpu.memory_space<vmem>>, vector<1x1x4x32xf32>
    %436 = vector.shape_cast %435 : vector<1x1x4x32xf32> to vector<4x32xf32>
    %437 = arith.truncf %436 : vector<4x32xf32> to vector<4x32xbf16>
    %c2_481 = arith.constant 2 : index
    %c0_482 = arith.constant 0 : index
    %c0_483 = arith.constant 0 : index
    %438 = vector.load %arg4[%c2_481, %c0_482, %c0_483] : memref<4x32x16xbf16, #tpu.memory_space<vmem>>, vector<1x32x16xbf16>
    %439 = vector.shape_cast %438 : vector<1x32x16xbf16> to vector<32x16xbf16>
    %cst_484 = arith.constant dense<0.000000e+00> : vector<4x16xf32>
    %440 = tpu.matmul %437, %439, %cst_484 {dimension_numbers = #tpu.dot_dimension_numbers<[1], [0], [0], [1], [0, 0, 1, 1], [], []>} : vector<4x32xbf16>, vector<32x16xbf16>, vector<4x16xf32> -> vector<4x16xf32>
    %441 = arith.addf %434, %440 : vector<4x16xf32>
    %c1_485 = arith.constant 1 : index
    %c1_486 = arith.constant 1 : index
    %c1_487 = arith.constant 1 : index
    %c0_488 = arith.constant 0 : index
    %442 = vector.load %arg14[%c1_485, %c1_486, %c1_487, %c0_488] : memref<2x5x5x32xf32, #tpu.memory_space<vmem>>, vector<1x1x4x32xf32>
    %443 = vector.shape_cast %442 : vector<1x1x4x32xf32> to vector<4x32xf32>
    %444 = arith.truncf %443 : vector<4x32xf32> to vector<4x32xbf16>
    %c3_489 = arith.constant 3 : index
    %c0_490 = arith.constant 0 : index
    %c0_491 = arith.constant 0 : index
    %445 = vector.load %arg4[%c3_489, %c0_490, %c0_491] : memref<4x32x16xbf16, #tpu.memory_space<vmem>>, vector<1x32x16xbf16>
    %446 = vector.shape_cast %445 : vector<1x32x16xbf16> to vector<32x16xbf16>
    %cst_492 = arith.constant dense<0.000000e+00> : vector<4x16xf32>
    %447 = tpu.matmul %444, %446, %cst_492 {dimension_numbers = #tpu.dot_dimension_numbers<[1], [0], [0], [1], [0, 0, 1, 1], [], []>} : vector<4x32xbf16>, vector<32x16xbf16>, vector<4x16xf32> -> vector<4x16xf32>
    %448 = arith.addf %441, %447 : vector<4x16xf32>
    %c0_493 = arith.constant 0 : index
    %c0_494 = arith.constant 0 : index
    %449 = vector.load %arg5[%c0_493, %c0_494] : memref<1x16xf32, #tpu.memory_space<vmem>>, vector<1x16xf32>
    %450 = vector.broadcast %449 : vector<1x16xf32> to vector<4x16xf32>
    %451 = arith.addf %448, %450 : vector<4x16xf32>
    %cst_495 = arith.constant 0.000000e+00 : f32
    %452 = vector.broadcast %cst_495 : f32 to vector<4x16xf32>
    %453 = arith.maximumf %451, %452 : vector<4x16xf32>
    %c1_496 = arith.constant 1 : index
    %c0_497 = arith.constant 0 : index
    %c0_498 = arith.constant 0 : index
    %454 = vector.load %arg15[%c1_496, %c0_497, %c0_498] : memref<2x16x16xf32, #tpu.memory_space<vmem>>, vector<1x4x16xf32>
    %455 = vector.shape_cast %454 : vector<1x4x16xf32> to vector<4x16xf32>
    %456 = vector.shape_cast %453 : vector<4x16xf32> to vector<1x4x16xf32>
    tpu.vector_store %arg15[%c1_496, %c0_497, %c0_498], %456 {strides = array<i32>} : memref<2x16x16xf32, #tpu.memory_space<vmem>>, vector<1x4x16xf32>,
    %c1_499 = arith.constant 1 : index
    %c1_500 = arith.constant 1 : index
    %c0_501 = arith.constant 0 : index
    %c0_502 = arith.constant 0 : index
    %457 = vector.load %arg14[%c1_499, %c1_500, %c0_501, %c0_502] : memref<2x5x5x32xf32, #tpu.memory_space<vmem>>, vector<1x1x4x32xf32>
    %458 = vector.shape_cast %457 : vector<1x1x4x32xf32> to vector<4x32xf32>
    %459 = arith.truncf %458 : vector<4x32xf32> to vector<4x32xbf16>
    %c0_503 = arith.constant 0 : index
    %c0_504 = arith.constant 0 : index
    %c0_505 = arith.constant 0 : index
    %460 = vector.load %arg4[%c0_503, %c0_504, %c0_505] : memref<4x32x16xbf16, #tpu.memory_space<vmem>>, vector<1x32x16xbf16>
    %461 = vector.shape_cast %460 : vector<1x32x16xbf16> to vector<32x16xbf16>
    %cst_506 = arith.constant dense<0.000000e+00> : vector<4x16xf32>
    %462 = tpu.matmul %459, %461, %cst_506 {dimension_numbers = #tpu.dot_dimension_numbers<[1], [0], [0], [1], [0, 0, 1, 1], [], []>} : vector<4x32xbf16>, vector<32x16xbf16>, vector<4x16xf32> -> vector<4x16xf32>
    %c1_507 = arith.constant 1 : index
    %c1_508 = arith.constant 1 : index
    %c1_509 = arith.constant 1 : index
    %c0_510 = arith.constant 0 : index
    %463 = vector.load %arg14[%c1_507, %c1_508, %c1_509, %c0_510] : memref<2x5x5x32xf32, #tpu.memory_space<vmem>>, vector<1x1x4x32xf32>
    %464 = vector.shape_cast %463 : vector<1x1x4x32xf32> to vector<4x32xf32>
    %465 = arith.truncf %464 : vector<4x32xf32> to vector<4x32xbf16>
    %c1_511 = arith.constant 1 : index
    %c0_512 = arith.constant 0 : index
    %c0_513 = arith.constant 0 : index
    %466 = vector.load %arg4[%c1_511, %c0_512, %c0_513] : memref<4x32x16xbf16, #tpu.memory_space<vmem>>, vector<1x32x16xbf16>
    %467 = vector.shape_cast %466 : vector<1x32x16xbf16> to vector<32x16xbf16>
    %cst_514 = arith.constant dense<0.000000e+00> : vector<4x16xf32>
    %468 = tpu.matmul %465, %467, %cst_514 {dimension_numbers = #tpu.dot_dimension_numbers<[1], [0], [0], [1], [0, 0, 1, 1], [], []>} : vector<4x32xbf16>, vector<32x16xbf16>, vector<4x16xf32> -> vector<4x16xf32>
    %469 = arith.addf %462, %468 : vector<4x16xf32>
    %c1_515 = arith.constant 1 : index
    %c2_516 = arith.constant 2 : index
    %c0_517 = arith.constant 0 : index
    %c0_518 = arith.constant 0 : index
    %470 = vector.load %arg14[%c1_515, %c2_516, %c0_517, %c0_518] : memref<2x5x5x32xf32, #tpu.memory_space<vmem>>, vector<1x1x4x32xf32>
    %471 = vector.shape_cast %470 : vector<1x1x4x32xf32> to vector<4x32xf32>
    %472 = arith.truncf %471 : vector<4x32xf32> to vector<4x32xbf16>
    %c2_519 = arith.constant 2 : index
    %c0_520 = arith.constant 0 : index
    %c0_521 = arith.constant 0 : index
    %473 = vector.load %arg4[%c2_519, %c0_520, %c0_521] : memref<4x32x16xbf16, #tpu.memory_space<vmem>>, vector<1x32x16xbf16>
    %474 = vector.shape_cast %473 : vector<1x32x16xbf16> to vector<32x16xbf16>
    %cst_522 = arith.constant dense<0.000000e+00> : vector<4x16xf32>
    %475 = tpu.matmul %472, %474, %cst_522 {dimension_numbers = #tpu.dot_dimension_numbers<[1], [0], [0], [1], [0, 0, 1, 1], [], []>} : vector<4x32xbf16>, vector<32x16xbf16>, vector<4x16xf32> -> vector<4x16xf32>
    %476 = arith.addf %469, %475 : vector<4x16xf32>
    %c1_523 = arith.constant 1 : index
    %c2_524 = arith.constant 2 : index
    %c1_525 = arith.constant 1 : index
    %c0_526 = arith.constant 0 : index
    %477 = vector.load %arg14[%c1_523, %c2_524, %c1_525, %c0_526] : memref<2x5x5x32xf32, #tpu.memory_space<vmem>>, vector<1x1x4x32xf32>
    %478 = vector.shape_cast %477 : vector<1x1x4x32xf32> to vector<4x32xf32>
    %479 = arith.truncf %478 : vector<4x32xf32> to vector<4x32xbf16>
    %c3_527 = arith.constant 3 : index
    %c0_528 = arith.constant 0 : index
    %c0_529 = arith.constant 0 : index
    %480 = vector.load %arg4[%c3_527, %c0_528, %c0_529] : memref<4x32x16xbf16, #tpu.memory_space<vmem>>, vector<1x32x16xbf16>
    %481 = vector.shape_cast %480 : vector<1x32x16xbf16> to vector<32x16xbf16>
    %cst_530 = arith.constant dense<0.000000e+00> : vector<4x16xf32>
    %482 = tpu.matmul %479, %481, %cst_530 {dimension_numbers = #tpu.dot_dimension_numbers<[1], [0], [0], [1], [0, 0, 1, 1], [], []>} : vector<4x32xbf16>, vector<32x16xbf16>, vector<4x16xf32> -> vector<4x16xf32>
    %483 = arith.addf %476, %482 : vector<4x16xf32>
    %c0_531 = arith.constant 0 : index
    %c0_532 = arith.constant 0 : index
    %484 = vector.load %arg5[%c0_531, %c0_532] : memref<1x16xf32, #tpu.memory_space<vmem>>, vector<1x16xf32>
    %485 = vector.broadcast %484 : vector<1x16xf32> to vector<4x16xf32>
    %486 = arith.addf %483, %485 : vector<4x16xf32>
    %cst_533 = arith.constant 0.000000e+00 : f32
    %487 = vector.broadcast %cst_533 : f32 to vector<4x16xf32>
    %488 = arith.maximumf %486, %487 : vector<4x16xf32>
    %c1_534 = arith.constant 1 : index
    %c4_535 = arith.constant 4 : index
    %c0_536 = arith.constant 0 : index
    %489 = vector.load %arg15[%c1_534, %c4_535, %c0_536] : memref<2x16x16xf32, #tpu.memory_space<vmem>>, vector<1x4x16xf32>
    %490 = vector.shape_cast %489 : vector<1x4x16xf32> to vector<4x16xf32>
    %491 = vector.shape_cast %488 : vector<4x16xf32> to vector<1x4x16xf32>
    tpu.vector_store %arg15[%c1_534, %c4_535, %c0_536], %491 {strides = array<i32>} : memref<2x16x16xf32, #tpu.memory_space<vmem>>, vector<1x4x16xf32>,
    %c1_537 = arith.constant 1 : index
    %c2_538 = arith.constant 2 : index
    %c0_539 = arith.constant 0 : index
    %c0_540 = arith.constant 0 : index
    %492 = vector.load %arg14[%c1_537, %c2_538, %c0_539, %c0_540] : memref<2x5x5x32xf32, #tpu.memory_space<vmem>>, vector<1x1x4x32xf32>
    %493 = vector.shape_cast %492 : vector<1x1x4x32xf32> to vector<4x32xf32>
    %494 = arith.truncf %493 : vector<4x32xf32> to vector<4x32xbf16>
    %c0_541 = arith.constant 0 : index
    %c0_542 = arith.constant 0 : index
    %c0_543 = arith.constant 0 : index
    %495 = vector.load %arg4[%c0_541, %c0_542, %c0_543] : memref<4x32x16xbf16, #tpu.memory_space<vmem>>, vector<1x32x16xbf16>
    %496 = vector.shape_cast %495 : vector<1x32x16xbf16> to vector<32x16xbf16>
    %cst_544 = arith.constant dense<0.000000e+00> : vector<4x16xf32>
    %497 = tpu.matmul %494, %496, %cst_544 {dimension_numbers = #tpu.dot_dimension_numbers<[1], [0], [0], [1], [0, 0, 1, 1], [], []>} : vector<4x32xbf16>, vector<32x16xbf16>, vector<4x16xf32> -> vector<4x16xf32>
    %c1_545 = arith.constant 1 : index
    %c2_546 = arith.constant 2 : index
    %c1_547 = arith.constant 1 : index
    %c0_548 = arith.constant 0 : index
    %498 = vector.load %arg14[%c1_545, %c2_546, %c1_547, %c0_548] : memref<2x5x5x32xf32, #tpu.memory_space<vmem>>, vector<1x1x4x32xf32>
    %499 = vector.shape_cast %498 : vector<1x1x4x32xf32> to vector<4x32xf32>
    %500 = arith.truncf %499 : vector<4x32xf32> to vector<4x32xbf16>
    %c1_549 = arith.constant 1 : index
    %c0_550 = arith.constant 0 : index
    %c0_551 = arith.constant 0 : index
    %501 = vector.load %arg4[%c1_549, %c0_550, %c0_551] : memref<4x32x16xbf16, #tpu.memory_space<vmem>>, vector<1x32x16xbf16>
    %502 = vector.shape_cast %501 : vector<1x32x16xbf16> to vector<32x16xbf16>
    %cst_552 = arith.constant dense<0.000000e+00> : vector<4x16xf32>
    %503 = tpu.matmul %500, %502, %cst_552 {dimension_numbers = #tpu.dot_dimension_numbers<[1], [0], [0], [1], [0, 0, 1, 1], [], []>} : vector<4x32xbf16>, vector<32x16xbf16>, vector<4x16xf32> -> vector<4x16xf32>
    %504 = arith.addf %497, %503 : vector<4x16xf32>
    %c1_553 = arith.constant 1 : index
    %c3_554 = arith.constant 3 : index
    %c0_555 = arith.constant 0 : index
    %c0_556 = arith.constant 0 : index
    %505 = vector.load %arg14[%c1_553, %c3_554, %c0_555, %c0_556] : memref<2x5x5x32xf32, #tpu.memory_space<vmem>>, vector<1x1x4x32xf32>
    %506 = vector.shape_cast %505 : vector<1x1x4x32xf32> to vector<4x32xf32>
    %507 = arith.truncf %506 : vector<4x32xf32> to vector<4x32xbf16>
    %c2_557 = arith.constant 2 : index
    %c0_558 = arith.constant 0 : index
    %c0_559 = arith.constant 0 : index
    %508 = vector.load %arg4[%c2_557, %c0_558, %c0_559] : memref<4x32x16xbf16, #tpu.memory_space<vmem>>, vector<1x32x16xbf16>
    %509 = vector.shape_cast %508 : vector<1x32x16xbf16> to vector<32x16xbf16>
    %cst_560 = arith.constant dense<0.000000e+00> : vector<4x16xf32>
    %510 = tpu.matmul %507, %509, %cst_560 {dimension_numbers = #tpu.dot_dimension_numbers<[1], [0], [0], [1], [0, 0, 1, 1], [], []>} : vector<4x32xbf16>, vector<32x16xbf16>, vector<4x16xf32> -> vector<4x16xf32>
    %511 = arith.addf %504, %510 : vector<4x16xf32>
    %c1_561 = arith.constant 1 : index
    %c3_562 = arith.constant 3 : index
    %c1_563 = arith.constant 1 : index
    %c0_564 = arith.constant 0 : index
    %512 = vector.load %arg14[%c1_561, %c3_562, %c1_563, %c0_564] : memref<2x5x5x32xf32, #tpu.memory_space<vmem>>, vector<1x1x4x32xf32>
    %513 = vector.shape_cast %512 : vector<1x1x4x32xf32> to vector<4x32xf32>
    %514 = arith.truncf %513 : vector<4x32xf32> to vector<4x32xbf16>
    %c3_565 = arith.constant 3 : index
    %c0_566 = arith.constant 0 : index
    %c0_567 = arith.constant 0 : index
    %515 = vector.load %arg4[%c3_565, %c0_566, %c0_567] : memref<4x32x16xbf16, #tpu.memory_space<vmem>>, vector<1x32x16xbf16>
    %516 = vector.shape_cast %515 : vector<1x32x16xbf16> to vector<32x16xbf16>
    %cst_568 = arith.constant dense<0.000000e+00> : vector<4x16xf32>
    %517 = tpu.matmul %514, %516, %cst_568 {dimension_numbers = #tpu.dot_dimension_numbers<[1], [0], [0], [1], [0, 0, 1, 1], [], []>} : vector<4x32xbf16>, vector<32x16xbf16>, vector<4x16xf32> -> vector<4x16xf32>
    %518 = arith.addf %511, %517 : vector<4x16xf32>
    %c0_569 = arith.constant 0 : index
    %c0_570 = arith.constant 0 : index
    %519 = vector.load %arg5[%c0_569, %c0_570] : memref<1x16xf32, #tpu.memory_space<vmem>>, vector<1x16xf32>
    %520 = vector.broadcast %519 : vector<1x16xf32> to vector<4x16xf32>
    %521 = arith.addf %518, %520 : vector<4x16xf32>
    %cst_571 = arith.constant 0.000000e+00 : f32
    %522 = vector.broadcast %cst_571 : f32 to vector<4x16xf32>
    %523 = arith.maximumf %521, %522 : vector<4x16xf32>
    %c1_572 = arith.constant 1 : index
    %c8_573 = arith.constant 8 : index
    %c0_574 = arith.constant 0 : index
    %524 = vector.load %arg15[%c1_572, %c8_573, %c0_574] : memref<2x16x16xf32, #tpu.memory_space<vmem>>, vector<1x4x16xf32>
    %525 = vector.shape_cast %524 : vector<1x4x16xf32> to vector<4x16xf32>
    %526 = vector.shape_cast %523 : vector<4x16xf32> to vector<1x4x16xf32>
    tpu.vector_store %arg15[%c1_572, %c8_573, %c0_574], %526 {strides = array<i32>} : memref<2x16x16xf32, #tpu.memory_space<vmem>>, vector<1x4x16xf32>,
    %c1_575 = arith.constant 1 : index
    %c3_576 = arith.constant 3 : index
    %c0_577 = arith.constant 0 : index
    %c0_578 = arith.constant 0 : index
    %527 = vector.load %arg14[%c1_575, %c3_576, %c0_577, %c0_578] : memref<2x5x5x32xf32, #tpu.memory_space<vmem>>, vector<1x1x4x32xf32>
    %528 = vector.shape_cast %527 : vector<1x1x4x32xf32> to vector<4x32xf32>
    %529 = arith.truncf %528 : vector<4x32xf32> to vector<4x32xbf16>
    %c0_579 = arith.constant 0 : index
    %c0_580 = arith.constant 0 : index
    %c0_581 = arith.constant 0 : index
    %530 = vector.load %arg4[%c0_579, %c0_580, %c0_581] : memref<4x32x16xbf16, #tpu.memory_space<vmem>>, vector<1x32x16xbf16>
    %531 = vector.shape_cast %530 : vector<1x32x16xbf16> to vector<32x16xbf16>
    %cst_582 = arith.constant dense<0.000000e+00> : vector<4x16xf32>
    %532 = tpu.matmul %529, %531, %cst_582 {dimension_numbers = #tpu.dot_dimension_numbers<[1], [0], [0], [1], [0, 0, 1, 1], [], []>} : vector<4x32xbf16>, vector<32x16xbf16>, vector<4x16xf32> -> vector<4x16xf32>
    %c1_583 = arith.constant 1 : index
    %c3_584 = arith.constant 3 : index
    %c1_585 = arith.constant 1 : index
    %c0_586 = arith.constant 0 : index
    %533 = vector.load %arg14[%c1_583, %c3_584, %c1_585, %c0_586] : memref<2x5x5x32xf32, #tpu.memory_space<vmem>>, vector<1x1x4x32xf32>
    %534 = vector.shape_cast %533 : vector<1x1x4x32xf32> to vector<4x32xf32>
    %535 = arith.truncf %534 : vector<4x32xf32> to vector<4x32xbf16>
    %c1_587 = arith.constant 1 : index
    %c0_588 = arith.constant 0 : index
    %c0_589 = arith.constant 0 : index
    %536 = vector.load %arg4[%c1_587, %c0_588, %c0_589] : memref<4x32x16xbf16, #tpu.memory_space<vmem>>, vector<1x32x16xbf16>
    %537 = vector.shape_cast %536 : vector<1x32x16xbf16> to vector<32x16xbf16>
    %cst_590 = arith.constant dense<0.000000e+00> : vector<4x16xf32>
    %538 = tpu.matmul %535, %537, %cst_590 {dimension_numbers = #tpu.dot_dimension_numbers<[1], [0], [0], [1], [0, 0, 1, 1], [], []>} : vector<4x32xbf16>, vector<32x16xbf16>, vector<4x16xf32> -> vector<4x16xf32>
    %539 = arith.addf %532, %538 : vector<4x16xf32>
    %c1_591 = arith.constant 1 : index
    %c4_592 = arith.constant 4 : index
    %c0_593 = arith.constant 0 : index
    %c0_594 = arith.constant 0 : index
    %540 = vector.load %arg14[%c1_591, %c4_592, %c0_593, %c0_594] : memref<2x5x5x32xf32, #tpu.memory_space<vmem>>, vector<1x1x4x32xf32>
    %541 = vector.shape_cast %540 : vector<1x1x4x32xf32> to vector<4x32xf32>
    %542 = arith.truncf %541 : vector<4x32xf32> to vector<4x32xbf16>
    %c2_595 = arith.constant 2 : index
    %c0_596 = arith.constant 0 : index
    %c0_597 = arith.constant 0 : index
    %543 = vector.load %arg4[%c2_595, %c0_596, %c0_597] : memref<4x32x16xbf16, #tpu.memory_space<vmem>>, vector<1x32x16xbf16>
    %544 = vector.shape_cast %543 : vector<1x32x16xbf16> to vector<32x16xbf16>
    %cst_598 = arith.constant dense<0.000000e+00> : vector<4x16xf32>
    %545 = tpu.matmul %542, %544, %cst_598 {dimension_numbers = #tpu.dot_dimension_numbers<[1], [0], [0], [1], [0, 0, 1, 1], [], []>} : vector<4x32xbf16>, vector<32x16xbf16>, vector<4x16xf32> -> vector<4x16xf32>
    %546 = arith.addf %539, %545 : vector<4x16xf32>
    %c1_599 = arith.constant 1 : index
    %c4_600 = arith.constant 4 : index
    %c1_601 = arith.constant 1 : index
    %c0_602 = arith.constant 0 : index
    %547 = vector.load %arg14[%c1_599, %c4_600, %c1_601, %c0_602] : memref<2x5x5x32xf32, #tpu.memory_space<vmem>>, vector<1x1x4x32xf32>
    %548 = vector.shape_cast %547 : vector<1x1x4x32xf32> to vector<4x32xf32>
    %549 = arith.truncf %548 : vector<4x32xf32> to vector<4x32xbf16>
    %c3_603 = arith.constant 3 : index
    %c0_604 = arith.constant 0 : index
    %c0_605 = arith.constant 0 : index
    %550 = vector.load %arg4[%c3_603, %c0_604, %c0_605] : memref<4x32x16xbf16, #tpu.memory_space<vmem>>, vector<1x32x16xbf16>
    %551 = vector.shape_cast %550 : vector<1x32x16xbf16> to vector<32x16xbf16>
    %cst_606 = arith.constant dense<0.000000e+00> : vector<4x16xf32>
    %552 = tpu.matmul %549, %551, %cst_606 {dimension_numbers = #tpu.dot_dimension_numbers<[1], [0], [0], [1], [0, 0, 1, 1], [], []>} : vector<4x32xbf16>, vector<32x16xbf16>, vector<4x16xf32> -> vector<4x16xf32>
    %553 = arith.addf %546, %552 : vector<4x16xf32>
    %c0_607 = arith.constant 0 : index
    %c0_608 = arith.constant 0 : index
    %554 = vector.load %arg5[%c0_607, %c0_608] : memref<1x16xf32, #tpu.memory_space<vmem>>, vector<1x16xf32>
    %555 = vector.broadcast %554 : vector<1x16xf32> to vector<4x16xf32>
    %556 = arith.addf %553, %555 : vector<4x16xf32>
    %cst_609 = arith.constant 0.000000e+00 : f32
    %557 = vector.broadcast %cst_609 : f32 to vector<4x16xf32>
    %558 = arith.maximumf %556, %557 : vector<4x16xf32>
    %c1_610 = arith.constant 1 : index
    %c12_611 = arith.constant 12 : index
    %c0_612 = arith.constant 0 : index
    %559 = vector.load %arg15[%c1_610, %c12_611, %c0_612] : memref<2x16x16xf32, #tpu.memory_space<vmem>>, vector<1x4x16xf32>
    %560 = vector.shape_cast %559 : vector<1x4x16xf32> to vector<4x16xf32>
    %561 = vector.shape_cast %558 : vector<4x16xf32> to vector<1x4x16xf32>
    tpu.vector_store %arg15[%c1_610, %c12_611, %c0_612], %561 {strides = array<i32>} : memref<2x16x16xf32, #tpu.memory_space<vmem>>, vector<1x4x16xf32>,
    %c0_613 = arith.constant 0 : index
    %c0_614 = arith.constant 0 : index
    %562 = vector.load %arg1[%c0_613, %c0_614] : memref<2x8xf32, #tpu.memory_space<vmem>>, vector<2x8xf32>
    %563 = arith.truncf %562 : vector<2x8xf32> to vector<2x8xbf16>
    %c0_615 = arith.constant 0 : index
    %c0_616 = arith.constant 0 : index
    %564 = vector.load %arg7[%c0_615, %c0_616] : memref<8x32xbf16, #tpu.memory_space<vmem>>, vector<8x32xbf16>
    %cst_617 = arith.constant dense<0.000000e+00> : vector<2x32xf32>
    %565 = tpu.matmul %563, %564, %cst_617 {dimension_numbers = #tpu.dot_dimension_numbers<[1], [0], [0], [1], [0, 0, 1, 1], [], []>} : vector<2x8xbf16>, vector<8x32xbf16>, vector<2x32xf32> -> vector<2x32xf32>
    %c0_618 = arith.constant 0 : index
    %c0_619 = arith.constant 0 : index
    %c0_620 = arith.constant 0 : index
    %566 = vector.load %arg15[%c0_618, %c0_619, %c0_620] : memref<2x16x16xf32, #tpu.memory_space<vmem>>, vector<2x1x16xf32>
    %567 = vector.shape_cast %566 : vector<2x1x16xf32> to vector<2x16xf32>
    %568 = arith.truncf %567 : vector<2x16xf32> to vector<2x16xbf16>
    %c0_621 = arith.constant 0 : index
    %c0_622 = arith.constant 0 : index
    %c0_623 = arith.constant 0 : index
    %569 = vector.load %arg6[%c0_621, %c0_622, %c0_623] : memref<16x16x32xbf16, #tpu.memory_space<vmem>>, vector<1x16x32xbf16>
    %570 = vector.shape_cast %569 : vector<1x16x32xbf16> to vector<16x32xbf16>
    %cst_624 = arith.constant dense<0.000000e+00> : vector<2x32xf32>
    %571 = tpu.matmul %568, %570, %cst_624 {dimension_numbers = #tpu.dot_dimension_numbers<[1], [0], [0], [1], [0, 0, 1, 1], [], []>} : vector<2x16xbf16>, vector<16x32xbf16>, vector<2x32xf32> -> vector<2x32xf32>
    %572 = arith.addf %565, %571 : vector<2x32xf32>
    %c0_625 = arith.constant 0 : index
    %c1_626 = arith.constant 1 : index
    %c0_627 = arith.constant 0 : index
    %573 = vector.load %arg15[%c0_625, %c1_626, %c0_627] : memref<2x16x16xf32, #tpu.memory_space<vmem>>, vector<2x1x16xf32>
    %574 = vector.shape_cast %573 : vector<2x1x16xf32> to vector<2x16xf32>
    %575 = arith.truncf %574 : vector<2x16xf32> to vector<2x16xbf16>
    %c1_628 = arith.constant 1 : index
    %c0_629 = arith.constant 0 : index
    %c0_630 = arith.constant 0 : index
    %576 = vector.load %arg6[%c1_628, %c0_629, %c0_630] : memref<16x16x32xbf16, #tpu.memory_space<vmem>>, vector<1x16x32xbf16>
    %577 = vector.shape_cast %576 : vector<1x16x32xbf16> to vector<16x32xbf16>
    %cst_631 = arith.constant dense<0.000000e+00> : vector<2x32xf32>
    %578 = tpu.matmul %575, %577, %cst_631 {dimension_numbers = #tpu.dot_dimension_numbers<[1], [0], [0], [1], [0, 0, 1, 1], [], []>} : vector<2x16xbf16>, vector<16x32xbf16>, vector<2x32xf32> -> vector<2x32xf32>
    %579 = arith.addf %572, %578 : vector<2x32xf32>
    %c0_632 = arith.constant 0 : index
    %c2_633 = arith.constant 2 : index
    %c0_634 = arith.constant 0 : index
    %580 = vector.load %arg15[%c0_632, %c2_633, %c0_634] : memref<2x16x16xf32, #tpu.memory_space<vmem>>, vector<2x1x16xf32>
    %581 = vector.shape_cast %580 : vector<2x1x16xf32> to vector<2x16xf32>
    %582 = arith.truncf %581 : vector<2x16xf32> to vector<2x16xbf16>
    %c2_635 = arith.constant 2 : index
    %c0_636 = arith.constant 0 : index
    %c0_637 = arith.constant 0 : index
    %583 = vector.load %arg6[%c2_635, %c0_636, %c0_637] : memref<16x16x32xbf16, #tpu.memory_space<vmem>>, vector<1x16x32xbf16>
    %584 = vector.shape_cast %583 : vector<1x16x32xbf16> to vector<16x32xbf16>
    %cst_638 = arith.constant dense<0.000000e+00> : vector<2x32xf32>
    %585 = tpu.matmul %582, %584, %cst_638 {dimension_numbers = #tpu.dot_dimension_numbers<[1], [0], [0], [1], [0, 0, 1, 1], [], []>} : vector<2x16xbf16>, vector<16x32xbf16>, vector<2x32xf32> -> vector<2x32xf32>
    %586 = arith.addf %579, %585 : vector<2x32xf32>
    %c0_639 = arith.constant 0 : index
    %c3_640 = arith.constant 3 : index
    %c0_641 = arith.constant 0 : index
    %587 = vector.load %arg15[%c0_639, %c3_640, %c0_641] : memref<2x16x16xf32, #tpu.memory_space<vmem>>, vector<2x1x16xf32>
    %588 = vector.shape_cast %587 : vector<2x1x16xf32> to vector<2x16xf32>
    %589 = arith.truncf %588 : vector<2x16xf32> to vector<2x16xbf16>
    %c3_642 = arith.constant 3 : index
    %c0_643 = arith.constant 0 : index
    %c0_644 = arith.constant 0 : index
    %590 = vector.load %arg6[%c3_642, %c0_643, %c0_644] : memref<16x16x32xbf16, #tpu.memory_space<vmem>>, vector<1x16x32xbf16>
    %591 = vector.shape_cast %590 : vector<1x16x32xbf16> to vector<16x32xbf16>
    %cst_645 = arith.constant dense<0.000000e+00> : vector<2x32xf32>
    %592 = tpu.matmul %589, %591, %cst_645 {dimension_numbers = #tpu.dot_dimension_numbers<[1], [0], [0], [1], [0, 0, 1, 1], [], []>} : vector<2x16xbf16>, vector<16x32xbf16>, vector<2x32xf32> -> vector<2x32xf32>
    %593 = arith.addf %586, %592 : vector<2x32xf32>
    %c0_646 = arith.constant 0 : index
    %c4_647 = arith.constant 4 : index
    %c0_648 = arith.constant 0 : index
    %594 = vector.load %arg15[%c0_646, %c4_647, %c0_648] : memref<2x16x16xf32, #tpu.memory_space<vmem>>, vector<2x1x16xf32>
    %595 = vector.shape_cast %594 : vector<2x1x16xf32> to vector<2x16xf32>
    %596 = arith.truncf %595 : vector<2x16xf32> to vector<2x16xbf16>
    %c4_649 = arith.constant 4 : index
    %c0_650 = arith.constant 0 : index
    %c0_651 = arith.constant 0 : index
    %597 = vector.load %arg6[%c4_649, %c0_650, %c0_651] : memref<16x16x32xbf16, #tpu.memory_space<vmem>>, vector<1x16x32xbf16>
    %598 = vector.shape_cast %597 : vector<1x16x32xbf16> to vector<16x32xbf16>
    %cst_652 = arith.constant dense<0.000000e+00> : vector<2x32xf32>
    %599 = tpu.matmul %596, %598, %cst_652 {dimension_numbers = #tpu.dot_dimension_numbers<[1], [0], [0], [1], [0, 0, 1, 1], [], []>} : vector<2x16xbf16>, vector<16x32xbf16>, vector<2x32xf32> -> vector<2x32xf32>
    %600 = arith.addf %593, %599 : vector<2x32xf32>
    %c0_653 = arith.constant 0 : index
    %c5 = arith.constant 5 : index
    %c0_654 = arith.constant 0 : index
    %601 = vector.load %arg15[%c0_653, %c5, %c0_654] : memref<2x16x16xf32, #tpu.memory_space<vmem>>, vector<2x1x16xf32>
    %602 = vector.shape_cast %601 : vector<2x1x16xf32> to vector<2x16xf32>
    %603 = arith.truncf %602 : vector<2x16xf32> to vector<2x16xbf16>
    %c5_655 = arith.constant 5 : index
    %c0_656 = arith.constant 0 : index
    %c0_657 = arith.constant 0 : index
    %604 = vector.load %arg6[%c5_655, %c0_656, %c0_657] : memref<16x16x32xbf16, #tpu.memory_space<vmem>>, vector<1x16x32xbf16>
    %605 = vector.shape_cast %604 : vector<1x16x32xbf16> to vector<16x32xbf16>
    %cst_658 = arith.constant dense<0.000000e+00> : vector<2x32xf32>
    %606 = tpu.matmul %603, %605, %cst_658 {dimension_numbers = #tpu.dot_dimension_numbers<[1], [0], [0], [1], [0, 0, 1, 1], [], []>} : vector<2x16xbf16>, vector<16x32xbf16>, vector<2x32xf32> -> vector<2x32xf32>
    %607 = arith.addf %600, %606 : vector<2x32xf32>
    %c0_659 = arith.constant 0 : index
    %c6 = arith.constant 6 : index
    %c0_660 = arith.constant 0 : index
    %608 = vector.load %arg15[%c0_659, %c6, %c0_660] : memref<2x16x16xf32, #tpu.memory_space<vmem>>, vector<2x1x16xf32>
    %609 = vector.shape_cast %608 : vector<2x1x16xf32> to vector<2x16xf32>
    %610 = arith.truncf %609 : vector<2x16xf32> to vector<2x16xbf16>
    %c6_661 = arith.constant 6 : index
    %c0_662 = arith.constant 0 : index
    %c0_663 = arith.constant 0 : index
    %611 = vector.load %arg6[%c6_661, %c0_662, %c0_663] : memref<16x16x32xbf16, #tpu.memory_space<vmem>>, vector<1x16x32xbf16>
    %612 = vector.shape_cast %611 : vector<1x16x32xbf16> to vector<16x32xbf16>
    %cst_664 = arith.constant dense<0.000000e+00> : vector<2x32xf32>
    %613 = tpu.matmul %610, %612, %cst_664 {dimension_numbers = #tpu.dot_dimension_numbers<[1], [0], [0], [1], [0, 0, 1, 1], [], []>} : vector<2x16xbf16>, vector<16x32xbf16>, vector<2x32xf32> -> vector<2x32xf32>
    %614 = arith.addf %607, %613 : vector<2x32xf32>
    %c0_665 = arith.constant 0 : index
    %c7 = arith.constant 7 : index
    %c0_666 = arith.constant 0 : index
    %615 = vector.load %arg15[%c0_665, %c7, %c0_666] : memref<2x16x16xf32, #tpu.memory_space<vmem>>, vector<2x1x16xf32>
    %616 = vector.shape_cast %615 : vector<2x1x16xf32> to vector<2x16xf32>
    %617 = arith.truncf %616 : vector<2x16xf32> to vector<2x16xbf16>
    %c7_667 = arith.constant 7 : index
    %c0_668 = arith.constant 0 : index
    %c0_669 = arith.constant 0 : index
    %618 = vector.load %arg6[%c7_667, %c0_668, %c0_669] : memref<16x16x32xbf16, #tpu.memory_space<vmem>>, vector<1x16x32xbf16>
    %619 = vector.shape_cast %618 : vector<1x16x32xbf16> to vector<16x32xbf16>
    %cst_670 = arith.constant dense<0.000000e+00> : vector<2x32xf32>
    %620 = tpu.matmul %617, %619, %cst_670 {dimension_numbers = #tpu.dot_dimension_numbers<[1], [0], [0], [1], [0, 0, 1, 1], [], []>} : vector<2x16xbf16>, vector<16x32xbf16>, vector<2x32xf32> -> vector<2x32xf32>
    %621 = arith.addf %614, %620 : vector<2x32xf32>
    %c0_671 = arith.constant 0 : index
    %c8_672 = arith.constant 8 : index
    %c0_673 = arith.constant 0 : index
    %622 = vector.load %arg15[%c0_671, %c8_672, %c0_673] : memref<2x16x16xf32, #tpu.memory_space<vmem>>, vector<2x1x16xf32>
    %623 = vector.shape_cast %622 : vector<2x1x16xf32> to vector<2x16xf32>
    %624 = arith.truncf %623 : vector<2x16xf32> to vector<2x16xbf16>
    %c8_674 = arith.constant 8 : index
    %c0_675 = arith.constant 0 : index
    %c0_676 = arith.constant 0 : index
    %625 = vector.load %arg6[%c8_674, %c0_675, %c0_676] : memref<16x16x32xbf16, #tpu.memory_space<vmem>>, vector<1x16x32xbf16>
    %626 = vector.shape_cast %625 : vector<1x16x32xbf16> to vector<16x32xbf16>
    %cst_677 = arith.constant dense<0.000000e+00> : vector<2x32xf32>
    %627 = tpu.matmul %624, %626, %cst_677 {dimension_numbers = #tpu.dot_dimension_numbers<[1], [0], [0], [1], [0, 0, 1, 1], [], []>} : vector<2x16xbf16>, vector<16x32xbf16>, vector<2x32xf32> -> vector<2x32xf32>
    %628 = arith.addf %621, %627 : vector<2x32xf32>
    %c0_678 = arith.constant 0 : index
    %c9 = arith.constant 9 : index
    %c0_679 = arith.constant 0 : index
    %629 = vector.load %arg15[%c0_678, %c9, %c0_679] : memref<2x16x16xf32, #tpu.memory_space<vmem>>, vector<2x1x16xf32>
    %630 = vector.shape_cast %629 : vector<2x1x16xf32> to vector<2x16xf32>
    %631 = arith.truncf %630 : vector<2x16xf32> to vector<2x16xbf16>
    %c9_680 = arith.constant 9 : index
    %c0_681 = arith.constant 0 : index
    %c0_682 = arith.constant 0 : index
    %632 = vector.load %arg6[%c9_680, %c0_681, %c0_682] : memref<16x16x32xbf16, #tpu.memory_space<vmem>>, vector<1x16x32xbf16>
    %633 = vector.shape_cast %632 : vector<1x16x32xbf16> to vector<16x32xbf16>
    %cst_683 = arith.constant dense<0.000000e+00> : vector<2x32xf32>
    %634 = tpu.matmul %631, %633, %cst_683 {dimension_numbers = #tpu.dot_dimension_numbers<[1], [0], [0], [1], [0, 0, 1, 1], [], []>} : vector<2x16xbf16>, vector<16x32xbf16>, vector<2x32xf32> -> vector<2x32xf32>
    %635 = arith.addf %628, %634 : vector<2x32xf32>
    %c0_684 = arith.constant 0 : index
    %c10 = arith.constant 10 : index
    %c0_685 = arith.constant 0 : index
    %636 = vector.load %arg15[%c0_684, %c10, %c0_685] : memref<2x16x16xf32, #tpu.memory_space<vmem>>, vector<2x1x16xf32>
    %637 = vector.shape_cast %636 : vector<2x1x16xf32> to vector<2x16xf32>
    %638 = arith.truncf %637 : vector<2x16xf32> to vector<2x16xbf16>
    %c10_686 = arith.constant 10 : index
    %c0_687 = arith.constant 0 : index
    %c0_688 = arith.constant 0 : index
    %639 = vector.load %arg6[%c10_686, %c0_687, %c0_688] : memref<16x16x32xbf16, #tpu.memory_space<vmem>>, vector<1x16x32xbf16>
    %640 = vector.shape_cast %639 : vector<1x16x32xbf16> to vector<16x32xbf16>
    %cst_689 = arith.constant dense<0.000000e+00> : vector<2x32xf32>
    %641 = tpu.matmul %638, %640, %cst_689 {dimension_numbers = #tpu.dot_dimension_numbers<[1], [0], [0], [1], [0, 0, 1, 1], [], []>} : vector<2x16xbf16>, vector<16x32xbf16>, vector<2x32xf32> -> vector<2x32xf32>
    %642 = arith.addf %635, %641 : vector<2x32xf32>
    %c0_690 = arith.constant 0 : index
    %c11 = arith.constant 11 : index
    %c0_691 = arith.constant 0 : index
    %643 = vector.load %arg15[%c0_690, %c11, %c0_691] : memref<2x16x16xf32, #tpu.memory_space<vmem>>, vector<2x1x16xf32>
    %644 = vector.shape_cast %643 : vector<2x1x16xf32> to vector<2x16xf32>
    %645 = arith.truncf %644 : vector<2x16xf32> to vector<2x16xbf16>
    %c11_692 = arith.constant 11 : index
    %c0_693 = arith.constant 0 : index
    %c0_694 = arith.constant 0 : index
    %646 = vector.load %arg6[%c11_692, %c0_693, %c0_694] : memref<16x16x32xbf16, #tpu.memory_space<vmem>>, vector<1x16x32xbf16>
    %647 = vector.shape_cast %646 : vector<1x16x32xbf16> to vector<16x32xbf16>
    %cst_695 = arith.constant dense<0.000000e+00> : vector<2x32xf32>
    %648 = tpu.matmul %645, %647, %cst_695 {dimension_numbers = #tpu.dot_dimension_numbers<[1], [0], [0], [1], [0, 0, 1, 1], [], []>} : vector<2x16xbf16>, vector<16x32xbf16>, vector<2x32xf32> -> vector<2x32xf32>
    %649 = arith.addf %642, %648 : vector<2x32xf32>
    %c0_696 = arith.constant 0 : index
    %c12_697 = arith.constant 12 : index
    %c0_698 = arith.constant 0 : index
    %650 = vector.load %arg15[%c0_696, %c12_697, %c0_698] : memref<2x16x16xf32, #tpu.memory_space<vmem>>, vector<2x1x16xf32>
    %651 = vector.shape_cast %650 : vector<2x1x16xf32> to vector<2x16xf32>
    %652 = arith.truncf %651 : vector<2x16xf32> to vector<2x16xbf16>
    %c12_699 = arith.constant 12 : index
    %c0_700 = arith.constant 0 : index
    %c0_701 = arith.constant 0 : index
    %653 = vector.load %arg6[%c12_699, %c0_700, %c0_701] : memref<16x16x32xbf16, #tpu.memory_space<vmem>>, vector<1x16x32xbf16>
    %654 = vector.shape_cast %653 : vector<1x16x32xbf16> to vector<16x32xbf16>
    %cst_702 = arith.constant dense<0.000000e+00> : vector<2x32xf32>
    %655 = tpu.matmul %652, %654, %cst_702 {dimension_numbers = #tpu.dot_dimension_numbers<[1], [0], [0], [1], [0, 0, 1, 1], [], []>} : vector<2x16xbf16>, vector<16x32xbf16>, vector<2x32xf32> -> vector<2x32xf32>
    %656 = arith.addf %649, %655 : vector<2x32xf32>
    %c0_703 = arith.constant 0 : index
    %c13 = arith.constant 13 : index
    %c0_704 = arith.constant 0 : index
    %657 = vector.load %arg15[%c0_703, %c13, %c0_704] : memref<2x16x16xf32, #tpu.memory_space<vmem>>, vector<2x1x16xf32>
    %658 = vector.shape_cast %657 : vector<2x1x16xf32> to vector<2x16xf32>
    %659 = arith.truncf %658 : vector<2x16xf32> to vector<2x16xbf16>
    %c13_705 = arith.constant 13 : index
    %c0_706 = arith.constant 0 : index
    %c0_707 = arith.constant 0 : index
    %660 = vector.load %arg6[%c13_705, %c0_706, %c0_707] : memref<16x16x32xbf16, #tpu.memory_space<vmem>>, vector<1x16x32xbf16>
    %661 = vector.shape_cast %660 : vector<1x16x32xbf16> to vector<16x32xbf16>
    %cst_708 = arith.constant dense<0.000000e+00> : vector<2x32xf32>
    %662 = tpu.matmul %659, %661, %cst_708 {dimension_numbers = #tpu.dot_dimension_numbers<[1], [0], [0], [1], [0, 0, 1, 1], [], []>} : vector<2x16xbf16>, vector<16x32xbf16>, vector<2x32xf32> -> vector<2x32xf32>
    %663 = arith.addf %656, %662 : vector<2x32xf32>
    %c0_709 = arith.constant 0 : index
    %c14 = arith.constant 14 : index
    %c0_710 = arith.constant 0 : index
    %664 = vector.load %arg15[%c0_709, %c14, %c0_710] : memref<2x16x16xf32, #tpu.memory_space<vmem>>, vector<2x1x16xf32>
    %665 = vector.shape_cast %664 : vector<2x1x16xf32> to vector<2x16xf32>
    %666 = arith.truncf %665 : vector<2x16xf32> to vector<2x16xbf16>
    %c14_711 = arith.constant 14 : index
    %c0_712 = arith.constant 0 : index
    %c0_713 = arith.constant 0 : index
    %667 = vector.load %arg6[%c14_711, %c0_712, %c0_713] : memref<16x16x32xbf16, #tpu.memory_space<vmem>>, vector<1x16x32xbf16>
    %668 = vector.shape_cast %667 : vector<1x16x32xbf16> to vector<16x32xbf16>
    %cst_714 = arith.constant dense<0.000000e+00> : vector<2x32xf32>
    %669 = tpu.matmul %666, %668, %cst_714 {dimension_numbers = #tpu.dot_dimension_numbers<[1], [0], [0], [1], [0, 0, 1, 1], [], []>} : vector<2x16xbf16>, vector<16x32xbf16>, vector<2x32xf32> -> vector<2x32xf32>
    %670 = arith.addf %663, %669 : vector<2x32xf32>
    %c0_715 = arith.constant 0 : index
    %c15 = arith.constant 15 : index
    %c0_716 = arith.constant 0 : index
    %671 = vector.load %arg15[%c0_715, %c15, %c0_716] : memref<2x16x16xf32, #tpu.memory_space<vmem>>, vector<2x1x16xf32>
    %672 = vector.shape_cast %671 : vector<2x1x16xf32> to vector<2x16xf32>
    %673 = arith.truncf %672 : vector<2x16xf32> to vector<2x16xbf16>
    %c15_717 = arith.constant 15 : index
    %c0_718 = arith.constant 0 : index
    %c0_719 = arith.constant 0 : index
    %674 = vector.load %arg6[%c15_717, %c0_718, %c0_719] : memref<16x16x32xbf16, #tpu.memory_space<vmem>>, vector<1x16x32xbf16>
    %675 = vector.shape_cast %674 : vector<1x16x32xbf16> to vector<16x32xbf16>
    %cst_720 = arith.constant dense<0.000000e+00> : vector<2x32xf32>
    %676 = tpu.matmul %673, %675, %cst_720 {dimension_numbers = #tpu.dot_dimension_numbers<[1], [0], [0], [1], [0, 0, 1, 1], [], []>} : vector<2x16xbf16>, vector<16x32xbf16>, vector<2x32xf32> -> vector<2x32xf32>
    %677 = arith.addf %670, %676 : vector<2x32xf32>
    %c0_721 = arith.constant 0 : index
    %c0_722 = arith.constant 0 : index
    %678 = vector.load %arg8[%c0_721, %c0_722] : memref<1x32xf32, #tpu.memory_space<vmem>>, vector<1x32xf32>
    %679 = vector.broadcast %678 : vector<1x32xf32> to vector<2x32xf32>
    %680 = arith.addf %677, %679 : vector<2x32xf32>
    %cst_723 = arith.constant 0.000000e+00 : f32
    %681 = vector.broadcast %cst_723 : f32 to vector<2x32xf32>
    %682 = arith.maximumf %680, %681 : vector<2x32xf32>
    %683 = arith.truncf %682 : vector<2x32xf32> to vector<2x32xbf16>
    %c0_724 = arith.constant 0 : index
    %c0_725 = arith.constant 0 : index
    %684 = vector.load %arg9[%c0_724, %c0_725] : memref<32x32xbf16, #tpu.memory_space<vmem>>, vector<32x32xbf16>
    %cst_726 = arith.constant dense<0.000000e+00> : vector<2x32xf32>
    %685 = tpu.matmul %683, %684, %cst_726 {dimension_numbers = #tpu.dot_dimension_numbers<[1], [0], [0], [1], [0, 0, 1, 1], [], []>} : vector<2x32xbf16>, vector<32x32xbf16>, vector<2x32xf32> -> vector<2x32xf32>
    %c0_727 = arith.constant 0 : index
    %c0_728 = arith.constant 0 : index
    %686 = vector.load %arg10[%c0_727, %c0_728] : memref<1x32xf32, #tpu.memory_space<vmem>>, vector<1x32xf32>
    %687 = vector.broadcast %686 : vector<1x32xf32> to vector<2x32xf32>
    %688 = arith.addf %685, %687 : vector<2x32xf32>
    %cst_729 = arith.constant 0.000000e+00 : f32
    %689 = vector.broadcast %cst_729 : f32 to vector<2x32xf32>
    %690 = arith.maximumf %688, %689 : vector<2x32xf32>
    %691 = arith.truncf %690 : vector<2x32xf32> to vector<2x32xbf16>
    %c0_730 = arith.constant 0 : index
    %c0_731 = arith.constant 0 : index
    %692 = vector.load %arg11[%c0_730, %c0_731] : memref<32x4xbf16, #tpu.memory_space<vmem>>, vector<32x4xbf16>
    %cst_732 = arith.constant dense<0.000000e+00> : vector<2x4xf32>
    %693 = tpu.matmul %691, %692, %cst_732 {dimension_numbers = #tpu.dot_dimension_numbers<[1], [0], [0], [1], [0, 0, 1, 1], [], []>} : vector<2x32xbf16>, vector<32x4xbf16>, vector<2x4xf32> -> vector<2x4xf32>
    %c0_733 = arith.constant 0 : index
    %c0_734 = arith.constant 0 : index
    %694 = vector.load %arg12[%c0_733, %c0_734] : memref<1x4xf32, #tpu.memory_space<vmem>>, vector<1x4xf32>
    %695 = vector.broadcast %694 : vector<1x4xf32> to vector<2x4xf32>
    %696 = arith.addf %693, %695 : vector<2x4xf32>
    %c0_735 = arith.constant 0 : index
    %c0_736 = arith.constant 0 : index
    %697 = vector.load %arg13[%c0_735, %c0_736] : memref<2x4xf32, #tpu.memory_space<vmem>>, vector<2x4xf32>
    tpu.vector_store %arg13[%c0_735, %c0_736], %696 {strides = array<i32>} : memref<2x4xf32, #tpu.memory_space<vmem>>, vector<2x4xf32>,
    return
  }
}

</mosaic_0001>

<llo_original>
// kernel: policy_forward.1
$region0: #{policy_forward.1}
  #allocation0 [shape = 'u32[]', space=smem, size = 0x4, offset = 0x4, fixed_abs, tag = 'smem constant byte address 0x4 - core index']
  #allocation1 [shape = 'u32[72,128]{1,0:T(1,128)}', space=vmem, size = 0x9000, scoped, tag = 'internal scratch']
  #allocation2 [shape = 'f32[2,5,5,32]{3,2,1,0:T(8,128)}', space=vmem, size = 0xa000, scoped, tag = 'scratch operand']
  #allocation3 [shape = 'f32[2,16,16]{2,1,0:T(8,128)}', space=vmem, size = 0x4000, scoped, tag = 'scratch operand']
  %s0 = inlined_call_operand.vmem [shape: f32[2,5,5,64], index: 0, kind: input, shape index: {}]
  %s1 = inlined_call_operand.vmem [shape: f32[2,8], index: 1, kind: input, shape index: {}]
  %s2 = inlined_call_operand.vmem [shape: bf16[4,64,32], index: 2, kind: input, shape index: {}]
  %s3 = inlined_call_operand.vmem [shape: f32[1,32], index: 3, kind: input, shape index: {}]
  %s4 = inlined_call_operand.vmem [shape: bf16[4,32,16], index: 4, kind: input, shape index: {}]
  %s5 = inlined_call_operand.vmem [shape: f32[1,16], index: 5, kind: input, shape index: {}]
  %s6 = inlined_call_operand.vmem [shape: bf16[16,16,32], index: 6, kind: input, shape index: {}]
  %s7 = inlined_call_operand.vmem [shape: bf16[8,32], index: 7, kind: input, shape index: {}]
  %s8 = inlined_call_operand.vmem [shape: f32[1,32], index: 8, kind: input, shape index: {}]
  %s9 = inlined_call_operand.vmem [shape: bf16[32,32], index: 9, kind: input, shape index: {}]
  %s10 = inlined_call_operand.vmem [shape: f32[1,32], index: 10, kind: input, shape index: {}]
  %s11 = inlined_call_operand.vmem [shape: bf16[32,4], index: 11, kind: input, shape index: {}]
  %s12 = inlined_call_operand.vmem [shape: f32[1,4], index: 12, kind: input, shape index: {}]
  %s13 = inlined_call_operand.hbm [shape: f32[2,4], index: 13, kind: output, shape index: {}]
  %s14 = sld [smem:[#allocation0]]
  $region62: #{policy_forward.1} parent=0
    _
  %s16 = ssub.s32 1, %s14
  %s17 = scalar_select 0, %s16, %s14
  $region1: #{policy_forward.1} parent=0
    #allocation4 [shape = 'u8[1024]{0}', space=vmem, size = 0x400, scoped, tag = 'output window, operand 0, single buffered']
    #allocation5 [shape = 's32[1]{0}', space=sflag, size = 0x4, scoped, tag = 'scoped memory for policy_forward.1']
    %18 = vsyncpa [#allocation5], 0
    // Predicated region
    $region2: #{policy_forward.1} parent=1 // pred_check
      _
    $region3: #{policy_forward.1} parent=1 // pred_check_branch
      %20 = sbr.rel (0) target = $region5
    $region4: #{policy_forward.1} parent=1 // pred_region
      _
    $region5: #{policy_forward.1} parent=1 // pred_fallthru
      _
    // Predicated region
    $region6: #{policy_forward.1} parent=1 // pred_check
      _
    $region7: #{policy_forward.1} parent=1 // pred_check_branch
      %22 = sbr.rel (0) target = $region9
    $region8: #{policy_forward.1} parent=1 // pred_region
      _
    $region9: #{policy_forward.1} parent=1 // pred_fallthru
      _
    // Predicated region
    $region10: #{policy_forward.1} parent=1 // pred_check
      _
    $region11: #{policy_forward.1} parent=1 // pred_check_branch
      %24 = sbr.rel (0) target = $region13
    $region12: #{policy_forward.1} parent=1 // pred_region
      _
    $region13: #{policy_forward.1} parent=1 // pred_fallthru
      _
    // Predicated region
    $region14: #{policy_forward.1} parent=1 // pred_check
      _
    $region15: #{policy_forward.1} parent=1 // pred_check_branch
      %26 = sbr.rel (0) target = $region17
    $region16: #{policy_forward.1} parent=1 // pred_region
      _
    $region17: #{policy_forward.1} parent=1 // pred_fallthru
      _
    // Predicated region
    $region18: #{policy_forward.1} parent=1 // pred_check
      _
    $region19: #{policy_forward.1} parent=1 // pred_check_branch
      %28 = sbr.rel (0) target = $region21
    $region20: #{policy_forward.1} parent=1 // pred_region
      _
    $region21: #{policy_forward.1} parent=1 // pred_fallthru
      _
    // Predicated region
    $region22: #{policy_forward.1} parent=1 // pred_check
      _
    $region23: #{policy_forward.1} parent=1 // pred_check_branch
      %30 = sbr.rel (0) target = $region25
    $region24: #{policy_forward.1} parent=1 // pred_region
      _
    $region25: #{policy_forward.1} parent=1 // pred_fallthru
      _
    // Predicated region
    $region26: #{policy_forward.1} parent=1 // pred_check
      _
    $region27: #{policy_forward.1} parent=1 // pred_check_branch
      %32 = sbr.rel (0) target = $region29
    $region28: #{policy_forward.1} parent=1 // pred_region
      _
    $region29: #{policy_forward.1} parent=1 // pred_fallthru
      _
    // Predicated region
    $region30: #{policy_forward.1} parent=1 // pred_check
      _
    $region31: #{policy_forward.1} parent=1 // pred_check_branch
      %34 = sbr.rel (0) target = $region33
    $region32: #{policy_forward.1} parent=1 // pred_region
      _
    $region33: #{policy_forward.1} parent=1 // pred_fallthru
      _
    // Predicated region
    $region34: #{policy_forward.1} parent=1 // pred_check
      _
    $region35: #{policy_forward.1} parent=1 // pred_check_branch
      %36 = sbr.rel (0) target = $region37
    $region36: #{policy_forward.1} parent=1 // pred_region
      _
    $region37: #{policy_forward.1} parent=1 // pred_fallthru
      _
    // Predicated region
    $region38: #{policy_forward.1} parent=1 // pred_check
      _
    $region39: #{policy_forward.1} parent=1 // pred_check_branch
      %38 = sbr.rel (0) target = $region41
    $region40: #{policy_forward.1} parent=1 // pred_region
      _
    $region41: #{policy_forward.1} parent=1 // pred_fallthru
      _
    // Predicated region
    $region42: #{policy_forward.1} parent=1 // pred_check
      _
    $region43: #{policy_forward.1} parent=1 // pred_check_branch
      %40 = sbr.rel (0) target = $region45
    $region44: #{policy_forward.1} parent=1 // pred_region
      _
    $region45: #{policy_forward.1} parent=1 // pred_fallthru
      _
    // Predicated region
    $region46: #{policy_forward.1} parent=1 // pred_check
      _
    $region47: #{policy_forward.1} parent=1 // pred_check_branch
      %42 = sbr.rel (0) target = $region49
    $region48: #{policy_forward.1} parent=1 // pred_region
      _
    $region49: #{policy_forward.1} parent=1 // pred_fallthru
      _
    // Predicated region
    $region50: #{policy_forward.1} parent=1 // pred_check
      _
    $region51: #{policy_forward.1} parent=1 // pred_check_branch
      %44 = sbr.rel (0) target = $region53
    $region52: #{policy_forward.1} parent=1 // pred_region
      _
    $region53: #{policy_forward.1} parent=1 // pred_fallthru
      _
    %vm46 = vcmask 258048
    %47 = vst.msk [vmem:[#allocation2] sm:$0x1f] %vm46, 0.0
    %48 = vst.msk [vmem:[#allocation2 + $0x8] sm:$0x1f] %vm46, 0.0
    %49 = vst.msk [vmem:[#allocation2 + $0x10] sm:$0x1f] %vm46, 0.0
    %50 = vst.msk [vmem:[#allocation2 + $0x18] sm:$0x1f] %vm46, 0.0
    %51 = vst.msk [vmem:[#allocation2 + $0x20] sm:$0x1f] %vm46, 0.0
    %52 = vst.msk [vmem:[#allocation2 + $0x28] sm:$0x1f] %vm46, 0.0
    %53 = vst.msk [vmem:[#allocation2 + $0x30] sm:$0x1f] %vm46, 0.0
    %54 = vst.msk [vmem:[#allocation2 + $0x38] sm:$0x1f] %vm46, 0.0
    %55 = vst.msk [vmem:[#allocation2 + $0x40] sm:$0x1f] %vm46, 0.0
    %56 = vst.msk [vmem:[#allocation2 + $0x48] sm:$0x1f] %vm46, 0.0
    %v57 = vld [vmem:[%s0] sm:$0xf]
    %v58 = vpack.c.bf16 %v57, %v57
    %v59 = vld [vmem:[%s2] sm:$0xf]
    %v60 = vld [vmem:[%s2 + $0x4] sm:$0xf]
    %v61 = vld [vmem:[%s2 + $0x8] sm:$0xf]
    %v62 = vld [vmem:[%s2 + $0xc] sm:$0xf]
    %v63 = vld [vmem:[%s2 + $0x10] sm:$0xf]
    %v64 = vld [vmem:[%s2 + $0x14] sm:$0xf]
    %v65 = vld [vmem:[%s2 + $0x18] sm:$0xf]
    %v66 = vld [vmem:[%s2 + $0x1c] sm:$0xf]
    %v67 = vld [vmem:[%s0 + $0x1] sm:$0xf]
    %v68 = vpack.c.bf16 %v67, %v67
    %s69 = scalar_lea.vmem %s2, 32
    %v70 = vld [vmem:[%s69] sm:$0xf]
    %v71 = vld [vmem:[%s69 + $0x4] sm:$0xf]
    %v72 = vld [vmem:[%s69 + $0x8] sm:$0xf]
    %v73 = vld [vmem:[%s69 + $0xc] sm:$0xf]
    %v74 = vld [vmem:[%s69 + $0x10] sm:$0xf]
    %v75 = vld [vmem:[%s69 + $0x14] sm:$0xf]
    %v76 = vld [vmem:[%s69 + $0x18] sm:$0xf]
    %v77 = vld [vmem:[%s69 + $0x1c] sm:$0xf]
    %v86 = vunpack.c.l.b16 %v70
    %v87 = vunpack.c.l.b16 %v71
    %v88 = vunpack.c.l.b16 %v72
    %v89 = vunpack.c.l.b16 %v73
    %v90 = vunpack.c.l.b16 %v74
    %v91 = vunpack.c.l.b16 %v75
    %v92 = vunpack.c.l.b16 %v76
    %v93 = vunpack.c.l.b16 %v77
    %v94 = vpack.c.b16 %v87, %v86
    %v95 = vpack.c.b16 %v89, %v88
    %v96 = vpack.c.b16 %v91, %v90
    %v97 = vpack.c.b16 %v93, %v92
    %vm102 = vcmask 523264
    %v104 = vsel %vm102, %v68, 0
    %106 = vmatpush.bf16.msra.mxu0 0
    %107 = vmatpush.bf16.msra.mxu0 0
    %108 = vmatpush.bf16.msra.mxu0 0
    %109 = vmatpush.bf16.msra.mxu0 0
    %110 = vmatpush.bf16.msra.mxu0 %v97
    %111 = vmatpush.bf16.msra.mxu0 %v96
    %112 = vmatpush.bf16.msra.mxu0 %v95
    %113 = vmatpush.bf16.msra.mxu0 %v94
    %114 = vmatmul.bf16.gmra.mxu0 %v104
    %v115 = vpop.f32.mrf.mxu0
    %v116 = vadd.f32 0.0, %v115
    %v117 = vpop.f32.mrf.mxu0
    %118 = vdwg.mxu0
    %v127 = vunpack.c.l.b16 %v59
    %v128 = vunpack.c.l.b16 %v60
    %v129 = vunpack.c.l.b16 %v61
    %v130 = vunpack.c.l.b16 %v62
    %v131 = vunpack.c.l.b16 %v63
    %v132 = vunpack.c.l.b16 %v64
    %v133 = vunpack.c.l.b16 %v65
    %v134 = vunpack.c.l.b16 %v66
    %v135 = vpack.c.b16 %v128, %v127
    %v136 = vpack.c.b16 %v130, %v129
    %v137 = vpack.c.b16 %v132, %v131
    %v138 = vpack.c.b16 %v134, %v133
    %v144 = vsel %vm102, %v58, 0
    %146 = vmatpush.bf16.msra.mxu0 0
    %147 = vmatpush.bf16.msra.mxu0 0
    %148 = vmatpush.bf16.msra.mxu0 0
    %149 = vmatpush.bf16.msra.mxu0 0
    %150 = vmatpush.bf16.msra.mxu0 %v138
    %151 = vmatpush.bf16.msra.mxu0 %v137
    %152 = vmatpush.bf16.msra.mxu0 %v136
    %153 = vmatpush.bf16.msra.mxu0 %v135
    %154 = vmatmul.bf16.gmra.mxu0 %v144
    %v155 = vpop.f32.mrf.mxu0
    %v156 = vadd.f32 %v116, %v155
    %v157 = vpop.f32.mrf.mxu0
    %158 = vdwg.mxu0
    %s159 = scalar_lea.vmem %s0, 8
    %v160 = vld [vmem:[%s159] sm:$0xf]
    %v161 = vpack.c.bf16 %v160, %v160
    %s162 = scalar_lea.vmem %s2, 64
    %v163 = vld [vmem:[%s162] sm:$0xf]
    %v164 = vld [vmem:[%s162 + $0x4] sm:$0xf]
    %v165 = vld [vmem:[%s162 + $0x8] sm:$0xf]
    %v166 = vld [vmem:[%s162 + $0xc] sm:$0xf]
    %v167 = vld [vmem:[%s162 + $0x10] sm:$0xf]
    %v168 = vld [vmem:[%s162 + $0x14] sm:$0xf]
    %v169 = vld [vmem:[%s162 + $0x18] sm:$0xf]
    %v170 = vld [vmem:[%s162 + $0x1c] sm:$0xf]
    %v179 = vunpack.c.l.b16 %v163
    %v180 = vunpack.c.l.b16 %v164
    %v181 = vunpack.c.l.b16 %v165
    %v182 = vunpack.c.l.b16 %v166
    %v183 = vunpack.c.l.b16 %v167
    %v184 = vunpack.c.l.b16 %v168
    %v185 = vunpack.c.l.b16 %v169
    %v186 = vunpack.c.l.b16 %v170
    %v187 = vpack.c.b16 %v180, %v179
    %v188 = vpack.c.b16 %v182, %v181
    %v189 = vpack.c.b16 %v184, %v183
    %v190 = vpack.c.b16 %v186, %v185
    %v196 = vsel %vm102, %v161, 0
    %198 = vmatpush.bf16.msra.mxu0 0
    %199 = vmatpush.bf16.msra.mxu0 0
    %200 = vmatpush.bf16.msra.mxu0 0
    %201 = vmatpush.bf16.msra.mxu0 0
    %202 = vmatpush.bf16.msra.mxu0 %v190
    %203 = vmatpush.bf16.msra.mxu0 %v189
    %204 = vmatpush.bf16.msra.mxu0 %v188
    %205 = vmatpush.bf16.msra.mxu0 %v187
    %206 = vmatmul.bf16.gmra.mxu0 %v196
    %v207 = vpop.f32.mrf.mxu0
    %v208 = vadd.f32 0.0, %v207
    %v209 = vpop.f32.mrf.mxu0
    %210 = vdwg.mxu0
    %v211 = vadd.f32 %v156, %v208
    %v212 = vld [vmem:[%s159 + $0x1] sm:$0xf]
    %v213 = vpack.c.bf16 %v212, %v212
    %s214 = scalar_lea.vmem %s2, 96
    %v215 = vld [vmem:[%s214] sm:$0xf]
    %v216 = vld [vmem:[%s214 + $0x4] sm:$0xf]
    %v217 = vld [vmem:[%s214 + $0x8] sm:$0xf]
    %v218 = vld [vmem:[%s214 + $0xc] sm:$0xf]
    %v219 = vld [vmem:[%s214 + $0x10] sm:$0xf]
    %v220 = vld [vmem:[%s214 + $0x14] sm:$0xf]
    %v221 = vld [vmem:[%s214 + $0x18] sm:$0xf]
    %v222 = vld [vmem:[%s214 + $0x1c] sm:$0xf]
    %v231 = vunpack.c.l.b16 %v215
    %v232 = vunpack.c.l.b16 %v216
    %v233 = vunpack.c.l.b16 %v217
    %v234 = vunpack.c.l.b16 %v218
    %v235 = vunpack.c.l.b16 %v219
    %v236 = vunpack.c.l.b16 %v220
    %v237 = vunpack.c.l.b16 %v221
    %v238 = vunpack.c.l.b16 %v222
    %v239 = vpack.c.b16 %v232, %v231
    %v240 = vpack.c.b16 %v234, %v233
    %v241 = vpack.c.b16 %v236, %v235
    %v242 = vpack.c.b16 %v238, %v237
    %v248 = vsel %vm102, %v213, 0
    %250 = vmatpush.bf16.msra.mxu0 0
    %251 = vmatpush.bf16.msra.mxu0 0
    %252 = vmatpush.bf16.msra.mxu0 0
    %253 = vmatpush.bf16.msra.mxu0 0
    %254 = vmatpush.bf16.msra.mxu0 %v242
    %255 = vmatpush.bf16.msra.mxu0 %v241
    %256 = vmatpush.bf16.msra.mxu0 %v240
    %257 = vmatpush.bf16.msra.mxu0 %v239
    %258 = vmatmul.bf16.gmra.mxu0 %v248
    %v259 = vpop.f32.mrf.mxu0
    %v260 = vadd.f32 0.0, %v259
    %v261 = vpop.f32.mrf.mxu0
    %262 = vdwg.mxu0
    %v263 = vadd.f32 %v211, %v260
    %v264 = vld [vmem:[%s3] sm:$0x1]
    %v266 = vperm.slane %v264, 0
    %v268 = vadd.f32 %v263, %v266
    %v269 = vmax.f32 %v268, 0.0
    %s270 = scalar_lea.vmem [#allocation2], 8
    %vm271 = vcmask 257024
    %272 = vst.msk [vmem:[%s270 + $0x1] sm:$0xf] %vm271, %v269
    %v273 = vld [vmem:[%s159] sm:$0xf]
    %v274 = vpack.c.bf16 %v273, %v273
    %v275 = vld [vmem:[%s2] sm:$0xf]
    %v276 = vld [vmem:[%s2 + $0x4] sm:$0xf]
    %v277 = vld [vmem:[%s2 + $0x8] sm:$0xf]
    %v278 = vld [vmem:[%s2 + $0xc] sm:$0xf]
    %v279 = vld [vmem:[%s2 + $0x10] sm:$0xf]
    %v280 = vld [vmem:[%s2 + $0x14] sm:$0xf]
    %v281 = vld [vmem:[%s2 + $0x18] sm:$0xf]
    %v282 = vld [vmem:[%s2 + $0x1c] sm:$0xf]
    %v283 = vld [vmem:[%s159 + $0x1] sm:$0xf]
    %v284 = vpack.c.bf16 %v283, %v283
    %v285 = vld [vmem:[%s69] sm:$0xf]
    %v286 = vld [vmem:[%s69 + $0x4] sm:$0xf]
    %v287 = vld [vmem:[%s69 + $0x8] sm:$0xf]
    %v288 = vld [vmem:[%s69 + $0xc] sm:$0xf]
    %v289 = vld [vmem:[%s69 + $0x10] sm:$0xf]
    %v290 = vld [vmem:[%s69 + $0x14] sm:$0xf]
    %v291 = vld [vmem:[%s69 + $0x18] sm:$0xf]
    %v292 = vld [vmem:[%s69 + $0x1c] sm:$0xf]
    %v301 = vunpack.c.l.b16 %v285
    %v302 = vunpack.c.l.b16 %v286
    %v303 = vunpack.c.l.b16 %v287
    %v304 = vunpack.c.l.b16 %v288
    %v305 = vunpack.c.l.b16 %v289
    %v306 = vunpack.c.l.b16 %v290
    %v307 = vunpack.c.l.b16 %v291
    %v308 = vunpack.c.l.b16 %v292
    %v309 = vpack.c.b16 %v302, %v301
    %v310 = vpack.c.b16 %v304, %v303
    %v311 = vpack.c.b16 %v306, %v305
    %v312 = vpack.c.b16 %v308, %v307
    %v318 = vsel %vm102, %v284, 0
    %320 = vmatpush.bf16.msra.mxu0 0
    %321 = vmatpush.bf16.msra.mxu0 0
    %322 = vmatpush.bf16.msra.mxu0 0
    %323 = vmatpush.bf16.msra.mxu0 0
    %324 = vmatpush.bf16.msra.mxu0 %v312
    %325 = vmatpush.bf16.msra.mxu0 %v311
    %326 = vmatpush.bf16.msra.mxu0 %v310
    %327 = vmatpush.bf16.msra.mxu0 %v309
    %328 = vmatmul.bf16.gmra.mxu0 %v318
    %v329 = vpop.f32.mrf.mxu0
    %v330 = vadd.f32 0.0, %v329
    %v331 = vpop.f32.mrf.mxu0
    %332 = vdwg.mxu0
    %v341 = vunpack.c.l.b16 %v275
    %v342 = vunpack.c.l.b16 %v276
    %v343 = vunpack.c.l.b16 %v277
    %v344 = vunpack.c.l.b16 %v278
    %v345 = vunpack.c.l.b16 %v279
    %v346 = vunpack.c.l.b16 %v280
    %v347 = vunpack.c.l.b16 %v281
    %v348 = vunpack.c.l.b16 %v282
    %v349 = vpack.c.b16 %v342, %v341
    %v350 = vpack.c.b16 %v344, %v343
    %v351 = vpack.c.b16 %v346, %v345
    %v352 = vpack.c.b16 %v348, %v347
    %v358 = vsel %vm102, %v274, 0
    %360 = vmatpush.bf16.msra.mxu0 0
    %361 = vmatpush.bf16.msra.mxu0 0
    %362 = vmatpush.bf16.msra.mxu0 0
    %363 = vmatpush.bf16.msra.mxu0 0
    %364 = vmatpush.bf16.msra.mxu0 %v352
    %365 = vmatpush.bf16.msra.mxu0 %v351
    %366 = vmatpush.bf16.msra.mxu0 %v350
    %367 = vmatpush.bf16.msra.mxu0 %v349
    %368 = vmatmul.bf16.gmra.mxu0 %v358
    %v369 = vpop.f32.mrf.mxu0
    %v370 = vadd.f32 %v330, %v369
    %v371 = vpop.f32.mrf.mxu0
    %372 = vdwg.mxu0
    %s373 = scalar_lea.vmem %s0, 16
    %v374 = vld [vmem:[%s373] sm:$0xf]
    %v375 = vpack.c.bf16 %v374, %v374
    %v376 = vld [vmem:[%s162] sm:$0xf]
    %v377 = vld [vmem:[%s162 + $0x4] sm:$0xf]
    %v378 = vld [vmem:[%s162 + $0x8] sm:$0xf]
    %v379 = vld [vmem:[%s162 + $0xc] sm:$0xf]
    %v380 = vld [vmem:[%s162 + $0x10] sm:$0xf]
    %v381 = vld [vmem:[%s162 + $0x14] sm:$0xf]
    %v382 = vld [vmem:[%s162 + $0x18] sm:$0xf]
    %v383 = vld [vmem:[%s162 + $0x1c] sm:$0xf]
    %v392 = vunpack.c.l.b16 %v376
    %v393 = vunpack.c.l.b16 %v377
    %v394 = vunpack.c.l.b16 %v378
    %v395 = vunpack.c.l.b16 %v379
    %v396 = vunpack.c.l.b16 %v380
    %v397 = vunpack.c.l.b16 %v381
    %v398 = vunpack.c.l.b16 %v382
    %v399 = vunpack.c.l.b16 %v383
    %v400 = vpack.c.b16 %v393, %v392
    %v401 = vpack.c.b16 %v395, %v394
    %v402 = vpack.c.b16 %v397, %v396
    %v403 = vpack.c.b16 %v399, %v398
    %v409 = vsel %vm102, %v375, 0
    %411 = vmatpush.bf16.msra.mxu0 0
    %412 = vmatpush.bf16.msra.mxu0 0
    %413 = vmatpush.bf16.msra.mxu0 0
    %414 = vmatpush.bf16.msra.mxu0 0
    %415 = vmatpush.bf16.msra.mxu0 %v403
    %416 = vmatpush.bf16.msra.mxu0 %v402
    %417 = vmatpush.bf16.msra.mxu0 %v401
    %418 = vmatpush.bf16.msra.mxu0 %v400
    %419 = vmatmul.bf16.gmra.mxu0 %v409
    %v420 = vpop.f32.mrf.mxu0
    %v421 = vadd.f32 0.0, %v420
    %v422 = vpop.f32.mrf.mxu0
    %423 = vdwg.mxu0
    %v424 = vadd.f32 %v370, %v421
    %v425 = vld [vmem:[%s373 + $0x1] sm:$0xf]
    %v426 = vpack.c.bf16 %v425, %v425
    %v427 = vld [vmem:[%s214] sm:$0xf]
    %v428 = vld [vmem:[%s214 + $0x4] sm:$0xf]
    %v429 = vld [vmem:[%s214 + $0x8] sm:$0xf]
    %v430 = vld [vmem:[%s214 + $0xc] sm:$0xf]
    %v431 = vld [vmem:[%s214 + $0x10] sm:$0xf]
    %v432 = vld [vmem:[%s214 + $0x14] sm:$0xf]
    %v433 = vld [vmem:[%s214 + $0x18] sm:$0xf]
    %v434 = vld [vmem:[%s214 + $0x1c] sm:$0xf]
    %v443 = vunpack.c.l.b16 %v427
    %v444 = vunpack.c.l.b16 %v428
    %v445 = vunpack.c.l.b16 %v429
    %v446 = vunpack.c.l.b16 %v430
    %v447 = vunpack.c.l.b16 %v431
    %v448 = vunpack.c.l.b16 %v432
    %v449 = vunpack.c.l.b16 %v433
    %v450 = vunpack.c.l.b16 %v434
    %v451 = vpack.c.b16 %v444, %v443
    %v452 = vpack.c.b16 %v446, %v445
    %v453 = vpack.c.b16 %v448, %v447
    %v454 = vpack.c.b16 %v450, %v449
    %v460 = vsel %vm102, %v426, 0
    %462 = vmatpush.bf16.msra.mxu0 0
    %463 = vmatpush.bf16.msra.mxu0 0
    %464 = vmatpush.bf16.msra.mxu0 0
    %465 = vmatpush.bf16.msra.mxu0 0
    %466 = vmatpush.bf16.msra.mxu0 %v454
    %467 = vmatpush.bf16.msra.mxu0 %v453
    %468 = vmatpush.bf16.msra.mxu0 %v452
    %469 = vmatpush.bf16.msra.mxu0 %v451
    %470 = vmatmul.bf16.gmra.mxu0 %v460
    %v471 = vpop.f32.mrf.mxu0
    %v472 = vadd.f32 0.0, %v471
    %v473 = vpop.f32.mrf.mxu0
    %474 = vdwg.mxu0
    %v475 = vadd.f32 %v424, %v472
    %v476 = vld [vmem:[%s3] sm:$0x1]
    %v478 = vperm.slane %v476, 0
    %v480 = vadd.f32 %v475, %v478
    %v481 = vmax.f32 %v480, 0.0
    %s482 = scalar_lea.vmem [#allocation2], 16
    %483 = vst.msk [vmem:[%s482 + $0x1] sm:$0xf] %vm271, %v481
    %v484 = vld [vmem:[%s373] sm:$0xf]
    %v485 = vpack.c.bf16 %v484, %v484
    %v486 = vld [vmem:[%s2] sm:$0xf]
    %v487 = vld [vmem:[%s2 + $0x4] sm:$0xf]
    %v488 = vld [vmem:[%s2 + $0x8] sm:$0xf]
    %v489 = vld [vmem:[%s2 + $0xc] sm:$0xf]
    %v490 = vld [vmem:[%s2 + $0x10] sm:$0xf]
    %v491 = vld [vmem:[%s2 + $0x14] sm:$0xf]
    %v492 = vld [vmem:[%s2 + $0x18] sm:$0xf]
    %v493 = vld [vmem:[%s2 + $0x1c] sm:$0xf]
    %v494 = vld [vmem:[%s373 + $0x1] sm:$0xf]
    %v495 = vpack.c.bf16 %v494, %v494
    %v496 = vld [vmem:[%s69] sm:$0xf]
    %v497 = vld [vmem:[%s69 + $0x4] sm:$0xf]
    %v498 = vld [vmem:[%s69 + $0x8] sm:$0xf]
    %v499 = vld [vmem:[%s69 + $0xc] sm:$0xf]
    %v500 = vld [vmem:[%s69 + $0x10] sm:$0xf]
    %v501 = vld [vmem:[%s69 + $0x14] sm:$0xf]
    %v502 = vld [vmem:[%s69 + $0x18] sm:$0xf]
    %v503 = vld [vmem:[%s69 + $0x1c] sm:$0xf]
    %v512 = vunpack.c.l.b16 %v496
    %v513 = vunpack.c.l.b16 %v497
    %v514 = vunpack.c.l.b16 %v498
    %v515 = vunpack.c.l.b16 %v499
    %v516 = vunpack.c.l.b16 %v500
    %v517 = vunpack.c.l.b16 %v501
    %v518 = vunpack.c.l.b16 %v502
    %v519 = vunpack.c.l.b16 %v503
    %v520 = vpack.c.b16 %v513, %v512
    %v521 = vpack.c.b16 %v515, %v514
    %v522 = vpack.c.b16 %v517, %v516
    %v523 = vpack.c.b16 %v519, %v518
    %v529 = vsel %vm102, %v495, 0
    %531 = vmatpush.bf16.msra.mxu0 0
    %532 = vmatpush.bf16.msra.mxu0 0
    %533 = vmatpush.bf16.msra.mxu0 0
    %534 = vmatpush.bf16.msra.mxu0 0
    %535 = vmatpush.bf16.msra.mxu0 %v523
    %536 = vmatpush.bf16.msra.mxu0 %v522
    %537 = vmatpush.bf16.msra.mxu0 %v521
    %538 = vmatpush.bf16.msra.mxu0 %v520
    %539 = vmatmul.bf16.gmra.mxu0 %v529
    %v540 = vpop.f32.mrf.mxu0
    %v541 = vadd.f32 0.0, %v540
    %v542 = vpop.f32.mrf.mxu0
    %543 = vdwg.mxu0
    %v552 = vunpack.c.l.b16 %v486
    %v553 = vunpack.c.l.b16 %v487
    %v554 = vunpack.c.l.b16 %v488
    %v555 = vunpack.c.l.b16 %v489
    %v556 = vunpack.c.l.b16 %v490
    %v557 = vunpack.c.l.b16 %v491
    %v558 = vunpack.c.l.b16 %v492
    %v559 = vunpack.c.l.b16 %v493
    %v560 = vpack.c.b16 %v553, %v552
    %v561 = vpack.c.b16 %v555, %v554
    %v562 = vpack.c.b16 %v557, %v556
    %v563 = vpack.c.b16 %v559, %v558
    %v569 = vsel %vm102, %v485, 0
    %571 = vmatpush.bf16.msra.mxu0 0
    %572 = vmatpush.bf16.msra.mxu0 0
    %573 = vmatpush.bf16.msra.mxu0 0
    %574 = vmatpush.bf16.msra.mxu0 0
    %575 = vmatpush.bf16.msra.mxu0 %v563
    %576 = vmatpush.bf16.msra.mxu0 %v562
    %577 = vmatpush.bf16.msra.mxu0 %v561
    %578 = vmatpush.bf16.msra.mxu0 %v560
    %579 = vmatmul.bf16.gmra.mxu0 %v569
    %v580 = vpop.f32.mrf.mxu0
    %v581 = vadd.f32 %v541, %v580
    %v582 = vpop.f32.mrf.mxu0
    %583 = vdwg.mxu0
    %s584 = scalar_lea.vmem %s0, 24
    %v585 = vld [vmem:[%s584] sm:$0xf]
    %v586 = vpack.c.bf16 %v585, %v585
    %v587 = vld [vmem:[%s162] sm:$0xf]
    %v588 = vld [vmem:[%s162 + $0x4] sm:$0xf]
    %v589 = vld [vmem:[%s162 + $0x8] sm:$0xf]
    %v590 = vld [vmem:[%s162 + $0xc] sm:$0xf]
    %v591 = vld [vmem:[%s162 + $0x10] sm:$0xf]
    %v592 = vld [vmem:[%s162 + $0x14] sm:$0xf]
    %v593 = vld [vmem:[%s162 + $0x18] sm:$0xf]
    %v594 = vld [vmem:[%s162 + $0x1c] sm:$0xf]
    %v603 = vunpack.c.l.b16 %v587
    %v604 = vunpack.c.l.b16 %v588
    %v605 = vunpack.c.l.b16 %v589
    %v606 = vunpack.c.l.b16 %v590
    %v607 = vunpack.c.l.b16 %v591
    %v608 = vunpack.c.l.b16 %v592
    %v609 = vunpack.c.l.b16 %v593
    %v610 = vunpack.c.l.b16 %v594
    %v611 = vpack.c.b16 %v604, %v603
    %v612 = vpack.c.b16 %v606, %v605
    %v613 = vpack.c.b16 %v608, %v607
    %v614 = vpack.c.b16 %v610, %v609
    %v620 = vsel %vm102, %v586, 0
    %622 = vmatpush.bf16.msra.mxu0 0
    %623 = vmatpush.bf16.msra.mxu0 0
    %624 = vmatpush.bf16.msra.mxu0 0
    %625 = vmatpush.bf16.msra.mxu0 0
    %626 = vmatpush.bf16.msra.mxu0 %v614
    %627 = vmatpush.bf16.msra.mxu0 %v613
    %628 = vmatpush.bf16.msra.mxu0 %v612
    %629 = vmatpush.bf16.msra.mxu0 %v611
    %630 = vmatmul.bf16.gmra.mxu0 %v620
    %v631 = vpop.f32.mrf.mxu0
    %v632 = vadd.f32 0.0, %v631
    %v633 = vpop.f32.mrf.mxu0
    %634 = vdwg.mxu0
    %v635 = vadd.f32 %v581, %v632
    %v636 = vld [vmem:[%s584 + $0x1] sm:$0xf]
    %v637 = vpack.c.bf16 %v636, %v636
    %v638 = vld [vmem:[%s214] sm:$0xf]
    %v639 = vld [vmem:[%s214 + $0x4] sm:$0xf]
    %v640 = vld [vmem:[%s214 + $0x8] sm:$0xf]
    %v641 = vld [vmem:[%s214 + $0xc] sm:$0xf]
    %v642 = vld [vmem:[%s214 + $0x10] sm:$0xf]
    %v643 = vld [vmem:[%s214 + $0x14] sm:$0xf]
    %v644 = vld [vmem:[%s214 + $0x18] sm:$0xf]
    %v645 = vld [vmem:[%s214 + $0x1c] sm:$0xf]
    %v654 = vunpack.c.l.b16 %v638
    %v655 = vunpack.c.l.b16 %v639
    %v656 = vunpack.c.l.b16 %v640
    %v657 = vunpack.c.l.b16 %v641
    %v658 = vunpack.c.l.b16 %v642
    %v659 = vunpack.c.l.b16 %v643
    %v660 = vunpack.c.l.b16 %v644
    %v661 = vunpack.c.l.b16 %v645
    %v662 = vpack.c.b16 %v655, %v654
    %v663 = vpack.c.b16 %v657, %v656
    %v664 = vpack.c.b16 %v659, %v658
    %v665 = vpack.c.b16 %v661, %v660
    %v671 = vsel %vm102, %v637, 0
    %673 = vmatpush.bf16.msra.mxu0 0
    %674 = vmatpush.bf16.msra.mxu0 0
    %675 = vmatpush.bf16.msra.mxu0 0
    %676 = vmatpush.bf16.msra.mxu0 0
    %677 = vmatpush.bf16.msra.mxu0 %v665
    %678 = vmatpush.bf16.msra.mxu0 %v664
    %679 = vmatpush.bf16.msra.mxu0 %v663
    %680 = vmatpush.bf16.msra.mxu0 %v662
    %681 = vmatmul.bf16.gmra.mxu0 %v671
    %v682 = vpop.f32.mrf.mxu0
    %v683 = vadd.f32 0.0, %v682
    %v684 = vpop.f32.mrf.mxu0
    %685 = vdwg.mxu0
    %v686 = vadd.f32 %v635, %v683
    %v687 = vld [vmem:[%s3] sm:$0x1]
    %v689 = vperm.slane %v687, 0
    %v691 = vadd.f32 %v686, %v689
    %v692 = vmax.f32 %v691, 0.0
    %s693 = scalar_lea.vmem [#allocation2], 24
    %694 = vst.msk [vmem:[%s693 + $0x1] sm:$0xf] %vm271, %v692
    %v695 = vld [vmem:[%s584] sm:$0xf]
    %v696 = vpack.c.bf16 %v695, %v695
    %v697 = vld [vmem:[%s2] sm:$0xf]
    %v698 = vld [vmem:[%s2 + $0x4] sm:$0xf]
    %v699 = vld [vmem:[%s2 + $0x8] sm:$0xf]
    %v700 = vld [vmem:[%s2 + $0xc] sm:$0xf]
    %v701 = vld [vmem:[%s2 + $0x10] sm:$0xf]
    %v702 = vld [vmem:[%s2 + $0x14] sm:$0xf]
    %v703 = vld [vmem:[%s2 + $0x18] sm:$0xf]
    %v704 = vld [vmem:[%s2 + $0x1c] sm:$0xf]
    %v705 = vld [vmem:[%s584 + $0x1] sm:$0xf]
    %v706 = vpack.c.bf16 %v705, %v705
    %v707 = vld [vmem:[%s69] sm:$0xf]
    %v708 = vld [vmem:[%s69 + $0x4] sm:$0xf]
    %v709 = vld [vmem:[%s69 + $0x8] sm:$0xf]
    %v710 = vld [vmem:[%s69 + $0xc] sm:$0xf]
    %v711 = vld [vmem:[%s69 + $0x10] sm:$0xf]
    %v712 = vld [vmem:[%s69 + $0x14] sm:$0xf]
    %v713 = vld [vmem:[%s69 + $0x18] sm:$0xf]
    %v714 = vld [vmem:[%s69 + $0x1c] sm:$0xf]
    %v723 = vunpack.c.l.b16 %v707
    %v724 = vunpack.c.l.b16 %v708
    %v725 = vunpack.c.l.b16 %v709
    %v726 = vunpack.c.l.b16 %v710
    %v727 = vunpack.c.l.b16 %v711
    %v728 = vunpack.c.l.b16 %v712
    %v729 = vunpack.c.l.b16 %v713
    %v730 = vunpack.c.l.b16 %v714
    %v731 = vpack.c.b16 %v724, %v723
    %v732 = vpack.c.b16 %v726, %v725
    %v733 = vpack.c.b16 %v728, %v727
    %v734 = vpack.c.b16 %v730, %v729
    %v740 = vsel %vm102, %v706, 0
    %742 = vmatpush.bf16.msra.mxu0 0
    %743 = vmatpush.bf16.msra.mxu0 0
    %744 = vmatpush.bf16.msra.mxu0 0
    %745 = vmatpush.bf16.msra.mxu0 0
    %746 = vmatpush.bf16.msra.mxu0 %v734
    %747 = vmatpush.bf16.msra.mxu0 %v733
    %748 = vmatpush.bf16.msra.mxu0 %v732
    %749 = vmatpush.bf16.msra.mxu0 %v731
    %750 = vmatmul.bf16.gmra.mxu0 %v740
    %v751 = vpop.f32.mrf.mxu0
    %v752 = vadd.f32 0.0, %v751
    %v753 = vpop.f32.mrf.mxu0
    %754 = vdwg.mxu0
    %v763 = vunpack.c.l.b16 %v697
    %v764 = vunpack.c.l.b16 %v698
    %v765 = vunpack.c.l.b16 %v699
    %v766 = vunpack.c.l.b16 %v700
    %v767 = vunpack.c.l.b16 %v701
    %v768 = vunpack.c.l.b16 %v702
    %v769 = vunpack.c.l.b16 %v703
    %v770 = vunpack.c.l.b16 %v704
    %v771 = vpack.c.b16 %v764, %v763
    %v772 = vpack.c.b16 %v766, %v765
    %v773 = vpack.c.b16 %v768, %v767
    %v774 = vpack.c.b16 %v770, %v769
    %v780 = vsel %vm102, %v696, 0
    %782 = vmatpush.bf16.msra.mxu0 0
    %783 = vmatpush.bf16.msra.mxu0 0
    %784 = vmatpush.bf16.msra.mxu0 0
    %785 = vmatpush.bf16.msra.mxu0 0
    %786 = vmatpush.bf16.msra.mxu0 %v774
    %787 = vmatpush.bf16.msra.mxu0 %v773
    %788 = vmatpush.bf16.msra.mxu0 %v772
    %789 = vmatpush.bf16.msra.mxu0 %v771
    %790 = vmatmul.bf16.gmra.mxu0 %v780
    %v791 = vpop.f32.mrf.mxu0
    %v792 = vadd.f32 %v752, %v791
    %v793 = vpop.f32.mrf.mxu0
    %794 = vdwg.mxu0
    %s795 = scalar_lea.vmem %s0, 32
    %v796 = vld [vmem:[%s795] sm:$0xf]
    %v797 = vpack.c.bf16 %v796, %v796
    %v798 = vld [vmem:[%s162] sm:$0xf]
    %v799 = vld [vmem:[%s162 + $0x4] sm:$0xf]
    %v800 = vld [vmem:[%s162 + $0x8] sm:$0xf]
    %v801 = vld [vmem:[%s162 + $0xc] sm:$0xf]
    %v802 = vld [vmem:[%s162 + $0x10] sm:$0xf]
    %v803 = vld [vmem:[%s162 + $0x14] sm:$0xf]
    %v804 = vld [vmem:[%s162 + $0x18] sm:$0xf]
    %v805 = vld [vmem:[%s162 + $0x1c] sm:$0xf]
    %v814 = vunpack.c.l.b16 %v798
    %v815 = vunpack.c.l.b16 %v799
    %v816 = vunpack.c.l.b16 %v800
    %v817 = vunpack.c.l.b16 %v801
    %v818 = vunpack.c.l.b16 %v802
    %v819 = vunpack.c.l.b16 %v803
    %v820 = vunpack.c.l.b16 %v804
    %v821 = vunpack.c.l.b16 %v805
    %v822 = vpack.c.b16 %v815, %v814
    %v823 = vpack.c.b16 %v817, %v816
    %v824 = vpack.c.b16 %v819, %v818
    %v825 = vpack.c.b16 %v821, %v820
    %v831 = vsel %vm102, %v797, 0
    %833 = vmatpush.bf16.msra.mxu0 0
    %834 = vmatpush.bf16.msra.mxu0 0
    %835 = vmatpush.bf16.msra.mxu0 0
    %836 = vmatpush.bf16.msra.mxu0 0
    %837 = vmatpush.bf16.msra.mxu0 %v825
    %838 = vmatpush.bf16.msra.mxu0 %v824
    %839 = vmatpush.bf16.msra.mxu0 %v823
    %840 = vmatpush.bf16.msra.mxu0 %v822
    %841 = vmatmul.bf16.gmra.mxu0 %v831
    %v842 = vpop.f32.mrf.mxu0
    %v843 = vadd.f32 0.0, %v842
    %v844 = vpop.f32.mrf.mxu0
    %845 = vdwg.mxu0
    %v846 = vadd.f32 %v792, %v843
    %v847 = vld [vmem:[%s795 + $0x1] sm:$0xf]
    %v848 = vpack.c.bf16 %v847, %v847
    %v849 = vld [vmem:[%s214] sm:$0xf]
    %v850 = vld [vmem:[%s214 + $0x4] sm:$0xf]
    %v851 = vld [vmem:[%s214 + $0x8] sm:$0xf]
    %v852 = vld [vmem:[%s214 + $0xc] sm:$0xf]
    %v853 = vld [vmem:[%s214 + $0x10] sm:$0xf]
    %v854 = vld [vmem:[%s214 + $0x14] sm:$0xf]
    %v855 = vld [vmem:[%s214 + $0x18] sm:$0xf]
    %v856 = vld [vmem:[%s214 + $0x1c] sm:$0xf]
    %v865 = vunpack.c.l.b16 %v849
    %v866 = vunpack.c.l.b16 %v850
    %v867 = vunpack.c.l.b16 %v851
    %v868 = vunpack.c.l.b16 %v852
    %v869 = vunpack.c.l.b16 %v853
    %v870 = vunpack.c.l.b16 %v854
    %v871 = vunpack.c.l.b16 %v855
    %v872 = vunpack.c.l.b16 %v856
    %v873 = vpack.c.b16 %v866, %v865
    %v874 = vpack.c.b16 %v868, %v867
    %v875 = vpack.c.b16 %v870, %v869
    %v876 = vpack.c.b16 %v872, %v871
    %v882 = vsel %vm102, %v848, 0
    %884 = vmatpush.bf16.msra.mxu0 0
    %885 = vmatpush.bf16.msra.mxu0 0
    %886 = vmatpush.bf16.msra.mxu0 0
    %887 = vmatpush.bf16.msra.mxu0 0
    %888 = vmatpush.bf16.msra.mxu0 %v876
    %889 = vmatpush.bf16.msra.mxu0 %v875
    %890 = vmatpush.bf16.msra.mxu0 %v874
    %891 = vmatpush.bf16.msra.mxu0 %v873
    %892 = vmatmul.bf16.gmra.mxu0 %v882
    %v893 = vpop.f32.mrf.mxu0
    %v894 = vadd.f32 0.0, %v893
    %v895 = vpop.f32.mrf.mxu0
    %896 = vdwg.mxu0
    %v897 = vadd.f32 %v846, %v894
    %v898 = vld [vmem:[%s3] sm:$0x1]
    %v900 = vperm.slane %v898, 0
    %v902 = vadd.f32 %v897, %v900
    %v903 = vmax.f32 %v902, 0.0
    %s904 = scalar_lea.vmem [#allocation2], 32
    %905 = vst.msk [vmem:[%s904 + $0x1] sm:$0xf] %vm271, %v903
    %s906 = scalar_lea.vmem %s0, 40
    %v907 = vld [vmem:[%s906] sm:$0xf]
    %v908 = vpack.c.bf16 %v907, %v907
    %v909 = vld [vmem:[%s2] sm:$0xf]
    %v910 = vld [vmem:[%s2 + $0x4] sm:$0xf]
    %v911 = vld [vmem:[%s2 + $0x8] sm:$0xf]
    %v912 = vld [vmem:[%s2 + $0xc] sm:$0xf]
    %v913 = vld [vmem:[%s2 + $0x10] sm:$0xf]
    %v914 = vld [vmem:[%s2 + $0x14] sm:$0xf]
    %v915 = vld [vmem:[%s2 + $0x18] sm:$0xf]
    %v916 = vld [vmem:[%s2 + $0x1c] sm:$0xf]
    %v917 = vld [vmem:[%s906 + $0x1] sm:$0xf]
    %v918 = vpack.c.bf16 %v917, %v917
    %v919 = vld [vmem:[%s69] sm:$0xf]
    %v920 = vld [vmem:[%s69 + $0x4] sm:$0xf]
    %v921 = vld [vmem:[%s69 + $0x8] sm:$0xf]
    %v922 = vld [vmem:[%s69 + $0xc] sm:$0xf]
    %v923 = vld [vmem:[%s69 + $0x10] sm:$0xf]
    %v924 = vld [vmem:[%s69 + $0x14] sm:$0xf]
    %v925 = vld [vmem:[%s69 + $0x18] sm:$0xf]
    %v926 = vld [vmem:[%s69 + $0x1c] sm:$0xf]
    %v935 = vunpack.c.l.b16 %v919
    %v936 = vunpack.c.l.b16 %v920
    %v937 = vunpack.c.l.b16 %v921
    %v938 = vunpack.c.l.b16 %v922
    %v939 = vunpack.c.l.b16 %v923
    %v940 = vunpack.c.l.b16 %v924
    %v941 = vunpack.c.l.b16 %v925
    %v942 = vunpack.c.l.b16 %v926
    %v943 = vpack.c.b16 %v936, %v935
    %v944 = vpack.c.b16 %v938, %v937
    %v945 = vpack.c.b16 %v940, %v939
    %v946 = vpack.c.b16 %v942, %v941
    %v952 = vsel %vm102, %v918, 0
    %954 = vmatpush.bf16.msra.mxu0 0
    %955 = vmatpush.bf16.msra.mxu0 0
    %956 = vmatpush.bf16.msra.mxu0 0
    %957 = vmatpush.bf16.msra.mxu0 0
    %958 = vmatpush.bf16.msra.mxu0 %v946
    %959 = vmatpush.bf16.msra.mxu0 %v945
    %960 = vmatpush.bf16.msra.mxu0 %v944
    %961 = vmatpush.bf16.msra.mxu0 %v943
    %962 = vmatmul.bf16.gmra.mxu0 %v952
    %v963 = vpop.f32.mrf.mxu0
    %v964 = vadd.f32 0.0, %v963
    %v965 = vpop.f32.mrf.mxu0
    %966 = vdwg.mxu0
    %v975 = vunpack.c.l.b16 %v909
    %v976 = vunpack.c.l.b16 %v910
    %v977 = vunpack.c.l.b16 %v911
    %v978 = vunpack.c.l.b16 %v912
    %v979 = vunpack.c.l.b16 %v913
    %v980 = vunpack.c.l.b16 %v914
    %v981 = vunpack.c.l.b16 %v915
    %v982 = vunpack.c.l.b16 %v916
    %v983 = vpack.c.b16 %v976, %v975
    %v984 = vpack.c.b16 %v978, %v977
    %v985 = vpack.c.b16 %v980, %v979
    %v986 = vpack.c.b16 %v982, %v981
    %v992 = vsel %vm102, %v908, 0
    %994 = vmatpush.bf16.msra.mxu0 0
    %995 = vmatpush.bf16.msra.mxu0 0
    %996 = vmatpush.bf16.msra.mxu0 0
    %997 = vmatpush.bf16.msra.mxu0 0
    %998 = vmatpush.bf16.msra.mxu0 %v986
    %999 = vmatpush.bf16.msra.mxu0 %v985
    %1000 = vmatpush.bf16.msra.mxu0 %v984
    %1001 = vmatpush.bf16.msra.mxu0 %v983
    %1002 = vmatmul.bf16.gmra.mxu0 %v992
    %v1003 = vpop.f32.mrf.mxu0
    %v1004 = vadd.f32 %v964, %v1003
    %v1005 = vpop.f32.mrf.mxu0
    %1006 = vdwg.mxu0
    %s1007 = scalar_lea.vmem %s0, 48
    %v1008 = vld [vmem:[%s1007] sm:$0xf]
    %v1009 = vpack.c.bf16 %v1008, %v1008
    %v1010 = vld [vmem:[%s162] sm:$0xf]
    %v1011 = vld [vmem:[%s162 + $0x4] sm:$0xf]
    %v1012 = vld [vmem:[%s162 + $0x8] sm:$0xf]
    %v1013 = vld [vmem:[%s162 + $0xc] sm:$0xf]
    %v1014 = vld [vmem:[%s162 + $0x10] sm:$0xf]
    %v1015 = vld [vmem:[%s162 + $0x14] sm:$0xf]
    %v1016 = vld [vmem:[%s162 + $0x18] sm:$0xf]
    %v1017 = vld [vmem:[%s162 + $0x1c] sm:$0xf]
    %v1026 = vunpack.c.l.b16 %v1010
    %v1027 = vunpack.c.l.b16 %v1011
    %v1028 = vunpack.c.l.b16 %v1012
    %v1029 = vunpack.c.l.b16 %v1013
    %v1030 = vunpack.c.l.b16 %v1014
    %v1031 = vunpack.c.l.b16 %v1015
    %v1032 = vunpack.c.l.b16 %v1016
    %v1033 = vunpack.c.l.b16 %v1017
    %v1034 = vpack.c.b16 %v1027, %v1026
    %v1035 = vpack.c.b16 %v1029, %v1028
    %v1036 = vpack.c.b16 %v1031, %v1030
    %v1037 = vpack.c.b16 %v1033, %v1032
    %v1043 = vsel %vm102, %v1009, 0
    %1045 = vmatpush.bf16.msra.mxu0 0
    %1046 = vmatpush.bf16.msra.mxu0 0
    %1047 = vmatpush.bf16.msra.mxu0 0
    %1048 = vmatpush.bf16.msra.mxu0 0
    %1049 = vmatpush.bf16.msra.mxu0 %v1037
    %1050 = vmatpush.bf16.msra.mxu0 %v1036
    %1051 = vmatpush.bf16.msra.mxu0 %v1035
    %1052 = vmatpush.bf16.msra.mxu0 %v1034
    %1053 = vmatmul.bf16.gmra.mxu0 %v1043
    %v1054 = vpop.f32.mrf.mxu0
    %v1055 = vadd.f32 0.0, %v1054
    %v1056 = vpop.f32.mrf.mxu0
    %1057 = vdwg.mxu0
    %v1058 = vadd.f32 %v1004, %v1055
    %v1059 = vld [vmem:[%s1007 + $0x1] sm:$0xf]
    %v1060 = vpack.c.bf16 %v1059, %v1059
    %v1061 = vld [vmem:[%s214] sm:$0xf]
    %v1062 = vld [vmem:[%s214 + $0x4] sm:$0xf]
    %v1063 = vld [vmem:[%s214 + $0x8] sm:$0xf]
    %v1064 = vld [vmem:[%s214 + $0xc] sm:$0xf]
    %v1065 = vld [vmem:[%s214 + $0x10] sm:$0xf]
    %v1066 = vld [vmem:[%s214 + $0x14] sm:$0xf]
    %v1067 = vld [vmem:[%s214 + $0x18] sm:$0xf]
    %v1068 = vld [vmem:[%s214 + $0x1c] sm:$0xf]
    %v1077 = vunpack.c.l.b16 %v1061
    %v1078 = vunpack.c.l.b16 %v1062
    %v1079 = vunpack.c.l.b16 %v1063
    %v1080 = vunpack.c.l.b16 %v1064
    %v1081 = vunpack.c.l.b16 %v1065
    %v1082 = vunpack.c.l.b16 %v1066
    %v1083 = vunpack.c.l.b16 %v1067
    %v1084 = vunpack.c.l.b16 %v1068
    %v1085 = vpack.c.b16 %v1078, %v1077
    %v1086 = vpack.c.b16 %v1080, %v1079
    %v1087 = vpack.c.b16 %v1082, %v1081
    %v1088 = vpack.c.b16 %v1084, %v1083
    %v1094 = vsel %vm102, %v1060, 0
    %1096 = vmatpush.bf16.msra.mxu0 0
    %1097 = vmatpush.bf16.msra.mxu0 0
    %1098 = vmatpush.bf16.msra.mxu0 0
    %1099 = vmatpush.bf16.msra.mxu0 0
    %1100 = vmatpush.bf16.msra.mxu0 %v1088
    %1101 = vmatpush.bf16.msra.mxu0 %v1087
    %1102 = vmatpush.bf16.msra.mxu0 %v1086
    %1103 = vmatpush.bf16.msra.mxu0 %v1085
    %1104 = vmatmul.bf16.gmra.mxu0 %v1094
    %v1105 = vpop.f32.mrf.mxu0
    %v1106 = vadd.f32 0.0, %v1105
    %v1107 = vpop.f32.mrf.mxu0
    %1108 = vdwg.mxu0
    %v1109 = vadd.f32 %v1058, %v1106
    %v1110 = vld [vmem:[%s3] sm:$0x1]
    %v1112 = vperm.slane %v1110, 0
    %v1114 = vadd.f32 %v1109, %v1112
    %v1115 = vmax.f32 %v1114, 0.0
    %s1116 = scalar_lea.vmem [#allocation2], 48
    %1117 = vst.msk [vmem:[%s1116 + $0x1] sm:$0xf] %vm271, %v1115
    %v1118 = vld [vmem:[%s1007] sm:$0xf]
    %v1119 = vpack.c.bf16 %v1118, %v1118
    %v1120 = vld [vmem:[%s2] sm:$0xf]
    %v1121 = vld [vmem:[%s2 + $0x4] sm:$0xf]
    %v1122 = vld [vmem:[%s2 + $0x8] sm:$0xf]
    %v1123 = vld [vmem:[%s2 + $0xc] sm:$0xf]
    %v1124 = vld [vmem:[%s2 + $0x10] sm:$0xf]
    %v1125 = vld [vmem:[%s2 + $0x14] sm:$0xf]
    %v1126 = vld [vmem:[%s2 + $0x18] sm:$0xf]
    %v1127 = vld [vmem:[%s2 + $0x1c] sm:$0xf]
    %v1128 = vld [vmem:[%s1007 + $0x1] sm:$0xf]
    %v1129 = vpack.c.bf16 %v1128, %v1128
    %v1130 = vld [vmem:[%s69] sm:$0xf]
    %v1131 = vld [vmem:[%s69 + $0x4] sm:$0xf]
    %v1132 = vld [vmem:[%s69 + $0x8] sm:$0xf]
    %v1133 = vld [vmem:[%s69 + $0xc] sm:$0xf]
    %v1134 = vld [vmem:[%s69 + $0x10] sm:$0xf]
    %v1135 = vld [vmem:[%s69 + $0x14] sm:$0xf]
    %v1136 = vld [vmem:[%s69 + $0x18] sm:$0xf]
    %v1137 = vld [vmem:[%s69 + $0x1c] sm:$0xf]
    %v1146 = vunpack.c.l.b16 %v1130
    %v1147 = vunpack.c.l.b16 %v1131
    %v1148 = vunpack.c.l.b16 %v1132
    %v1149 = vunpack.c.l.b16 %v1133
    %v1150 = vunpack.c.l.b16 %v1134
    %v1151 = vunpack.c.l.b16 %v1135
    %v1152 = vunpack.c.l.b16 %v1136
    %v1153 = vunpack.c.l.b16 %v1137
    %v1154 = vpack.c.b16 %v1147, %v1146
    %v1155 = vpack.c.b16 %v1149, %v1148
    %v1156 = vpack.c.b16 %v1151, %v1150
    %v1157 = vpack.c.b16 %v1153, %v1152
    %v1163 = vsel %vm102, %v1129, 0
    %1165 = vmatpush.bf16.msra.mxu0 0
    %1166 = vmatpush.bf16.msra.mxu0 0
    %1167 = vmatpush.bf16.msra.mxu0 0
    %1168 = vmatpush.bf16.msra.mxu0 0
    %1169 = vmatpush.bf16.msra.mxu0 %v1157
    %1170 = vmatpush.bf16.msra.mxu0 %v1156
    %1171 = vmatpush.bf16.msra.mxu0 %v1155
    %1172 = vmatpush.bf16.msra.mxu0 %v1154
    %1173 = vmatmul.bf16.gmra.mxu0 %v1163
    %v1174 = vpop.f32.mrf.mxu0
    %v1175 = vadd.f32 0.0, %v1174
    %v1176 = vpop.f32.mrf.mxu0
    %1177 = vdwg.mxu0
    %v1186 = vunpack.c.l.b16 %v1120
    %v1187 = vunpack.c.l.b16 %v1121
    %v1188 = vunpack.c.l.b16 %v1122
    %v1189 = vunpack.c.l.b16 %v1123
    %v1190 = vunpack.c.l.b16 %v1124
    %v1191 = vunpack.c.l.b16 %v1125
    %v1192 = vunpack.c.l.b16 %v1126
    %v1193 = vunpack.c.l.b16 %v1127
    %v1194 = vpack.c.b16 %v1187, %v1186
    %v1195 = vpack.c.b16 %v1189, %v1188
    %v1196 = vpack.c.b16 %v1191, %v1190
    %v1197 = vpack.c.b16 %v1193, %v1192
    %v1203 = vsel %vm102, %v1119, 0
    %1205 = vmatpush.bf16.msra.mxu0 0
    %1206 = vmatpush.bf16.msra.mxu0 0
    %1207 = vmatpush.bf16.msra.mxu0 0
    %1208 = vmatpush.bf16.msra.mxu0 0
    %1209 = vmatpush.bf16.msra.mxu0 %v1197
    %1210 = vmatpush.bf16.msra.mxu0 %v1196
    %1211 = vmatpush.bf16.msra.mxu0 %v1195
    %1212 = vmatpush.bf16.msra.mxu0 %v1194
    %1213 = vmatmul.bf16.gmra.mxu0 %v1203
    %v1214 = vpop.f32.mrf.mxu0
    %v1215 = vadd.f32 %v1175, %v1214
    %v1216 = vpop.f32.mrf.mxu0
    %1217 = vdwg.mxu0
    %s1218 = scalar_lea.vmem %s0, 56
    %v1219 = vld [vmem:[%s1218] sm:$0xf]
    %v1220 = vpack.c.bf16 %v1219, %v1219
    %v1221 = vld [vmem:[%s162] sm:$0xf]
    %v1222 = vld [vmem:[%s162 + $0x4] sm:$0xf]
    %v1223 = vld [vmem:[%s162 + $0x8] sm:$0xf]
    %v1224 = vld [vmem:[%s162 + $0xc] sm:$0xf]
    %v1225 = vld [vmem:[%s162 + $0x10] sm:$0xf]
    %v1226 = vld [vmem:[%s162 + $0x14] sm:$0xf]
    %v1227 = vld [vmem:[%s162 + $0x18] sm:$0xf]
    %v1228 = vld [vmem:[%s162 + $0x1c] sm:$0xf]
    %v1237 = vunpack.c.l.b16 %v1221
    %v1238 = vunpack.c.l.b16 %v1222
    %v1239 = vunpack.c.l.b16 %v1223
    %v1240 = vunpack.c.l.b16 %v1224
    %v1241 = vunpack.c.l.b16 %v1225
    %v1242 = vunpack.c.l.b16 %v1226
    %v1243 = vunpack.c.l.b16 %v1227
    %v1244 = vunpack.c.l.b16 %v1228
    %v1245 = vpack.c.b16 %v1238, %v1237
    %v1246 = vpack.c.b16 %v1240, %v1239
    %v1247 = vpack.c.b16 %v1242, %v1241
    %v1248 = vpack.c.b16 %v1244, %v1243
    %v1254 = vsel %vm102, %v1220, 0
    %1256 = vmatpush.bf16.msra.mxu0 0
    %1257 = vmatpush.bf16.msra.mxu0 0
    %1258 = vmatpush.bf16.msra.mxu0 0
    %1259 = vmatpush.bf16.msra.mxu0 0
    %1260 = vmatpush.bf16.msra.mxu0 %v1248
    %1261 = vmatpush.bf16.msra.mxu0 %v1247
    %1262 = vmatpush.bf16.msra.mxu0 %v1246
    %1263 = vmatpush.bf16.msra.mxu0 %v1245
    %1264 = vmatmul.bf16.gmra.mxu0 %v1254
    %v1265 = vpop.f32.mrf.mxu0
    %v1266 = vadd.f32 0.0, %v1265
    %v1267 = vpop.f32.mrf.mxu0
    %1268 = vdwg.mxu0
    %v1269 = vadd.f32 %v1215, %v1266
    %v1270 = vld [vmem:[%s1218 + $0x1] sm:$0xf]
    %v1271 = vpack.c.bf16 %v1270, %v1270
    %v1272 = vld [vmem:[%s214] sm:$0xf]
    %v1273 = vld [vmem:[%s214 + $0x4] sm:$0xf]
    %v1274 = vld [vmem:[%s214 + $0x8] sm:$0xf]
    %v1275 = vld [vmem:[%s214 + $0xc] sm:$0xf]
    %v1276 = vld [vmem:[%s214 + $0x10] sm:$0xf]
    %v1277 = vld [vmem:[%s214 + $0x14] sm:$0xf]
    %v1278 = vld [vmem:[%s214 + $0x18] sm:$0xf]
    %v1279 = vld [vmem:[%s214 + $0x1c] sm:$0xf]
    %v1288 = vunpack.c.l.b16 %v1272
    %v1289 = vunpack.c.l.b16 %v1273
    %v1290 = vunpack.c.l.b16 %v1274
    %v1291 = vunpack.c.l.b16 %v1275
    %v1292 = vunpack.c.l.b16 %v1276
    %v1293 = vunpack.c.l.b16 %v1277
    %v1294 = vunpack.c.l.b16 %v1278
    %v1295 = vunpack.c.l.b16 %v1279
    %v1296 = vpack.c.b16 %v1289, %v1288
    %v1297 = vpack.c.b16 %v1291, %v1290
    %v1298 = vpack.c.b16 %v1293, %v1292
    %v1299 = vpack.c.b16 %v1295, %v1294
    %v1305 = vsel %vm102, %v1271, 0
    %1307 = vmatpush.bf16.msra.mxu0 0
    %1308 = vmatpush.bf16.msra.mxu0 0
    %1309 = vmatpush.bf16.msra.mxu0 0
    %1310 = vmatpush.bf16.msra.mxu0 0
    %1311 = vmatpush.bf16.msra.mxu0 %v1299
    %1312 = vmatpush.bf16.msra.mxu0 %v1298
    %1313 = vmatpush.bf16.msra.mxu0 %v1297
    %1314 = vmatpush.bf16.msra.mxu0 %v1296
    %1315 = vmatmul.bf16.gmra.mxu0 %v1305
    %v1316 = vpop.f32.mrf.mxu0
    %v1317 = vadd.f32 0.0, %v1316
    %v1318 = vpop.f32.mrf.mxu0
    %1319 = vdwg.mxu0
    %v1320 = vadd.f32 %v1269, %v1317
    %v1321 = vld [vmem:[%s3] sm:$0x1]
    %v1323 = vperm.slane %v1321, 0
    %v1325 = vadd.f32 %v1320, %v1323
    %v1326 = vmax.f32 %v1325, 0.0
    %s1327 = scalar_lea.vmem [#allocation2], 56
    %1328 = vst.msk [vmem:[%s1327 + $0x1] sm:$0xf] %vm271, %v1326
    %v1329 = vld [vmem:[%s1218] sm:$0xf]
    %v1330 = vpack.c.bf16 %v1329, %v1329
    %v1331 = vld [vmem:[%s2] sm:$0xf]
    %v1332 = vld [vmem:[%s2 + $0x4] sm:$0xf]
    %v1333 = vld [vmem:[%s2 + $0x8] sm:$0xf]
    %v1334 = vld [vmem:[%s2 + $0xc] sm:$0xf]
    %v1335 = vld [vmem:[%s2 + $0x10] sm:$0xf]
    %v1336 = vld [vmem:[%s2 + $0x14] sm:$0xf]
    %v1337 = vld [vmem:[%s2 + $0x18] sm:$0xf]
    %v1338 = vld [vmem:[%s2 + $0x1c] sm:$0xf]
    %v1339 = vld [vmem:[%s1218 + $0x1] sm:$0xf]
    %v1340 = vpack.c.bf16 %v1339, %v1339
    %v1341 = vld [vmem:[%s69] sm:$0xf]
    %v1342 = vld [vmem:[%s69 + $0x4] sm:$0xf]
    %v1343 = vld [vmem:[%s69 + $0x8] sm:$0xf]
    %v1344 = vld [vmem:[%s69 + $0xc] sm:$0xf]
    %v1345 = vld [vmem:[%s69 + $0x10] sm:$0xf]
    %v1346 = vld [vmem:[%s69 + $0x14] sm:$0xf]
    %v1347 = vld [vmem:[%s69 + $0x18] sm:$0xf]
    %v1348 = vld [vmem:[%s69 + $0x1c] sm:$0xf]
    %v1357 = vunpack.c.l.b16 %v1341
    %v1358 = vunpack.c.l.b16 %v1342
    %v1359 = vunpack.c.l.b16 %v1343
    %v1360 = vunpack.c.l.b16 %v1344
    %v1361 = vunpack.c.l.b16 %v1345
    %v1362 = vunpack.c.l.b16 %v1346
    %v1363 = vunpack.c.l.b16 %v1347
    %v1364 = vunpack.c.l.b16 %v1348
    %v1365 = vpack.c.b16 %v1358, %v1357
    %v1366 = vpack.c.b16 %v1360, %v1359
    %v1367 = vpack.c.b16 %v1362, %v1361
    %v1368 = vpack.c.b16 %v1364, %v1363
    %v1374 = vsel %vm102, %v1340, 0
    %1376 = vmatpush.bf16.msra.mxu0 0
    %1377 = vmatpush.bf16.msra.mxu0 0
    %1378 = vmatpush.bf16.msra.mxu0 0
    %1379 = vmatpush.bf16.msra.mxu0 0
    %1380 = vmatpush.bf16.msra.mxu0 %v1368
    %1381 = vmatpush.bf16.msra.mxu0 %v1367
    %1382 = vmatpush.bf16.msra.mxu0 %v1366
    %1383 = vmatpush.bf16.msra.mxu0 %v1365
    %1384 = vmatmul.bf16.gmra.mxu0 %v1374
    %v1385 = vpop.f32.mrf.mxu0
    %v1386 = vadd.f32 0.0, %v1385
    %v1387 = vpop.f32.mrf.mxu0
    %1388 = vdwg.mxu0
    %v1397 = vunpack.c.l.b16 %v1331
    %v1398 = vunpack.c.l.b16 %v1332
    %v1399 = vunpack.c.l.b16 %v1333
    %v1400 = vunpack.c.l.b16 %v1334
    %v1401 = vunpack.c.l.b16 %v1335
    %v1402 = vunpack.c.l.b16 %v1336
    %v1403 = vunpack.c.l.b16 %v1337
    %v1404 = vunpack.c.l.b16 %v1338
    %v1405 = vpack.c.b16 %v1398, %v1397
    %v1406 = vpack.c.b16 %v1400, %v1399
    %v1407 = vpack.c.b16 %v1402, %v1401
    %v1408 = vpack.c.b16 %v1404, %v1403
    %v1414 = vsel %vm102, %v1330, 0
    %1416 = vmatpush.bf16.msra.mxu0 0
    %1417 = vmatpush.bf16.msra.mxu0 0
    %1418 = vmatpush.bf16.msra.mxu0 0
    %1419 = vmatpush.bf16.msra.mxu0 0
    %1420 = vmatpush.bf16.msra.mxu0 %v1408
    %1421 = vmatpush.bf16.msra.mxu0 %v1407
    %1422 = vmatpush.bf16.msra.mxu0 %v1406
    %1423 = vmatpush.bf16.msra.mxu0 %v1405
    %1424 = vmatmul.bf16.gmra.mxu0 %v1414
    %v1425 = vpop.f32.mrf.mxu0
    %v1426 = vadd.f32 %v1386, %v1425
    %v1427 = vpop.f32.mrf.mxu0
    %1428 = vdwg.mxu0
    %s1429 = scalar_lea.vmem %s0, 64
    %v1430 = vld [vmem:[%s1429] sm:$0xf]
    %v1431 = vpack.c.bf16 %v1430, %v1430
    %v1432 = vld [vmem:[%s162] sm:$0xf]
    %v1433 = vld [vmem:[%s162 + $0x4] sm:$0xf]
    %v1434 = vld [vmem:[%s162 + $0x8] sm:$0xf]
    %v1435 = vld [vmem:[%s162 + $0xc] sm:$0xf]
    %v1436 = vld [vmem:[%s162 + $0x10] sm:$0xf]
    %v1437 = vld [vmem:[%s162 + $0x14] sm:$0xf]
    %v1438 = vld [vmem:[%s162 + $0x18] sm:$0xf]
    %v1439 = vld [vmem:[%s162 + $0x1c] sm:$0xf]
    %v1448 = vunpack.c.l.b16 %v1432
    %v1449 = vunpack.c.l.b16 %v1433
    %v1450 = vunpack.c.l.b16 %v1434
    %v1451 = vunpack.c.l.b16 %v1435
    %v1452 = vunpack.c.l.b16 %v1436
    %v1453 = vunpack.c.l.b16 %v1437
    %v1454 = vunpack.c.l.b16 %v1438
    %v1455 = vunpack.c.l.b16 %v1439
    %v1456 = vpack.c.b16 %v1449, %v1448
    %v1457 = vpack.c.b16 %v1451, %v1450
    %v1458 = vpack.c.b16 %v1453, %v1452
    %v1459 = vpack.c.b16 %v1455, %v1454
    %v1465 = vsel %vm102, %v1431, 0
    %1467 = vmatpush.bf16.msra.mxu0 0
    %1468 = vmatpush.bf16.msra.mxu0 0
    %1469 = vmatpush.bf16.msra.mxu0 0
    %1470 = vmatpush.bf16.msra.mxu0 0
    %1471 = vmatpush.bf16.msra.mxu0 %v1459
    %1472 = vmatpush.bf16.msra.mxu0 %v1458
    %1473 = vmatpush.bf16.msra.mxu0 %v1457
    %1474 = vmatpush.bf16.msra.mxu0 %v1456
    %1475 = vmatmul.bf16.gmra.mxu0 %v1465
    %v1476 = vpop.f32.mrf.mxu0
    %v1477 = vadd.f32 0.0, %v1476
    %v1478 = vpop.f32.mrf.mxu0
    %1479 = vdwg.mxu0
    %v1480 = vadd.f32 %v1426, %v1477
    %v1481 = vld [vmem:[%s1429 + $0x1] sm:$0xf]
    %v1482 = vpack.c.bf16 %v1481, %v1481
    %v1483 = vld [vmem:[%s214] sm:$0xf]
    %v1484 = vld [vmem:[%s214 + $0x4] sm:$0xf]
    %v1485 = vld [vmem:[%s214 + $0x8] sm:$0xf]
    %v1486 = vld [vmem:[%s214 + $0xc] sm:$0xf]
    %v1487 = vld [vmem:[%s214 + $0x10] sm:$0xf]
    %v1488 = vld [vmem:[%s214 + $0x14] sm:$0xf]
    %v1489 = vld [vmem:[%s214 + $0x18] sm:$0xf]
    %v1490 = vld [vmem:[%s214 + $0x1c] sm:$0xf]
    %v1499 = vunpack.c.l.b16 %v1483
    %v1500 = vunpack.c.l.b16 %v1484
    %v1501 = vunpack.c.l.b16 %v1485
    %v1502 = vunpack.c.l.b16 %v1486
    %v1503 = vunpack.c.l.b16 %v1487
    %v1504 = vunpack.c.l.b16 %v1488
    %v1505 = vunpack.c.l.b16 %v1489
    %v1506 = vunpack.c.l.b16 %v1490
    %v1507 = vpack.c.b16 %v1500, %v1499
    %v1508 = vpack.c.b16 %v1502, %v1501
    %v1509 = vpack.c.b16 %v1504, %v1503
    %v1510 = vpack.c.b16 %v1506, %v1505
    %v1516 = vsel %vm102, %v1482, 0
    %1518 = vmatpush.bf16.msra.mxu0 0
    %1519 = vmatpush.bf16.msra.mxu0 0
    %1520 = vmatpush.bf16.msra.mxu0 0
    %1521 = vmatpush.bf16.msra.mxu0 0
    %1522 = vmatpush.bf16.msra.mxu0 %v1510
    %1523 = vmatpush.bf16.msra.mxu0 %v1509
    %1524 = vmatpush.bf16.msra.mxu0 %v1508
    %1525 = vmatpush.bf16.msra.mxu0 %v1507
    %1526 = vmatmul.bf16.gmra.mxu0 %v1516
    %v1527 = vpop.f32.mrf.mxu0
    %v1528 = vadd.f32 0.0, %v1527
    %v1529 = vpop.f32.mrf.mxu0
    %1530 = vdwg.mxu0
    %v1531 = vadd.f32 %v1480, %v1528
    %v1532 = vld [vmem:[%s3] sm:$0x1]
    %v1534 = vperm.slane %v1532, 0
    %v1536 = vadd.f32 %v1531, %v1534
    %v1537 = vmax.f32 %v1536, 0.0
    %s1538 = scalar_lea.vmem [#allocation2], 64
    %1539 = vst.msk [vmem:[%s1538 + $0x1] sm:$0xf] %vm271, %v1537
    %v1540 = vld [vmem:[%s1429] sm:$0xf]
    %v1541 = vpack.c.bf16 %v1540, %v1540
    %v1542 = vld [vmem:[%s2] sm:$0xf]
    %v1543 = vld [vmem:[%s2 + $0x4] sm:$0xf]
    %v1544 = vld [vmem:[%s2 + $0x8] sm:$0xf]
    %v1545 = vld [vmem:[%s2 + $0xc] sm:$0xf]
    %v1546 = vld [vmem:[%s2 + $0x10] sm:$0xf]
    %v1547 = vld [vmem:[%s2 + $0x14] sm:$0xf]
    %v1548 = vld [vmem:[%s2 + $0x18] sm:$0xf]
    %v1549 = vld [vmem:[%s2 + $0x1c] sm:$0xf]
    %v1550 = vld [vmem:[%s1429 + $0x1] sm:$0xf]
    %v1551 = vpack.c.bf16 %v1550, %v1550
    %v1552 = vld [vmem:[%s69] sm:$0xf]
    %v1553 = vld [vmem:[%s69 + $0x4] sm:$0xf]
    %v1554 = vld [vmem:[%s69 + $0x8] sm:$0xf]
    %v1555 = vld [vmem:[%s69 + $0xc] sm:$0xf]
    %v1556 = vld [vmem:[%s69 + $0x10] sm:$0xf]
    %v1557 = vld [vmem:[%s69 + $0x14] sm:$0xf]
    %v1558 = vld [vmem:[%s69 + $0x18] sm:$0xf]
    %v1559 = vld [vmem:[%s69 + $0x1c] sm:$0xf]
    %v1568 = vunpack.c.l.b16 %v1552
    %v1569 = vunpack.c.l.b16 %v1553
    %v1570 = vunpack.c.l.b16 %v1554
    %v1571 = vunpack.c.l.b16 %v1555
    %v1572 = vunpack.c.l.b16 %v1556
    %v1573 = vunpack.c.l.b16 %v1557
    %v1574 = vunpack.c.l.b16 %v1558
    %v1575 = vunpack.c.l.b16 %v1559
    %v1576 = vpack.c.b16 %v1569, %v1568
    %v1577 = vpack.c.b16 %v1571, %v1570
    %v1578 = vpack.c.b16 %v1573, %v1572
    %v1579 = vpack.c.b16 %v1575, %v1574
    %v1585 = vsel %vm102, %v1551, 0
    %1587 = vmatpush.bf16.msra.mxu0 0
    %1588 = vmatpush.bf16.msra.mxu0 0
    %1589 = vmatpush.bf16.msra.mxu0 0
    %1590 = vmatpush.bf16.msra.mxu0 0
    %1591 = vmatpush.bf16.msra.mxu0 %v1579
    %1592 = vmatpush.bf16.msra.mxu0 %v1578
    %1593 = vmatpush.bf16.msra.mxu0 %v1577
    %1594 = vmatpush.bf16.msra.mxu0 %v1576
    %1595 = vmatmul.bf16.gmra.mxu0 %v1585
    %v1596 = vpop.f32.mrf.mxu0
    %v1597 = vadd.f32 0.0, %v1596
    %v1598 = vpop.f32.mrf.mxu0
    %1599 = vdwg.mxu0
    %v1608 = vunpack.c.l.b16 %v1542
    %v1609 = vunpack.c.l.b16 %v1543
    %v1610 = vunpack.c.l.b16 %v1544
    %v1611 = vunpack.c.l.b16 %v1545
    %v1612 = vunpack.c.l.b16 %v1546
    %v1613 = vunpack.c.l.b16 %v1547
    %v1614 = vunpack.c.l.b16 %v1548
    %v1615 = vunpack.c.l.b16 %v1549
    %v1616 = vpack.c.b16 %v1609, %v1608
    %v1617 = vpack.c.b16 %v1611, %v1610
    %v1618 = vpack.c.b16 %v1613, %v1612
    %v1619 = vpack.c.b16 %v1615, %v1614
    %v1625 = vsel %vm102, %v1541, 0
    %1627 = vmatpush.bf16.msra.mxu0 0
    %1628 = vmatpush.bf16.msra.mxu0 0
    %1629 = vmatpush.bf16.msra.mxu0 0
    %1630 = vmatpush.bf16.msra.mxu0 0
    %1631 = vmatpush.bf16.msra.mxu0 %v1619
    %1632 = vmatpush.bf16.msra.mxu0 %v1618
    %1633 = vmatpush.bf16.msra.mxu0 %v1617
    %1634 = vmatpush.bf16.msra.mxu0 %v1616
    %1635 = vmatmul.bf16.gmra.mxu0 %v1625
    %v1636 = vpop.f32.mrf.mxu0
    %v1637 = vadd.f32 %v1597, %v1636
    %v1638 = vpop.f32.mrf.mxu0
    %1639 = vdwg.mxu0
    %s1640 = scalar_lea.vmem %s0, 72
    %v1641 = vld [vmem:[%s1640] sm:$0xf]
    %v1642 = vpack.c.bf16 %v1641, %v1641
    %v1643 = vld [vmem:[%s162] sm:$0xf]
    %v1644 = vld [vmem:[%s162 + $0x4] sm:$0xf]
    %v1645 = vld [vmem:[%s162 + $0x8] sm:$0xf]
    %v1646 = vld [vmem:[%s162 + $0xc] sm:$0xf]
    %v1647 = vld [vmem:[%s162 + $0x10] sm:$0xf]
    %v1648 = vld [vmem:[%s162 + $0x14] sm:$0xf]
    %v1649 = vld [vmem:[%s162 + $0x18] sm:$0xf]
    %v1650 = vld [vmem:[%s162 + $0x1c] sm:$0xf]
    %v1659 = vunpack.c.l.b16 %v1643
    %v1660 = vunpack.c.l.b16 %v1644
    %v1661 = vunpack.c.l.b16 %v1645
    %v1662 = vunpack.c.l.b16 %v1646
    %v1663 = vunpack.c.l.b16 %v1647
    %v1664 = vunpack.c.l.b16 %v1648
    %v1665 = vunpack.c.l.b16 %v1649
    %v1666 = vunpack.c.l.b16 %v1650
    %v1667 = vpack.c.b16 %v1660, %v1659
    %v1668 = vpack.c.b16 %v1662, %v1661
    %v1669 = vpack.c.b16 %v1664, %v1663
    %v1670 = vpack.c.b16 %v1666, %v1665
    %v1676 = vsel %vm102, %v1642, 0
    %1678 = vmatpush.bf16.msra.mxu0 0
    %1679 = vmatpush.bf16.msra.mxu0 0
    %1680 = vmatpush.bf16.msra.mxu0 0
    %1681 = vmatpush.bf16.msra.mxu0 0
    %1682 = vmatpush.bf16.msra.mxu0 %v1670
    %1683 = vmatpush.bf16.msra.mxu0 %v1669
    %1684 = vmatpush.bf16.msra.mxu0 %v1668
    %1685 = vmatpush.bf16.msra.mxu0 %v1667
    %1686 = vmatmul.bf16.gmra.mxu0 %v1676
    %v1687 = vpop.f32.mrf.mxu0
    %v1688 = vadd.f32 0.0, %v1687
    %v1689 = vpop.f32.mrf.mxu0
    %1690 = vdwg.mxu0
    %v1691 = vadd.f32 %v1637, %v1688
    %v1692 = vld [vmem:[%s1640 + $0x1] sm:$0xf]
    %v1693 = vpack.c.bf16 %v1692, %v1692
    %v1694 = vld [vmem:[%s214] sm:$0xf]
    %v1695 = vld [vmem:[%s214 + $0x4] sm:$0xf]
    %v1696 = vld [vmem:[%s214 + $0x8] sm:$0xf]
    %v1697 = vld [vmem:[%s214 + $0xc] sm:$0xf]
    %v1698 = vld [vmem:[%s214 + $0x10] sm:$0xf]
    %v1699 = vld [vmem:[%s214 + $0x14] sm:$0xf]
    %v1700 = vld [vmem:[%s214 + $0x18] sm:$0xf]
    %v1701 = vld [vmem:[%s214 + $0x1c] sm:$0xf]
    %v1710 = vunpack.c.l.b16 %v1694
    %v1711 = vunpack.c.l.b16 %v1695
    %v1712 = vunpack.c.l.b16 %v1696
    %v1713 = vunpack.c.l.b16 %v1697
    %v1714 = vunpack.c.l.b16 %v1698
    %v1715 = vunpack.c.l.b16 %v1699
    %v1716 = vunpack.c.l.b16 %v1700
    %v1717 = vunpack.c.l.b16 %v1701
    %v1718 = vpack.c.b16 %v1711, %v1710
    %v1719 = vpack.c.b16 %v1713, %v1712
    %v1720 = vpack.c.b16 %v1715, %v1714
    %v1721 = vpack.c.b16 %v1717, %v1716
    %v1727 = vsel %vm102, %v1693, 0
    %1729 = vmatpush.bf16.msra.mxu0 0
    %1730 = vmatpush.bf16.msra.mxu0 0
    %1731 = vmatpush.bf16.msra.mxu0 0
    %1732 = vmatpush.bf16.msra.mxu0 0
    %1733 = vmatpush.bf16.msra.mxu0 %v1721
    %1734 = vmatpush.bf16.msra.mxu0 %v1720
    %1735 = vmatpush.bf16.msra.mxu0 %v1719
    %1736 = vmatpush.bf16.msra.mxu0 %v1718
    %1737 = vmatmul.bf16.gmra.mxu0 %v1727
    %v1738 = vpop.f32.mrf.mxu0
    %v1739 = vadd.f32 0.0, %v1738
    %v1740 = vpop.f32.mrf.mxu0
    %1741 = vdwg.mxu0
    %v1742 = vadd.f32 %v1691, %v1739
    %v1743 = vld [vmem:[%s3] sm:$0x1]
    %v1745 = vperm.slane %v1743, 0
    %v1747 = vadd.f32 %v1742, %v1745
    %v1748 = vmax.f32 %v1747, 0.0
    %s1749 = scalar_lea.vmem [#allocation2], 72
    %1750 = vst.msk [vmem:[%s1749 + $0x1] sm:$0xf] %vm271, %v1748
    %v1751 = vld [vmem:[#allocation2] sm:$0xf]
    %v1752 = vpack.c.bf16 %v1751, %v1751
    %v1753 = vld [vmem:[%s4] sm:$0xf]
    %v1754 = vld [vmem:[%s4 + $0x4] sm:$0xf]
    %v1755 = vld [vmem:[%s4 + $0x8] sm:$0xf]
    %v1756 = vld [vmem:[%s4 + $0xc] sm:$0xf]
    %v1757 = vld [vmem:[#allocation2 + $0x1] sm:$0xf]
    %v1758 = vpack.c.bf16 %v1757, %v1757
    %s1759 = scalar_lea.vmem %s4, 16
    %v1760 = vld [vmem:[%s1759] sm:$0xf]
    %v1761 = vld [vmem:[%s1759 + $0x4] sm:$0xf]
    %v1762 = vld [vmem:[%s1759 + $0x8] sm:$0xf]
    %v1763 = vld [vmem:[%s1759 + $0xc] sm:$0xf]
    %v1768 = vunpack.c.l.b16 %v1760
    %v1769 = vunpack.c.l.b16 %v1761
    %v1770 = vunpack.c.l.b16 %v1762
    %v1771 = vunpack.c.l.b16 %v1763
    %v1772 = vpack.c.b16 %v1769, %v1768
    %v1773 = vpack.c.b16 %v1771, %v1770
    %vm1776 = vcmask 261120
    %v1778 = vsel %vm1776, %v1758, 0
    %1780 = vmatpush.bf16.msra.mxu0 0
    %1781 = vmatpush.bf16.msra.mxu0 0
    %1782 = vmatpush.bf16.msra.mxu0 0
    %1783 = vmatpush.bf16.msra.mxu0 0
    %1784 = vmatpush.bf16.msra.mxu0 0
    %1785 = vmatpush.bf16.msra.mxu0 0
    %1786 = vmatpush.bf16.msra.mxu0 %v1773
    %1787 = vmatpush.bf16.msra.mxu0 %v1772
    %1788 = vmatmul.bf16.gmra.mxu0 %v1778
    %v1789 = vpop.f32.mrf.mxu0
    %v1790 = vadd.f32 0.0, %v1789
    %v1791 = vpop.f32.mrf.mxu0
    %1792 = vdwg.mxu0
    %v1797 = vunpack.c.l.b16 %v1753
    %v1798 = vunpack.c.l.b16 %v1754
    %v1799 = vunpack.c.l.b16 %v1755
    %v1800 = vunpack.c.l.b16 %v1756
    %v1801 = vpack.c.b16 %v1798, %v1797
    %v1802 = vpack.c.b16 %v1800, %v1799
    %v1806 = vsel %vm1776, %v1752, 0
    %1808 = vmatpush.bf16.msra.mxu0 0
    %1809 = vmatpush.bf16.msra.mxu0 0
    %1810 = vmatpush.bf16.msra.mxu0 0
    %1811 = vmatpush.bf16.msra.mxu0 0
    %1812 = vmatpush.bf16.msra.mxu0 0
    %1813 = vmatpush.bf16.msra.mxu0 0
    %1814 = vmatpush.bf16.msra.mxu0 %v1802
    %1815 = vmatpush.bf16.msra.mxu0 %v1801
    %1816 = vmatmul.bf16.gmra.mxu0 %v1806
    %v1817 = vpop.f32.mrf.mxu0
    %v1818 = vadd.f32 %v1790, %v1817
    %v1819 = vpop.f32.mrf.mxu0
    %1820 = vdwg.mxu0
    %v1821 = vld [vmem:[%s270] sm:$0xf]
    %v1822 = vpack.c.bf16 %v1821, %v1821
    %s1823 = scalar_lea.vmem %s4, 32
    %v1824 = vld [vmem:[%s1823] sm:$0xf]
    %v1825 = vld [vmem:[%s1823 + $0x4] sm:$0xf]
    %v1826 = vld [vmem:[%s1823 + $0x8] sm:$0xf]
    %v1827 = vld [vmem:[%s1823 + $0xc] sm:$0xf]
    %v1832 = vunpack.c.l.b16 %v1824
    %v1833 = vunpack.c.l.b16 %v1825
    %v1834 = vunpack.c.l.b16 %v1826
    %v1835 = vunpack.c.l.b16 %v1827
    %v1836 = vpack.c.b16 %v1833, %v1832
    %v1837 = vpack.c.b16 %v1835, %v1834
    %v1841 = vsel %vm1776, %v1822, 0
    %1843 = vmatpush.bf16.msra.mxu0 0
    %1844 = vmatpush.bf16.msra.mxu0 0
    %1845 = vmatpush.bf16.msra.mxu0 0
    %1846 = vmatpush.bf16.msra.mxu0 0
    %1847 = vmatpush.bf16.msra.mxu0 0
    %1848 = vmatpush.bf16.msra.mxu0 0
    %1849 = vmatpush.bf16.msra.mxu0 %v1837
    %1850 = vmatpush.bf16.msra.mxu0 %v1836
    %1851 = vmatmul.bf16.gmra.mxu0 %v1841
    %v1852 = vpop.f32.mrf.mxu0
    %v1853 = vadd.f32 0.0, %v1852
    %v1854 = vpop.f32.mrf.mxu0
    %1855 = vdwg.mxu0
    %v1856 = vadd.f32 %v1818, %v1853
    %v1857 = vld [vmem:[%s270 + $0x1] sm:$0xf]
    %v1858 = vpack.c.bf16 %v1857, %v1857
    %s1859 = scalar_lea.vmem %s4, 48
    %v1860 = vld [vmem:[%s1859] sm:$0xf]
    %v1861 = vld [vmem:[%s1859 + $0x4] sm:$0xf]
    %v1862 = vld [vmem:[%s1859 + $0x8] sm:$0xf]
    %v1863 = vld [vmem:[%s1859 + $0xc] sm:$0xf]
    %v1868 = vunpack.c.l.b16 %v1860
    %v1869 = vunpack.c.l.b16 %v1861
    %v1870 = vunpack.c.l.b16 %v1862
    %v1871 = vunpack.c.l.b16 %v1863
    %v1872 = vpack.c.b16 %v1869, %v1868
    %v1873 = vpack.c.b16 %v1871, %v1870
    %v1877 = vsel %vm1776, %v1858, 0
    %1879 = vmatpush.bf16.msra.mxu0 0
    %1880 = vmatpush.bf16.msra.mxu0 0
    %1881 = vmatpush.bf16.msra.mxu0 0
    %1882 = vmatpush.bf16.msra.mxu0 0
    %1883 = vmatpush.bf16.msra.mxu0 0
    %1884 = vmatpush.bf16.msra.mxu0 0
    %1885 = vmatpush.bf16.msra.mxu0 %v1873
    %1886 = vmatpush.bf16.msra.mxu0 %v1872
    %1887 = vmatmul.bf16.gmra.mxu0 %v1877
    %v1888 = vpop.f32.mrf.mxu0
    %v1889 = vadd.f32 0.0, %v1888
    %v1890 = vpop.f32.mrf.mxu0
    %1891 = vdwg.mxu0
    %v1892 = vadd.f32 %v1856, %v1889
    %v1893 = vld [vmem:[%s5] sm:$0x1]
    %v1895 = vperm.slane %v1893, 0
    %v1897 = vadd.f32 %v1892, %v1895
    %v1898 = vmax.f32 %v1897, 0.0
    %vm1899 = vcmask 125952
    %1900 = vst.msk [vmem:[#allocation3] sm:$0xf] %vm1899, %v1898
    %v1901 = vld [vmem:[%s270] sm:$0xf]
    %v1902 = vpack.c.bf16 %v1901, %v1901
    %v1903 = vld [vmem:[%s4] sm:$0xf]
    %v1904 = vld [vmem:[%s4 + $0x4] sm:$0xf]
    %v1905 = vld [vmem:[%s4 + $0x8] sm:$0xf]
    %v1906 = vld [vmem:[%s4 + $0xc] sm:$0xf]
    %v1907 = vld [vmem:[%s270 + $0x1] sm:$0xf]
    %v1908 = vpack.c.bf16 %v1907, %v1907
    %v1909 = vld [vmem:[%s1759] sm:$0xf]
    %v1910 = vld [vmem:[%s1759 + $0x4] sm:$0xf]
    %v1911 = vld [vmem:[%s1759 + $0x8] sm:$0xf]
    %v1912 = vld [vmem:[%s1759 + $0xc] sm:$0xf]
    %v1917 = vunpack.c.l.b16 %v1909
    %v1918 = vunpack.c.l.b16 %v1910
    %v1919 = vunpack.c.l.b16 %v1911
    %v1920 = vunpack.c.l.b16 %v1912
    %v1921 = vpack.c.b16 %v1918, %v1917
    %v1922 = vpack.c.b16 %v1920, %v1919
    %v1926 = vsel %vm1776, %v1908, 0
    %1928 = vmatpush.bf16.msra.mxu0 0
    %1929 = vmatpush.bf16.msra.mxu0 0
    %1930 = vmatpush.bf16.msra.mxu0 0
    %1931 = vmatpush.bf16.msra.mxu0 0
    %1932 = vmatpush.bf16.msra.mxu0 0
    %1933 = vmatpush.bf16.msra.mxu0 0
    %1934 = vmatpush.bf16.msra.mxu0 %v1922
    %1935 = vmatpush.bf16.msra.mxu0 %v1921
    %1936 = vmatmul.bf16.gmra.mxu0 %v1926
    %v1937 = vpop.f32.mrf.mxu0
    %v1938 = vadd.f32 0.0, %v1937
    %v1939 = vpop.f32.mrf.mxu0
    %1940 = vdwg.mxu0
    %v1945 = vunpack.c.l.b16 %v1903
    %v1946 = vunpack.c.l.b16 %v1904
    %v1947 = vunpack.c.l.b16 %v1905
    %v1948 = vunpack.c.l.b16 %v1906
    %v1949 = vpack.c.b16 %v1946, %v1945
    %v1950 = vpack.c.b16 %v1948, %v1947
    %v1954 = vsel %vm1776, %v1902, 0
    %1956 = vmatpush.bf16.msra.mxu0 0
    %1957 = vmatpush.bf16.msra.mxu0 0
    %1958 = vmatpush.bf16.msra.mxu0 0
    %1959 = vmatpush.bf16.msra.mxu0 0
    %1960 = vmatpush.bf16.msra.mxu0 0
    %1961 = vmatpush.bf16.msra.mxu0 0
    %1962 = vmatpush.bf16.msra.mxu0 %v1950
    %1963 = vmatpush.bf16.msra.mxu0 %v1949
    %1964 = vmatmul.bf16.gmra.mxu0 %v1954
    %v1965 = vpop.f32.mrf.mxu0
    %v1966 = vadd.f32 %v1938, %v1965
    %v1967 = vpop.f32.mrf.mxu0
    %1968 = vdwg.mxu0
    %v1969 = vld [vmem:[%s482] sm:$0xf]
    %v1970 = vpack.c.bf16 %v1969, %v1969
    %v1971 = vld [vmem:[%s1823] sm:$0xf]
    %v1972 = vld [vmem:[%s1823 + $0x4] sm:$0xf]
    %v1973 = vld [vmem:[%s1823 + $0x8] sm:$0xf]
    %v1974 = vld [vmem:[%s1823 + $0xc] sm:$0xf]
    %v1979 = vunpack.c.l.b16 %v1971
    %v1980 = vunpack.c.l.b16 %v1972
    %v1981 = vunpack.c.l.b16 %v1973
    %v1982 = vunpack.c.l.b16 %v1974
    %v1983 = vpack.c.b16 %v1980, %v1979
    %v1984 = vpack.c.b16 %v1982, %v1981
    %v1988 = vsel %vm1776, %v1970, 0
    %1990 = vmatpush.bf16.msra.mxu0 0
    %1991 = vmatpush.bf16.msra.mxu0 0
    %1992 = vmatpush.bf16.msra.mxu0 0
    %1993 = vmatpush.bf16.msra.mxu0 0
    %1994 = vmatpush.bf16.msra.mxu0 0
    %1995 = vmatpush.bf16.msra.mxu0 0
    %1996 = vmatpush.bf16.msra.mxu0 %v1984
    %1997 = vmatpush.bf16.msra.mxu0 %v1983
    %1998 = vmatmul.bf16.gmra.mxu0 %v1988
    %v1999 = vpop.f32.mrf.mxu0
    %v2000 = vadd.f32 0.0, %v1999
    %v2001 = vpop.f32.mrf.mxu0
    %2002 = vdwg.mxu0
    %v2003 = vadd.f32 %v1966, %v2000
    %v2004 = vld [vmem:[%s482 + $0x1] sm:$0xf]
    %v2005 = vpack.c.bf16 %v2004, %v2004
    %v2006 = vld [vmem:[%s1859] sm:$0xf]
    %v2007 = vld [vmem:[%s1859 + $0x4] sm:$0xf]
    %v2008 = vld [vmem:[%s1859 + $0x8] sm:$0xf]
    %v2009 = vld [vmem:[%s1859 + $0xc] sm:$0xf]
    %v2014 = vunpack.c.l.b16 %v2006
    %v2015 = vunpack.c.l.b16 %v2007
    %v2016 = vunpack.c.l.b16 %v2008
    %v2017 = vunpack.c.l.b16 %v2009
    %v2018 = vpack.c.b16 %v2015, %v2014
    %v2019 = vpack.c.b16 %v2017, %v2016
    %v2023 = vsel %vm1776, %v2005, 0
    %2025 = vmatpush.bf16.msra.mxu0 0
    %2026 = vmatpush.bf16.msra.mxu0 0
    %2027 = vmatpush.bf16.msra.mxu0 0
    %2028 = vmatpush.bf16.msra.mxu0 0
    %2029 = vmatpush.bf16.msra.mxu0 0
    %2030 = vmatpush.bf16.msra.mxu0 0
    %2031 = vmatpush.bf16.msra.mxu0 %v2019
    %2032 = vmatpush.bf16.msra.mxu0 %v2018
    %2033 = vmatmul.bf16.gmra.mxu0 %v2023
    %v2034 = vpop.f32.mrf.mxu0
    %v2035 = vadd.f32 0.0, %v2034
    %v2036 = vpop.f32.mrf.mxu0
    %2037 = vdwg.mxu0
    %v2038 = vadd.f32 %v2003, %v2035
    %v2039 = vld [vmem:[%s5] sm:$0x1]
    %v2041 = vperm.slane %v2039, 0
    %v2043 = vadd.f32 %v2038, %v2041
    %v2044 = vmax.f32 %v2043, 0.0
    %2045 = vst.msk [vmem:[#allocation3 + $0x4] sm:$0xf] %vm1899, %v2044
    %v2046 = vld [vmem:[%s482] sm:$0xf]
    %v2047 = vpack.c.bf16 %v2046, %v2046
    %v2048 = vld [vmem:[%s4] sm:$0xf]
    %v2049 = vld [vmem:[%s4 + $0x4] sm:$0xf]
    %v2050 = vld [vmem:[%s4 + $0x8] sm:$0xf]
    %v2051 = vld [vmem:[%s4 + $0xc] sm:$0xf]
    %v2052 = vld [vmem:[%s482 + $0x1] sm:$0xf]
    %v2053 = vpack.c.bf16 %v2052, %v2052
    %v2054 = vld [vmem:[%s1759] sm:$0xf]
    %v2055 = vld [vmem:[%s1759 + $0x4] sm:$0xf]
    %v2056 = vld [vmem:[%s1759 + $0x8] sm:$0xf]
    %v2057 = vld [vmem:[%s1759 + $0xc] sm:$0xf]
    %v2062 = vunpack.c.l.b16 %v2054
    %v2063 = vunpack.c.l.b16 %v2055
    %v2064 = vunpack.c.l.b16 %v2056
    %v2065 = vunpack.c.l.b16 %v2057
    %v2066 = vpack.c.b16 %v2063, %v2062
    %v2067 = vpack.c.b16 %v2065, %v2064
    %v2071 = vsel %vm1776, %v2053, 0
    %2073 = vmatpush.bf16.msra.mxu0 0
    %2074 = vmatpush.bf16.msra.mxu0 0
    %2075 = vmatpush.bf16.msra.mxu0 0
    %2076 = vmatpush.bf16.msra.mxu0 0
    %2077 = vmatpush.bf16.msra.mxu0 0
    %2078 = vmatpush.bf16.msra.mxu0 0
    %2079 = vmatpush.bf16.msra.mxu0 %v2067
    %2080 = vmatpush.bf16.msra.mxu0 %v2066
    %2081 = vmatmul.bf16.gmra.mxu0 %v2071
    %v2082 = vpop.f32.mrf.mxu0
    %v2083 = vadd.f32 0.0, %v2082
    %v2084 = vpop.f32.mrf.mxu0
    %2085 = vdwg.mxu0
    %v2090 = vunpack.c.l.b16 %v2048
    %v2091 = vunpack.c.l.b16 %v2049
    %v2092 = vunpack.c.l.b16 %v2050
    %v2093 = vunpack.c.l.b16 %v2051
    %v2094 = vpack.c.b16 %v2091, %v2090
    %v2095 = vpack.c.b16 %v2093, %v2092
    %v2099 = vsel %vm1776, %v2047, 0
    %2101 = vmatpush.bf16.msra.mxu0 0
    %2102 = vmatpush.bf16.msra.mxu0 0
    %2103 = vmatpush.bf16.msra.mxu0 0
    %2104 = vmatpush.bf16.msra.mxu0 0
    %2105 = vmatpush.bf16.msra.mxu0 0
    %2106 = vmatpush.bf16.msra.mxu0 0
    %2107 = vmatpush.bf16.msra.mxu0 %v2095
    %2108 = vmatpush.bf16.msra.mxu0 %v2094
    %2109 = vmatmul.bf16.gmra.mxu0 %v2099
    %v2110 = vpop.f32.mrf.mxu0
    %v2111 = vadd.f32 %v2083, %v2110
    %v2112 = vpop.f32.mrf.mxu0
    %2113 = vdwg.mxu0
    %v2114 = vld [vmem:[%s693] sm:$0xf]
    %v2115 = vpack.c.bf16 %v2114, %v2114
    %v2116 = vld [vmem:[%s1823] sm:$0xf]
    %v2117 = vld [vmem:[%s1823 + $0x4] sm:$0xf]
    %v2118 = vld [vmem:[%s1823 + $0x8] sm:$0xf]
    %v2119 = vld [vmem:[%s1823 + $0xc] sm:$0xf]
    %v2124 = vunpack.c.l.b16 %v2116
    %v2125 = vunpack.c.l.b16 %v2117
    %v2126 = vunpack.c.l.b16 %v2118
    %v2127 = vunpack.c.l.b16 %v2119
    %v2128 = vpack.c.b16 %v2125, %v2124
    %v2129 = vpack.c.b16 %v2127, %v2126
    %v2133 = vsel %vm1776, %v2115, 0
    %2135 = vmatpush.bf16.msra.mxu0 0
    %2136 = vmatpush.bf16.msra.mxu0 0
    %2137 = vmatpush.bf16.msra.mxu0 0
    %2138 = vmatpush.bf16.msra.mxu0 0
    %2139 = vmatpush.bf16.msra.mxu0 0
    %2140 = vmatpush.bf16.msra.mxu0 0
    %2141 = vmatpush.bf16.msra.mxu0 %v2129
    %2142 = vmatpush.bf16.msra.mxu0 %v2128
    %2143 = vmatmul.bf16.gmra.mxu0 %v2133
    %v2144 = vpop.f32.mrf.mxu0
    %v2145 = vadd.f32 0.0, %v2144
    %v2146 = vpop.f32.mrf.mxu0
    %2147 = vdwg.mxu0
    %v2148 = vadd.f32 %v2111, %v2145
    %v2149 = vld [vmem:[%s693 + $0x1] sm:$0xf]
    %v2150 = vpack.c.bf16 %v2149, %v2149
    %v2151 = vld [vmem:[%s1859] sm:$0xf]
    %v2152 = vld [vmem:[%s1859 + $0x4] sm:$0xf]
    %v2153 = vld [vmem:[%s1859 + $0x8] sm:$0xf]
    %v2154 = vld [vmem:[%s1859 + $0xc] sm:$0xf]
    %v2159 = vunpack.c.l.b16 %v2151
    %v2160 = vunpack.c.l.b16 %v2152
    %v2161 = vunpack.c.l.b16 %v2153
    %v2162 = vunpack.c.l.b16 %v2154
    %v2163 = vpack.c.b16 %v2160, %v2159
    %v2164 = vpack.c.b16 %v2162, %v2161
    %v2168 = vsel %vm1776, %v2150, 0
    %2170 = vmatpush.bf16.msra.mxu0 0
    %2171 = vmatpush.bf16.msra.mxu0 0
    %2172 = vmatpush.bf16.msra.mxu0 0
    %2173 = vmatpush.bf16.msra.mxu0 0
    %2174 = vmatpush.bf16.msra.mxu0 0
    %2175 = vmatpush.bf16.msra.mxu0 0
    %2176 = vmatpush.bf16.msra.mxu0 %v2164
    %2177 = vmatpush.bf16.msra.mxu0 %v2163
    %2178 = vmatmul.bf16.gmra.mxu0 %v2168
    %v2179 = vpop.f32.mrf.mxu0
    %v2180 = vadd.f32 0.0, %v2179
    %v2181 = vpop.f32.mrf.mxu0
    %2182 = vdwg.mxu0
    %v2183 = vadd.f32 %v2148, %v2180
    %v2184 = vld [vmem:[%s5] sm:$0x1]
    %v2186 = vperm.slane %v2184, 0
    %v2188 = vadd.f32 %v2183, %v2186
    %v2189 = vmax.f32 %v2188, 0.0
    %2190 = vst.msk [vmem:[#allocation3 + $0x8] sm:$0xf] %vm1899, %v2189
    %v2191 = vld [vmem:[%s693] sm:$0xf]
    %v2192 = vpack.c.bf16 %v2191, %v2191
    %v2193 = vld [vmem:[%s4] sm:$0xf]
    %v2194 = vld [vmem:[%s4 + $0x4] sm:$0xf]
    %v2195 = vld [vmem:[%s4 + $0x8] sm:$0xf]
    %v2196 = vld [vmem:[%s4 + $0xc] sm:$0xf]
    %v2197 = vld [vmem:[%s693 + $0x1] sm:$0xf]
    %v2198 = vpack.c.bf16 %v2197, %v2197
    %v2199 = vld [vmem:[%s1759] sm:$0xf]
    %v2200 = vld [vmem:[%s1759 + $0x4] sm:$0xf]
    %v2201 = vld [vmem:[%s1759 + $0x8] sm:$0xf]
    %v2202 = vld [vmem:[%s1759 + $0xc] sm:$0xf]
    %v2207 = vunpack.c.l.b16 %v2199
    %v2208 = vunpack.c.l.b16 %v2200
    %v2209 = vunpack.c.l.b16 %v2201
    %v2210 = vunpack.c.l.b16 %v2202
    %v2211 = vpack.c.b16 %v2208, %v2207
    %v2212 = vpack.c.b16 %v2210, %v2209
    %v2216 = vsel %vm1776, %v2198, 0
    %2218 = vmatpush.bf16.msra.mxu0 0
    %2219 = vmatpush.bf16.msra.mxu0 0
    %2220 = vmatpush.bf16.msra.mxu0 0
    %2221 = vmatpush.bf16.msra.mxu0 0
    %2222 = vmatpush.bf16.msra.mxu0 0
    %2223 = vmatpush.bf16.msra.mxu0 0
    %2224 = vmatpush.bf16.msra.mxu0 %v2212
    %2225 = vmatpush.bf16.msra.mxu0 %v2211
    %2226 = vmatmul.bf16.gmra.mxu0 %v2216
    %v2227 = vpop.f32.mrf.mxu0
    %v2228 = vadd.f32 0.0, %v2227
    %v2229 = vpop.f32.mrf.mxu0
    %2230 = vdwg.mxu0
    %v2235 = vunpack.c.l.b16 %v2193
    %v2236 = vunpack.c.l.b16 %v2194
    %v2237 = vunpack.c.l.b16 %v2195
    %v2238 = vunpack.c.l.b16 %v2196
    %v2239 = vpack.c.b16 %v2236, %v2235
    %v2240 = vpack.c.b16 %v2238, %v2237
    %v2244 = vsel %vm1776, %v2192, 0
    %2246 = vmatpush.bf16.msra.mxu0 0
    %2247 = vmatpush.bf16.msra.mxu0 0
    %2248 = vmatpush.bf16.msra.mxu0 0
    %2249 = vmatpush.bf16.msra.mxu0 0
    %2250 = vmatpush.bf16.msra.mxu0 0
    %2251 = vmatpush.bf16.msra.mxu0 0
    %2252 = vmatpush.bf16.msra.mxu0 %v2240
    %2253 = vmatpush.bf16.msra.mxu0 %v2239
    %2254 = vmatmul.bf16.gmra.mxu0 %v2244
    %v2255 = vpop.f32.mrf.mxu0
    %v2256 = vadd.f32 %v2228, %v2255
    %v2257 = vpop.f32.mrf.mxu0
    %2258 = vdwg.mxu0
    %v2259 = vld [vmem:[%s904] sm:$0xf]
    %v2260 = vpack.c.bf16 %v2259, %v2259
    %v2261 = vld [vmem:[%s1823] sm:$0xf]
    %v2262 = vld [vmem:[%s1823 + $0x4] sm:$0xf]
    %v2263 = vld [vmem:[%s1823 + $0x8] sm:$0xf]
    %v2264 = vld [vmem:[%s1823 + $0xc] sm:$0xf]
    %v2269 = vunpack.c.l.b16 %v2261
    %v2270 = vunpack.c.l.b16 %v2262
    %v2271 = vunpack.c.l.b16 %v2263
    %v2272 = vunpack.c.l.b16 %v2264
    %v2273 = vpack.c.b16 %v2270, %v2269
    %v2274 = vpack.c.b16 %v2272, %v2271
    %v2278 = vsel %vm1776, %v2260, 0
    %2280 = vmatpush.bf16.msra.mxu0 0
    %2281 = vmatpush.bf16.msra.mxu0 0
    %2282 = vmatpush.bf16.msra.mxu0 0
    %2283 = vmatpush.bf16.msra.mxu0 0
    %2284 = vmatpush.bf16.msra.mxu0 0
    %2285 = vmatpush.bf16.msra.mxu0 0
    %2286 = vmatpush.bf16.msra.mxu0 %v2274
    %2287 = vmatpush.bf16.msra.mxu0 %v2273
    %2288 = vmatmul.bf16.gmra.mxu0 %v2278
    %v2289 = vpop.f32.mrf.mxu0
    %v2290 = vadd.f32 0.0, %v2289
    %v2291 = vpop.f32.mrf.mxu0
    %2292 = vdwg.mxu0
    %v2293 = vadd.f32 %v2256, %v2290
    %v2294 = vld [vmem:[%s904 + $0x1] sm:$0xf]
    %v2295 = vpack.c.bf16 %v2294, %v2294
    %v2296 = vld [vmem:[%s1859] sm:$0xf]
    %v2297 = vld [vmem:[%s1859 + $0x4] sm:$0xf]
    %v2298 = vld [vmem:[%s1859 + $0x8] sm:$0xf]
    %v2299 = vld [vmem:[%s1859 + $0xc] sm:$0xf]
    %v2304 = vunpack.c.l.b16 %v2296
    %v2305 = vunpack.c.l.b16 %v2297
    %v2306 = vunpack.c.l.b16 %v2298
    %v2307 = vunpack.c.l.b16 %v2299
    %v2308 = vpack.c.b16 %v2305, %v2304
    %v2309 = vpack.c.b16 %v2307, %v2306
    %v2313 = vsel %vm1776, %v2295, 0
    %2315 = vmatpush.bf16.msra.mxu0 0
    %2316 = vmatpush.bf16.msra.mxu0 0
    %2317 = vmatpush.bf16.msra.mxu0 0
    %2318 = vmatpush.bf16.msra.mxu0 0
    %2319 = vmatpush.bf16.msra.mxu0 0
    %2320 = vmatpush.bf16.msra.mxu0 0
    %2321 = vmatpush.bf16.msra.mxu0 %v2309
    %2322 = vmatpush.bf16.msra.mxu0 %v2308
    %2323 = vmatmul.bf16.gmra.mxu0 %v2313
    %v2324 = vpop.f32.mrf.mxu0
    %v2325 = vadd.f32 0.0, %v2324
    %v2326 = vpop.f32.mrf.mxu0
    %2327 = vdwg.mxu0
    %v2328 = vadd.f32 %v2293, %v2325
    %v2329 = vld [vmem:[%s5] sm:$0x1]
    %v2331 = vperm.slane %v2329, 0
    %v2333 = vadd.f32 %v2328, %v2331
    %v2334 = vmax.f32 %v2333, 0.0
    %2335 = vst.msk [vmem:[#allocation3 + $0xc] sm:$0xf] %vm1899, %v2334
    %s2336 = scalar_lea.vmem [#allocation2], 40
    %v2337 = vld [vmem:[%s2336] sm:$0xf]
    %v2338 = vpack.c.bf16 %v2337, %v2337
    %v2339 = vld [vmem:[%s4] sm:$0xf]
    %v2340 = vld [vmem:[%s4 + $0x4] sm:$0xf]
    %v2341 = vld [vmem:[%s4 + $0x8] sm:$0xf]
    %v2342 = vld [vmem:[%s4 + $0xc] sm:$0xf]
    %v2343 = vld [vmem:[%s2336 + $0x1] sm:$0xf]
    %v2344 = vpack.c.bf16 %v2343, %v2343
    %v2345 = vld [vmem:[%s1759] sm:$0xf]
    %v2346 = vld [vmem:[%s1759 + $0x4] sm:$0xf]
    %v2347 = vld [vmem:[%s1759 + $0x8] sm:$0xf]
    %v2348 = vld [vmem:[%s1759 + $0xc] sm:$0xf]
    %v2353 = vunpack.c.l.b16 %v2345
    %v2354 = vunpack.c.l.b16 %v2346
    %v2355 = vunpack.c.l.b16 %v2347
    %v2356 = vunpack.c.l.b16 %v2348
    %v2357 = vpack.c.b16 %v2354, %v2353
    %v2358 = vpack.c.b16 %v2356, %v2355
    %v2362 = vsel %vm1776, %v2344, 0
    %2364 = vmatpush.bf16.msra.mxu0 0
    %2365 = vmatpush.bf16.msra.mxu0 0
    %2366 = vmatpush.bf16.msra.mxu0 0
    %2367 = vmatpush.bf16.msra.mxu0 0
    %2368 = vmatpush.bf16.msra.mxu0 0
    %2369 = vmatpush.bf16.msra.mxu0 0
    %2370 = vmatpush.bf16.msra.mxu0 %v2358
    %2371 = vmatpush.bf16.msra.mxu0 %v2357
    %2372 = vmatmul.bf16.gmra.mxu0 %v2362
    %v2373 = vpop.f32.mrf.mxu0
    %v2374 = vadd.f32 0.0, %v2373
    %v2375 = vpop.f32.mrf.mxu0
    %2376 = vdwg.mxu0
    %v2381 = vunpack.c.l.b16 %v2339
    %v2382 = vunpack.c.l.b16 %v2340
    %v2383 = vunpack.c.l.b16 %v2341
    %v2384 = vunpack.c.l.b16 %v2342
    %v2385 = vpack.c.b16 %v2382, %v2381
    %v2386 = vpack.c.b16 %v2384, %v2383
    %v2390 = vsel %vm1776, %v2338, 0
    %2392 = vmatpush.bf16.msra.mxu0 0
    %2393 = vmatpush.bf16.msra.mxu0 0
    %2394 = vmatpush.bf16.msra.mxu0 0
    %2395 = vmatpush.bf16.msra.mxu0 0
    %2396 = vmatpush.bf16.msra.mxu0 0
    %2397 = vmatpush.bf16.msra.mxu0 0
    %2398 = vmatpush.bf16.msra.mxu0 %v2386
    %2399 = vmatpush.bf16.msra.mxu0 %v2385
    %2400 = vmatmul.bf16.gmra.mxu0 %v2390
    %v2401 = vpop.f32.mrf.mxu0
    %v2402 = vadd.f32 %v2374, %v2401
    %v2403 = vpop.f32.mrf.mxu0
    %2404 = vdwg.mxu0
    %v2405 = vld [vmem:[%s1116] sm:$0xf]
    %v2406 = vpack.c.bf16 %v2405, %v2405
    %v2407 = vld [vmem:[%s1823] sm:$0xf]
    %v2408 = vld [vmem:[%s1823 + $0x4] sm:$0xf]
    %v2409 = vld [vmem:[%s1823 + $0x8] sm:$0xf]
    %v2410 = vld [vmem:[%s1823 + $0xc] sm:$0xf]
    %v2415 = vunpack.c.l.b16 %v2407
    %v2416 = vunpack.c.l.b16 %v2408
    %v2417 = vunpack.c.l.b16 %v2409
    %v2418 = vunpack.c.l.b16 %v2410
    %v2419 = vpack.c.b16 %v2416, %v2415
    %v2420 = vpack.c.b16 %v2418, %v2417
    %v2424 = vsel %vm1776, %v2406, 0
    %2426 = vmatpush.bf16.msra.mxu0 0
    %2427 = vmatpush.bf16.msra.mxu0 0
    %2428 = vmatpush.bf16.msra.mxu0 0
    %2429 = vmatpush.bf16.msra.mxu0 0
    %2430 = vmatpush.bf16.msra.mxu0 0
    %2431 = vmatpush.bf16.msra.mxu0 0
    %2432 = vmatpush.bf16.msra.mxu0 %v2420
    %2433 = vmatpush.bf16.msra.mxu0 %v2419
    %2434 = vmatmul.bf16.gmra.mxu0 %v2424
    %v2435 = vpop.f32.mrf.mxu0
    %v2436 = vadd.f32 0.0, %v2435
    %v2437 = vpop.f32.mrf.mxu0
    %2438 = vdwg.mxu0
    %v2439 = vadd.f32 %v2402, %v2436
    %v2440 = vld [vmem:[%s1116 + $0x1] sm:$0xf]
    %v2441 = vpack.c.bf16 %v2440, %v2440
    %v2442 = vld [vmem:[%s1859] sm:$0xf]
    %v2443 = vld [vmem:[%s1859 + $0x4] sm:$0xf]
    %v2444 = vld [vmem:[%s1859 + $0x8] sm:$0xf]
    %v2445 = vld [vmem:[%s1859 + $0xc] sm:$0xf]
    %v2450 = vunpack.c.l.b16 %v2442
    %v2451 = vunpack.c.l.b16 %v2443
    %v2452 = vunpack.c.l.b16 %v2444
    %v2453 = vunpack.c.l.b16 %v2445
    %v2454 = vpack.c.b16 %v2451, %v2450
    %v2455 = vpack.c.b16 %v2453, %v2452
    %v2459 = vsel %vm1776, %v2441, 0
    %2461 = vmatpush.bf16.msra.mxu0 0
    %2462 = vmatpush.bf16.msra.mxu0 0
    %2463 = vmatpush.bf16.msra.mxu0 0
    %2464 = vmatpush.bf16.msra.mxu0 0
    %2465 = vmatpush.bf16.msra.mxu0 0
    %2466 = vmatpush.bf16.msra.mxu0 0
    %2467 = vmatpush.bf16.msra.mxu0 %v2455
    %2468 = vmatpush.bf16.msra.mxu0 %v2454
    %2469 = vmatmul.bf16.gmra.mxu0 %v2459
    %v2470 = vpop.f32.mrf.mxu0
    %v2471 = vadd.f32 0.0, %v2470
    %v2472 = vpop.f32.mrf.mxu0
    %2473 = vdwg.mxu0
    %v2474 = vadd.f32 %v2439, %v2471
    %v2475 = vld [vmem:[%s5] sm:$0x1]
    %v2477 = vperm.slane %v2475, 0
    %v2479 = vadd.f32 %v2474, %v2477
    %v2480 = vmax.f32 %v2479, 0.0
    %s2481 = scalar_lea.vmem [#allocation3], 16
    %2482 = vst.msk [vmem:[%s2481] sm:$0xf] %vm1899, %v2480
    %v2483 = vld [vmem:[%s1116] sm:$0xf]
    %v2484 = vpack.c.bf16 %v2483, %v2483
    %v2485 = vld [vmem:[%s4] sm:$0xf]
    %v2486 = vld [vmem:[%s4 + $0x4] sm:$0xf]
    %v2487 = vld [vmem:[%s4 + $0x8] sm:$0xf]
    %v2488 = vld [vmem:[%s4 + $0xc] sm:$0xf]
    %v2489 = vld [vmem:[%s1116 + $0x1] sm:$0xf]
    %v2490 = vpack.c.bf16 %v2489, %v2489
    %v2491 = vld [vmem:[%s1759] sm:$0xf]
    %v2492 = vld [vmem:[%s1759 + $0x4] sm:$0xf]
    %v2493 = vld [vmem:[%s1759 + $0x8] sm:$0xf]
    %v2494 = vld [vmem:[%s1759 + $0xc] sm:$0xf]
    %v2499 = vunpack.c.l.b16 %v2491
    %v2500 = vunpack.c.l.b16 %v2492
    %v2501 = vunpack.c.l.b16 %v2493
    %v2502 = vunpack.c.l.b16 %v2494
    %v2503 = vpack.c.b16 %v2500, %v2499
    %v2504 = vpack.c.b16 %v2502, %v2501
    %v2508 = vsel %vm1776, %v2490, 0
    %2510 = vmatpush.bf16.msra.mxu0 0
    %2511 = vmatpush.bf16.msra.mxu0 0
    %2512 = vmatpush.bf16.msra.mxu0 0
    %2513 = vmatpush.bf16.msra.mxu0 0
    %2514 = vmatpush.bf16.msra.mxu0 0
    %2515 = vmatpush.bf16.msra.mxu0 0
    %2516 = vmatpush.bf16.msra.mxu0 %v2504
    %2517 = vmatpush.bf16.msra.mxu0 %v2503
    %2518 = vmatmul.bf16.gmra.mxu0 %v2508
    %v2519 = vpop.f32.mrf.mxu0
    %v2520 = vadd.f32 0.0, %v2519
    %v2521 = vpop.f32.mrf.mxu0
    %2522 = vdwg.mxu0
    %v2527 = vunpack.c.l.b16 %v2485
    %v2528 = vunpack.c.l.b16 %v2486
    %v2529 = vunpack.c.l.b16 %v2487
    %v2530 = vunpack.c.l.b16 %v2488
    %v2531 = vpack.c.b16 %v2528, %v2527
    %v2532 = vpack.c.b16 %v2530, %v2529
    %v2536 = vsel %vm1776, %v2484, 0
    %2538 = vmatpush.bf16.msra.mxu0 0
    %2539 = vmatpush.bf16.msra.mxu0 0
    %2540 = vmatpush.bf16.msra.mxu0 0
    %2541 = vmatpush.bf16.msra.mxu0 0
    %2542 = vmatpush.bf16.msra.mxu0 0
    %2543 = vmatpush.bf16.msra.mxu0 0
    %2544 = vmatpush.bf16.msra.mxu0 %v2532
    %2545 = vmatpush.bf16.msra.mxu0 %v2531
    %2546 = vmatmul.bf16.gmra.mxu0 %v2536
    %v2547 = vpop.f32.mrf.mxu0
    %v2548 = vadd.f32 %v2520, %v2547
    %v2549 = vpop.f32.mrf.mxu0
    %2550 = vdwg.mxu0
    %v2551 = vld [vmem:[%s1327] sm:$0xf]
    %v2552 = vpack.c.bf16 %v2551, %v2551
    %v2553 = vld [vmem:[%s1823] sm:$0xf]
    %v2554 = vld [vmem:[%s1823 + $0x4] sm:$0xf]
    %v2555 = vld [vmem:[%s1823 + $0x8] sm:$0xf]
    %v2556 = vld [vmem:[%s1823 + $0xc] sm:$0xf]
    %v2561 = vunpack.c.l.b16 %v2553
    %v2562 = vunpack.c.l.b16 %v2554
    %v2563 = vunpack.c.l.b16 %v2555
    %v2564 = vunpack.c.l.b16 %v2556
    %v2565 = vpack.c.b16 %v2562, %v2561
    %v2566 = vpack.c.b16 %v2564, %v2563
    %v2570 = vsel %vm1776, %v2552, 0
    %2572 = vmatpush.bf16.msra.mxu0 0
    %2573 = vmatpush.bf16.msra.mxu0 0
    %2574 = vmatpush.bf16.msra.mxu0 0
    %2575 = vmatpush.bf16.msra.mxu0 0
    %2576 = vmatpush.bf16.msra.mxu0 0
    %2577 = vmatpush.bf16.msra.mxu0 0
    %2578 = vmatpush.bf16.msra.mxu0 %v2566
    %2579 = vmatpush.bf16.msra.mxu0 %v2565
    %2580 = vmatmul.bf16.gmra.mxu0 %v2570
    %v2581 = vpop.f32.mrf.mxu0
    %v2582 = vadd.f32 0.0, %v2581
    %v2583 = vpop.f32.mrf.mxu0
    %2584 = vdwg.mxu0
    %v2585 = vadd.f32 %v2548, %v2582
    %v2586 = vld [vmem:[%s1327 + $0x1] sm:$0xf]
    %v2587 = vpack.c.bf16 %v2586, %v2586
    %v2588 = vld [vmem:[%s1859] sm:$0xf]
    %v2589 = vld [vmem:[%s1859 + $0x4] sm:$0xf]
    %v2590 = vld [vmem:[%s1859 + $0x8] sm:$0xf]
    %v2591 = vld [vmem:[%s1859 + $0xc] sm:$0xf]
    %v2596 = vunpack.c.l.b16 %v2588
    %v2597 = vunpack.c.l.b16 %v2589
    %v2598 = vunpack.c.l.b16 %v2590
    %v2599 = vunpack.c.l.b16 %v2591
    %v2600 = vpack.c.b16 %v2597, %v2596
    %v2601 = vpack.c.b16 %v2599, %v2598
    %v2605 = vsel %vm1776, %v2587, 0
    %2607 = vmatpush.bf16.msra.mxu0 0
    %2608 = vmatpush.bf16.msra.mxu0 0
    %2609 = vmatpush.bf16.msra.mxu0 0
    %2610 = vmatpush.bf16.msra.mxu0 0
    %2611 = vmatpush.bf16.msra.mxu0 0
    %2612 = vmatpush.bf16.msra.mxu0 0
    %2613 = vmatpush.bf16.msra.mxu0 %v2601
    %2614 = vmatpush.bf16.msra.mxu0 %v2600
    %2615 = vmatmul.bf16.gmra.mxu0 %v2605
    %v2616 = vpop.f32.mrf.mxu0
    %v2617 = vadd.f32 0.0, %v2616
    %v2618 = vpop.f32.mrf.mxu0
    %2619 = vdwg.mxu0
    %v2620 = vadd.f32 %v2585, %v2617
    %v2621 = vld [vmem:[%s5] sm:$0x1]
    %v2623 = vperm.slane %v2621, 0
    %v2625 = vadd.f32 %v2620, %v2623
    %v2626 = vmax.f32 %v2625, 0.0
    %2627 = vst.msk [vmem:[%s2481 + $0x4] sm:$0xf] %vm1899, %v2626
    %v2628 = vld [vmem:[%s1327] sm:$0xf]
    %v2629 = vpack.c.bf16 %v2628, %v2628
    %v2630 = vld [vmem:[%s4] sm:$0xf]
    %v2631 = vld [vmem:[%s4 + $0x4] sm:$0xf]
    %v2632 = vld [vmem:[%s4 + $0x8] sm:$0xf]
    %v2633 = vld [vmem:[%s4 + $0xc] sm:$0xf]
    %v2634 = vld [vmem:[%s1327 + $0x1] sm:$0xf]
    %v2635 = vpack.c.bf16 %v2634, %v2634
    %v2636 = vld [vmem:[%s1759] sm:$0xf]
    %v2637 = vld [vmem:[%s1759 + $0x4] sm:$0xf]
    %v2638 = vld [vmem:[%s1759 + $0x8] sm:$0xf]
    %v2639 = vld [vmem:[%s1759 + $0xc] sm:$0xf]
    %v2644 = vunpack.c.l.b16 %v2636
    %v2645 = vunpack.c.l.b16 %v2637
    %v2646 = vunpack.c.l.b16 %v2638
    %v2647 = vunpack.c.l.b16 %v2639
    %v2648 = vpack.c.b16 %v2645, %v2644
    %v2649 = vpack.c.b16 %v2647, %v2646
    %v2653 = vsel %vm1776, %v2635, 0
    %2655 = vmatpush.bf16.msra.mxu0 0
    %2656 = vmatpush.bf16.msra.mxu0 0
    %2657 = vmatpush.bf16.msra.mxu0 0
    %2658 = vmatpush.bf16.msra.mxu0 0
    %2659 = vmatpush.bf16.msra.mxu0 0
    %2660 = vmatpush.bf16.msra.mxu0 0
    %2661 = vmatpush.bf16.msra.mxu0 %v2649
    %2662 = vmatpush.bf16.msra.mxu0 %v2648
    %2663 = vmatmul.bf16.gmra.mxu0 %v2653
    %v2664 = vpop.f32.mrf.mxu0
    %v2665 = vadd.f32 0.0, %v2664
    %v2666 = vpop.f32.mrf.mxu0
    %2667 = vdwg.mxu0
    %v2672 = vunpack.c.l.b16 %v2630
    %v2673 = vunpack.c.l.b16 %v2631
    %v2674 = vunpack.c.l.b16 %v2632
    %v2675 = vunpack.c.l.b16 %v2633
    %v2676 = vpack.c.b16 %v2673, %v2672
    %v2677 = vpack.c.b16 %v2675, %v2674
    %v2681 = vsel %vm1776, %v2629, 0
    %2683 = vmatpush.bf16.msra.mxu0 0
    %2684 = vmatpush.bf16.msra.mxu0 0
    %2685 = vmatpush.bf16.msra.mxu0 0
    %2686 = vmatpush.bf16.msra.mxu0 0
    %2687 = vmatpush.bf16.msra.mxu0 0
    %2688 = vmatpush.bf16.msra.mxu0 0
    %2689 = vmatpush.bf16.msra.mxu0 %v2677
    %2690 = vmatpush.bf16.msra.mxu0 %v2676
    %2691 = vmatmul.bf16.gmra.mxu0 %v2681
    %v2692 = vpop.f32.mrf.mxu0
    %v2693 = vadd.f32 %v2665, %v2692
    %v2694 = vpop.f32.mrf.mxu0
    %2695 = vdwg.mxu0
    %v2696 = vld [vmem:[%s1538] sm:$0xf]
    %v2697 = vpack.c.bf16 %v2696, %v2696
    %v2698 = vld [vmem:[%s1823] sm:$0xf]
    %v2699 = vld [vmem:[%s1823 + $0x4] sm:$0xf]
    %v2700 = vld [vmem:[%s1823 + $0x8] sm:$0xf]
    %v2701 = vld [vmem:[%s1823 + $0xc] sm:$0xf]
    %v2706 = vunpack.c.l.b16 %v2698
    %v2707 = vunpack.c.l.b16 %v2699
    %v2708 = vunpack.c.l.b16 %v2700
    %v2709 = vunpack.c.l.b16 %v2701
    %v2710 = vpack.c.b16 %v2707, %v2706
    %v2711 = vpack.c.b16 %v2709, %v2708
    %v2715 = vsel %vm1776, %v2697, 0
    %2717 = vmatpush.bf16.msra.mxu0 0
    %2718 = vmatpush.bf16.msra.mxu0 0
    %2719 = vmatpush.bf16.msra.mxu0 0
    %2720 = vmatpush.bf16.msra.mxu0 0
    %2721 = vmatpush.bf16.msra.mxu0 0
    %2722 = vmatpush.bf16.msra.mxu0 0
    %2723 = vmatpush.bf16.msra.mxu0 %v2711
    %2724 = vmatpush.bf16.msra.mxu0 %v2710
    %2725 = vmatmul.bf16.gmra.mxu0 %v2715
    %v2726 = vpop.f32.mrf.mxu0
    %v2727 = vadd.f32 0.0, %v2726
    %v2728 = vpop.f32.mrf.mxu0
    %2729 = vdwg.mxu0
    %v2730 = vadd.f32 %v2693, %v2727
    %v2731 = vld [vmem:[%s1538 + $0x1] sm:$0xf]
    %v2732 = vpack.c.bf16 %v2731, %v2731
    %v2733 = vld [vmem:[%s1859] sm:$0xf]
    %v2734 = vld [vmem:[%s1859 + $0x4] sm:$0xf]
    %v2735 = vld [vmem:[%s1859 + $0x8] sm:$0xf]
    %v2736 = vld [vmem:[%s1859 + $0xc] sm:$0xf]
    %v2741 = vunpack.c.l.b16 %v2733
    %v2742 = vunpack.c.l.b16 %v2734
    %v2743 = vunpack.c.l.b16 %v2735
    %v2744 = vunpack.c.l.b16 %v2736
    %v2745 = vpack.c.b16 %v2742, %v2741
    %v2746 = vpack.c.b16 %v2744, %v2743
    %v2750 = vsel %vm1776, %v2732, 0
    %2752 = vmatpush.bf16.msra.mxu0 0
    %2753 = vmatpush.bf16.msra.mxu0 0
    %2754 = vmatpush.bf16.msra.mxu0 0
    %2755 = vmatpush.bf16.msra.mxu0 0
    %2756 = vmatpush.bf16.msra.mxu0 0
    %2757 = vmatpush.bf16.msra.mxu0 0
    %2758 = vmatpush.bf16.msra.mxu0 %v2746
    %2759 = vmatpush.bf16.msra.mxu0 %v2745
    %2760 = vmatmul.bf16.gmra.mxu0 %v2750
    %v2761 = vpop.f32.mrf.mxu0
    %v2762 = vadd.f32 0.0, %v2761
    %v2763 = vpop.f32.mrf.mxu0
    %2764 = vdwg.mxu0
    %v2765 = vadd.f32 %v2730, %v2762
    %v2766 = vld [vmem:[%s5] sm:$0x1]
    %v2768 = vperm.slane %v2766, 0
    %v2770 = vadd.f32 %v2765, %v2768
    %v2771 = vmax.f32 %v2770, 0.0
    %2772 = vst.msk [vmem:[%s2481 + $0x8] sm:$0xf] %vm1899, %v2771
    %v2773 = vld [vmem:[%s1538] sm:$0xf]
    %v2774 = vpack.c.bf16 %v2773, %v2773
    %v2775 = vld [vmem:[%s4] sm:$0xf]
    %v2776 = vld [vmem:[%s4 + $0x4] sm:$0xf]
    %v2777 = vld [vmem:[%s4 + $0x8] sm:$0xf]
    %v2778 = vld [vmem:[%s4 + $0xc] sm:$0xf]
    %v2779 = vld [vmem:[%s1538 + $0x1] sm:$0xf]
    %v2780 = vpack.c.bf16 %v2779, %v2779
    %v2781 = vld [vmem:[%s1759] sm:$0xf]
    %v2782 = vld [vmem:[%s1759 + $0x4] sm:$0xf]
    %v2783 = vld [vmem:[%s1759 + $0x8] sm:$0xf]
    %v2784 = vld [vmem:[%s1759 + $0xc] sm:$0xf]
    %v2789 = vunpack.c.l.b16 %v2781
    %v2790 = vunpack.c.l.b16 %v2782
    %v2791 = vunpack.c.l.b16 %v2783
    %v2792 = vunpack.c.l.b16 %v2784
    %v2793 = vpack.c.b16 %v2790, %v2789
    %v2794 = vpack.c.b16 %v2792, %v2791
    %v2798 = vsel %vm1776, %v2780, 0
    %2800 = vmatpush.bf16.msra.mxu0 0
    %2801 = vmatpush.bf16.msra.mxu0 0
    %2802 = vmatpush.bf16.msra.mxu0 0
    %2803 = vmatpush.bf16.msra.mxu0 0
    %2804 = vmatpush.bf16.msra.mxu0 0
    %2805 = vmatpush.bf16.msra.mxu0 0
    %2806 = vmatpush.bf16.msra.mxu0 %v2794
    %2807 = vmatpush.bf16.msra.mxu0 %v2793
    %2808 = vmatmul.bf16.gmra.mxu0 %v2798
    %v2809 = vpop.f32.mrf.mxu0
    %v2810 = vadd.f32 0.0, %v2809
    %v2811 = vpop.f32.mrf.mxu0
    %2812 = vdwg.mxu0
    %v2817 = vunpack.c.l.b16 %v2775
    %v2818 = vunpack.c.l.b16 %v2776
    %v2819 = vunpack.c.l.b16 %v2777
    %v2820 = vunpack.c.l.b16 %v2778
    %v2821 = vpack.c.b16 %v2818, %v2817
    %v2822 = vpack.c.b16 %v2820, %v2819
    %v2826 = vsel %vm1776, %v2774, 0
    %2828 = vmatpush.bf16.msra.mxu0 0
    %2829 = vmatpush.bf16.msra.mxu0 0
    %2830 = vmatpush.bf16.msra.mxu0 0
    %2831 = vmatpush.bf16.msra.mxu0 0
    %2832 = vmatpush.bf16.msra.mxu0 0
    %2833 = vmatpush.bf16.msra.mxu0 0
    %2834 = vmatpush.bf16.msra.mxu0 %v2822
    %2835 = vmatpush.bf16.msra.mxu0 %v2821
    %2836 = vmatmul.bf16.gmra.mxu0 %v2826
    %v2837 = vpop.f32.mrf.mxu0
    %v2838 = vadd.f32 %v2810, %v2837
    %v2839 = vpop.f32.mrf.mxu0
    %2840 = vdwg.mxu0
    %v2841 = vld [vmem:[%s1749] sm:$0xf]
    %v2842 = vpack.c.bf16 %v2841, %v2841
    %v2843 = vld [vmem:[%s1823] sm:$0xf]
    %v2844 = vld [vmem:[%s1823 + $0x4] sm:$0xf]
    %v2845 = vld [vmem:[%s1823 + $0x8] sm:$0xf]
    %v2846 = vld [vmem:[%s1823 + $0xc] sm:$0xf]
    %v2851 = vunpack.c.l.b16 %v2843
    %v2852 = vunpack.c.l.b16 %v2844
    %v2853 = vunpack.c.l.b16 %v2845
    %v2854 = vunpack.c.l.b16 %v2846
    %v2855 = vpack.c.b16 %v2852, %v2851
    %v2856 = vpack.c.b16 %v2854, %v2853
    %v2860 = vsel %vm1776, %v2842, 0
    %2862 = vmatpush.bf16.msra.mxu0 0
    %2863 = vmatpush.bf16.msra.mxu0 0
    %2864 = vmatpush.bf16.msra.mxu0 0
    %2865 = vmatpush.bf16.msra.mxu0 0
    %2866 = vmatpush.bf16.msra.mxu0 0
    %2867 = vmatpush.bf16.msra.mxu0 0
    %2868 = vmatpush.bf16.msra.mxu0 %v2856
    %2869 = vmatpush.bf16.msra.mxu0 %v2855
    %2870 = vmatmul.bf16.gmra.mxu0 %v2860
    %v2871 = vpop.f32.mrf.mxu0
    %v2872 = vadd.f32 0.0, %v2871
    %v2873 = vpop.f32.mrf.mxu0
    %2874 = vdwg.mxu0
    %v2875 = vadd.f32 %v2838, %v2872
    %v2876 = vld [vmem:[%s1749 + $0x1] sm:$0xf]
    %v2877 = vpack.c.bf16 %v2876, %v2876
    %v2878 = vld [vmem:[%s1859] sm:$0xf]
    %v2879 = vld [vmem:[%s1859 + $0x4] sm:$0xf]
    %v2880 = vld [vmem:[%s1859 + $0x8] sm:$0xf]
    %v2881 = vld [vmem:[%s1859 + $0xc] sm:$0xf]
    %v2886 = vunpack.c.l.b16 %v2878
    %v2887 = vunpack.c.l.b16 %v2879
    %v2888 = vunpack.c.l.b16 %v2880
    %v2889 = vunpack.c.l.b16 %v2881
    %v2890 = vpack.c.b16 %v2887, %v2886
    %v2891 = vpack.c.b16 %v2889, %v2888
    %v2895 = vsel %vm1776, %v2877, 0
    %2897 = vmatpush.bf16.msra.mxu0 0
    %2898 = vmatpush.bf16.msra.mxu0 0
    %2899 = vmatpush.bf16.msra.mxu0 0
    %2900 = vmatpush.bf16.msra.mxu0 0
    %2901 = vmatpush.bf16.msra.mxu0 0
    %2902 = vmatpush.bf16.msra.mxu0 0
    %2903 = vmatpush.bf16.msra.mxu0 %v2891
    %2904 = vmatpush.bf16.msra.mxu0 %v2890
    %2905 = vmatmul.bf16.gmra.mxu0 %v2895
    %v2906 = vpop.f32.mrf.mxu0
    %v2907 = vadd.f32 0.0, %v2906
    %v2908 = vpop.f32.mrf.mxu0
    %2909 = vdwg.mxu0
    %v2910 = vadd.f32 %v2875, %v2907
    %v2911 = vld [vmem:[%s5] sm:$0x1]
    %v2913 = vperm.slane %v2911, 0
    %v2915 = vadd.f32 %v2910, %v2913
    %v2916 = vmax.f32 %v2915, 0.0
    %2917 = vst.msk [vmem:[%s2481 + $0xc] sm:$0xf] %vm1899, %v2916
    %v2918 = vld [vmem:[%s1] sm:$0x3]
    %v2919 = vpack.c.bf16 %v2918, %v2918
    %v2920 = vld [vmem:[%s7] sm:$0xf]
    %v2921 = vld [vmem:[#allocation3] sm:$0x1]
    %v2922 = vld [vmem:[#allocation3 + $0x10] sm:$0x1]
    %v2923 = vpack.c.bf16 %v2921, %v2921
    %v2924 = vpack.c.bf16 %v2922, %v2922
    %v2925 = vld [vmem:[%s6] sm:$0xf]
    %v2926 = vld [vmem:[%s6 + $0x4] sm:$0xf]
    %v2929 = vunpack.c.l.b16 %v2923
    %v2930 = vunpack.c.l.b16 %v2924
    %v2931 = vrot.slane %v2930, 7
    %vm2932 = vcmask 1041409
    %v2933 = vsel %vm2932, %v2931, %v2929
    %v2934 = vpack.c.b16 %v2933, %v2933
    %v2937 = vunpack.c.l.b16 %v2925
    %v2938 = vunpack.c.l.b16 %v2926
    %v2939 = vpack.c.b16 %v2938, %v2937
    %vm2941 = vcmask 130048
    %v2943 = vsel %vm2941, %v2934, 0
    %2945 = vmatpush.bf16.msra.mxu0 0
    %2946 = vmatpush.bf16.msra.mxu0 0
    %2947 = vmatpush.bf16.msra.mxu0 0
    %2948 = vmatpush.bf16.msra.mxu0 0
    %2949 = vmatpush.bf16.msra.mxu0 0
    %2950 = vmatpush.bf16.msra.mxu0 0
    %2951 = vmatpush.bf16.msra.mxu0 0
    %2952 = vmatpush.bf16.msra.mxu0 %v2939
    %2953 = vmatmul.bf16.gmra.mxu0 %v2943
    %v2954 = vpop.f32.mrf.mxu0
    %v2955 = vadd.f32 0.0, %v2954
    %v2956 = vpop.f32.mrf.mxu0
    %2957 = vdwg.mxu0
    %vm2958 = vcmask 64512
    %v2960 = vsel %vm2958, %v2919, 0
    %vm2962 = vcmask 1043456
    %v2964 = vsel %vm2962, %v2920, 0
    %2966 = vmatpush.bf16.msra.mxu0 0
    %2967 = vmatpush.bf16.msra.mxu0 0
    %2968 = vmatpush.bf16.msra.mxu0 0
    %2969 = vmatpush.bf16.msra.mxu0 0
    %2970 = vmatpush.bf16.msra.mxu0 0
    %2971 = vmatpush.bf16.msra.mxu0 0
    %2972 = vmatpush.bf16.msra.mxu0 0
    %2973 = vmatpush.bf16.msra.mxu0 %v2964
    %2974 = vmatmul.bf16.gmra.mxu0 %v2960
    %v2975 = vpop.f32.mrf.mxu0
    %v2976 = vadd.f32 %v2955, %v2975
    %v2977 = vpop.f32.mrf.mxu0
    %2978 = vdwg.mxu0
    %v2979 = vld [vmem:[#allocation3 + $0x1] sm:$0x1]
    %v2980 = vld [vmem:[#allocation3 + $0x11] sm:$0x1]
    %v2981 = vpack.c.bf16 %v2979, %v2979
    %v2982 = vpack.c.bf16 %v2980, %v2980
    %s2983 = scalar_lea.vmem %s6, 8
    %v2984 = vld [vmem:[%s2983] sm:$0xf]
    %v2985 = vld [vmem:[%s2983 + $0x4] sm:$0xf]
    %v2988 = vunpack.c.l.b16 %v2981
    %v2989 = vunpack.c.l.b16 %v2982
    %v2990 = vrot.slane %v2989, 7
    %v2991 = vsel %vm2932, %v2990, %v2988
    %v2992 = vpack.c.b16 %v2991, %v2991
    %v2995 = vunpack.c.l.b16 %v2984
    %v2996 = vunpack.c.l.b16 %v2985
    %v2997 = vpack.c.b16 %v2996, %v2995
    %v3000 = vsel %vm2941, %v2992, 0
    %3002 = vmatpush.bf16.msra.mxu0 0
    %3003 = vmatpush.bf16.msra.mxu0 0
    %3004 = vmatpush.bf16.msra.mxu0 0
    %3005 = vmatpush.bf16.msra.mxu0 0
    %3006 = vmatpush.bf16.msra.mxu0 0
    %3007 = vmatpush.bf16.msra.mxu0 0
    %3008 = vmatpush.bf16.msra.mxu0 0
    %3009 = vmatpush.bf16.msra.mxu0 %v2997
    %3010 = vmatmul.bf16.gmra.mxu0 %v3000
    %v3011 = vpop.f32.mrf.mxu0
    %v3012 = vadd.f32 0.0, %v3011
    %v3013 = vpop.f32.mrf.mxu0
    %3014 = vdwg.mxu0
    %v3015 = vadd.f32 %v2976, %v3012
    %v3016 = vld [vmem:[#allocation3 + $0x2] sm:$0x1]
    %v3017 = vld [vmem:[#allocation3 + $0x12] sm:$0x1]
    %v3018 = vpack.c.bf16 %v3016, %v3016
    %v3019 = vpack.c.bf16 %v3017, %v3017
    %s3020 = scalar_lea.vmem %s6, 16
    %v3021 = vld [vmem:[%s3020] sm:$0xf]
    %v3022 = vld [vmem:[%s3020 + $0x4] sm:$0xf]
    %v3025 = vunpack.c.l.b16 %v3018
    %v3026 = vunpack.c.l.b16 %v3019
    %v3027 = vrot.slane %v3026, 7
    %v3028 = vsel %vm2932, %v3027, %v3025
    %v3029 = vpack.c.b16 %v3028, %v3028
    %v3032 = vunpack.c.l.b16 %v3021
    %v3033 = vunpack.c.l.b16 %v3022
    %v3034 = vpack.c.b16 %v3033, %v3032
    %v3037 = vsel %vm2941, %v3029, 0
    %3039 = vmatpush.bf16.msra.mxu0 0
    %3040 = vmatpush.bf16.msra.mxu0 0
    %3041 = vmatpush.bf16.msra.mxu0 0
    %3042 = vmatpush.bf16.msra.mxu0 0
    %3043 = vmatpush.bf16.msra.mxu0 0
    %3044 = vmatpush.bf16.msra.mxu0 0
    %3045 = vmatpush.bf16.msra.mxu0 0
    %3046 = vmatpush.bf16.msra.mxu0 %v3034
    %3047 = vmatmul.bf16.gmra.mxu0 %v3037
    %v3048 = vpop.f32.mrf.mxu0
    %v3049 = vadd.f32 0.0, %v3048
    %v3050 = vpop.f32.mrf.mxu0
    %3051 = vdwg.mxu0
    %v3052 = vadd.f32 %v3015, %v3049
    %v3053 = vld [vmem:[#allocation3 + $0x3] sm:$0x1]
    %v3054 = vld [vmem:[#allocation3 + $0x13] sm:$0x1]
    %v3055 = vpack.c.bf16 %v3053, %v3053
    %v3056 = vpack.c.bf16 %v3054, %v3054
    %s3057 = scalar_lea.vmem %s6, 24
    %v3058 = vld [vmem:[%s3057] sm:$0xf]
    %v3059 = vld [vmem:[%s3057 + $0x4] sm:$0xf]
    %v3062 = vunpack.c.l.b16 %v3055
    %v3063 = vunpack.c.l.b16 %v3056
    %v3064 = vrot.slane %v3063, 7
    %v3065 = vsel %vm2932, %v3064, %v3062
    %v3066 = vpack.c.b16 %v3065, %v3065
    %v3069 = vunpack.c.l.b16 %v3058
    %v3070 = vunpack.c.l.b16 %v3059
    %v3071 = vpack.c.b16 %v3070, %v3069
    %v3074 = vsel %vm2941, %v3066, 0
    %3076 = vmatpush.bf16.msra.mxu0 0
    %3077 = vmatpush.bf16.msra.mxu0 0
    %3078 = vmatpush.bf16.msra.mxu0 0
    %3079 = vmatpush.bf16.msra.mxu0 0
    %3080 = vmatpush.bf16.msra.mxu0 0
    %3081 = vmatpush.bf16.msra.mxu0 0
    %3082 = vmatpush.bf16.msra.mxu0 0
    %3083 = vmatpush.bf16.msra.mxu0 %v3071
    %3084 = vmatmul.bf16.gmra.mxu0 %v3074
    %v3085 = vpop.f32.mrf.mxu0
    %v3086 = vadd.f32 0.0, %v3085
    %v3087 = vpop.f32.mrf.mxu0
    %3088 = vdwg.mxu0
    %v3089 = vadd.f32 %v3052, %v3086
    %v3090 = vld [vmem:[#allocation3 + $0x4] sm:$0x1]
    %v3091 = vld [vmem:[#allocation3 + $0x14] sm:$0x1]
    %v3092 = vpack.c.bf16 %v3090, %v3090
    %v3093 = vpack.c.bf16 %v3091, %v3091
    %s3094 = scalar_lea.vmem %s6, 32
    %v3095 = vld [vmem:[%s3094] sm:$0xf]
    %v3096 = vld [vmem:[%s3094 + $0x4] sm:$0xf]
    %v3099 = vunpack.c.l.b16 %v3092
    %v3100 = vunpack.c.l.b16 %v3093
    %v3101 = vrot.slane %v3100, 7
    %v3102 = vsel %vm2932, %v3101, %v3099
    %v3103 = vpack.c.b16 %v3102, %v3102
    %v3106 = vunpack.c.l.b16 %v3095
    %v3107 = vunpack.c.l.b16 %v3096
    %v3108 = vpack.c.b16 %v3107, %v3106
    %v3111 = vsel %vm2941, %v3103, 0
    %3113 = vmatpush.bf16.msra.mxu0 0
    %3114 = vmatpush.bf16.msra.mxu0 0
    %3115 = vmatpush.bf16.msra.mxu0 0
    %3116 = vmatpush.bf16.msra.mxu0 0
    %3117 = vmatpush.bf16.msra.mxu0 0
    %3118 = vmatpush.bf16.msra.mxu0 0
    %3119 = vmatpush.bf16.msra.mxu0 0
    %3120 = vmatpush.bf16.msra.mxu0 %v3108
    %3121 = vmatmul.bf16.gmra.mxu0 %v3111
    %v3122 = vpop.f32.mrf.mxu0
    %v3123 = vadd.f32 0.0, %v3122
    %v3124 = vpop.f32.mrf.mxu0
    %3125 = vdwg.mxu0
    %v3126 = vadd.f32 %v3089, %v3123
    %v3127 = vld [vmem:[#allocation3 + $0x5] sm:$0x1]
    %v3128 = vld [vmem:[#allocation3 + $0x15] sm:$0x1]
    %v3129 = vpack.c.bf16 %v3127, %v3127
    %v3130 = vpack.c.bf16 %v3128, %v3128
    %s3131 = scalar_lea.vmem %s6, 40
    %v3132 = vld [vmem:[%s3131] sm:$0xf]
    %v3133 = vld [vmem:[%s3131 + $0x4] sm:$0xf]
    %v3136 = vunpack.c.l.b16 %v3129
    %v3137 = vunpack.c.l.b16 %v3130
    %v3138 = vrot.slane %v3137, 7
    %v3139 = vsel %vm2932, %v3138, %v3136
    %v3140 = vpack.c.b16 %v3139, %v3139
    %v3143 = vunpack.c.l.b16 %v3132
    %v3144 = vunpack.c.l.b16 %v3133
    %v3145 = vpack.c.b16 %v3144, %v3143
    %v3148 = vsel %vm2941, %v3140, 0
    %3150 = vmatpush.bf16.msra.mxu0 0
    %3151 = vmatpush.bf16.msra.mxu0 0
    %3152 = vmatpush.bf16.msra.mxu0 0
    %3153 = vmatpush.bf16.msra.mxu0 0
    %3154 = vmatpush.bf16.msra.mxu0 0
    %3155 = vmatpush.bf16.msra.mxu0 0
    %3156 = vmatpush.bf16.msra.mxu0 0
    %3157 = vmatpush.bf16.msra.mxu0 %v3145
    %3158 = vmatmul.bf16.gmra.mxu0 %v3148
    %v3159 = vpop.f32.mrf.mxu0
    %v3160 = vadd.f32 0.0, %v3159
    %v3161 = vpop.f32.mrf.mxu0
    %3162 = vdwg.mxu0
    %v3163 = vadd.f32 %v3126, %v3160
    %v3164 = vld [vmem:[#allocation3 + $0x6] sm:$0x1]
    %v3165 = vld [vmem:[#allocation3 + $0x16] sm:$0x1]
    %v3166 = vpack.c.bf16 %v3164, %v3164
    %v3167 = vpack.c.bf16 %v3165, %v3165
    %s3168 = scalar_lea.vmem %s6, 48
    %v3169 = vld [vmem:[%s3168] sm:$0xf]
    %v3170 = vld [vmem:[%s3168 + $0x4] sm:$0xf]
    %v3173 = vunpack.c.l.b16 %v3166
    %v3174 = vunpack.c.l.b16 %v3167
    %v3175 = vrot.slane %v3174, 7
    %v3176 = vsel %vm2932, %v3175, %v3173
    %v3177 = vpack.c.b16 %v3176, %v3176
    %v3180 = vunpack.c.l.b16 %v3169
    %v3181 = vunpack.c.l.b16 %v3170
    %v3182 = vpack.c.b16 %v3181, %v3180
    %v3185 = vsel %vm2941, %v3177, 0
    %3187 = vmatpush.bf16.msra.mxu0 0
    %3188 = vmatpush.bf16.msra.mxu0 0
    %3189 = vmatpush.bf16.msra.mxu0 0
    %3190 = vmatpush.bf16.msra.mxu0 0
    %3191 = vmatpush.bf16.msra.mxu0 0
    %3192 = vmatpush.bf16.msra.mxu0 0
    %3193 = vmatpush.bf16.msra.mxu0 0
    %3194 = vmatpush.bf16.msra.mxu0 %v3182
    %3195 = vmatmul.bf16.gmra.mxu0 %v3185
    %v3196 = vpop.f32.mrf.mxu0
    %v3197 = vadd.f32 0.0, %v3196
    %v3198 = vpop.f32.mrf.mxu0
    %3199 = vdwg.mxu0
    %v3200 = vadd.f32 %v3163, %v3197
    %v3201 = vld [vmem:[#allocation3 + $0x7] sm:$0x1]
    %v3202 = vld [vmem:[#allocation3 + $0x17] sm:$0x1]
    %v3203 = vpack.c.bf16 %v3201, %v3201
    %v3204 = vpack.c.bf16 %v3202, %v3202
    %s3205 = scalar_lea.vmem %s6, 56
    %v3206 = vld [vmem:[%s3205] sm:$0xf]
    %v3207 = vld [vmem:[%s3205 + $0x4] sm:$0xf]
    %v3210 = vunpack.c.l.b16 %v3203
    %v3211 = vunpack.c.l.b16 %v3204
    %v3212 = vrot.slane %v3211, 7
    %v3213 = vsel %vm2932, %v3212, %v3210
    %v3214 = vpack.c.b16 %v3213, %v3213
    %v3217 = vunpack.c.l.b16 %v3206
    %v3218 = vunpack.c.l.b16 %v3207
    %v3219 = vpack.c.b16 %v3218, %v3217
    %v3222 = vsel %vm2941, %v3214, 0
    %3224 = vmatpush.bf16.msra.mxu0 0
    %3225 = vmatpush.bf16.msra.mxu0 0
    %3226 = vmatpush.bf16.msra.mxu0 0
    %3227 = vmatpush.bf16.msra.mxu0 0
    %3228 = vmatpush.bf16.msra.mxu0 0
    %3229 = vmatpush.bf16.msra.mxu0 0
    %3230 = vmatpush.bf16.msra.mxu0 0
    %3231 = vmatpush.bf16.msra.mxu0 %v3219
    %3232 = vmatmul.bf16.gmra.mxu0 %v3222
    %v3233 = vpop.f32.mrf.mxu0
    %v3234 = vadd.f32 0.0, %v3233
    %v3235 = vpop.f32.mrf.mxu0
    %3236 = vdwg.mxu0
    %v3237 = vadd.f32 %v3200, %v3234
    %v3238 = vld [vmem:[#allocation3 + $0x8] sm:$0x1]
    %v3239 = vld [vmem:[#allocation3 + $0x18] sm:$0x1]
    %v3240 = vpack.c.bf16 %v3238, %v3238
    %v3241 = vpack.c.bf16 %v3239, %v3239
    %s3242 = scalar_lea.vmem %s6, 64
    %v3243 = vld [vmem:[%s3242] sm:$0xf]
    %v3244 = vld [vmem:[%s3242 + $0x4] sm:$0xf]
    %v3247 = vunpack.c.l.b16 %v3240
    %v3248 = vunpack.c.l.b16 %v3241
    %v3249 = vrot.slane %v3248, 7
    %v3250 = vsel %vm2932, %v3249, %v3247
    %v3251 = vpack.c.b16 %v3250, %v3250
    %v3254 = vunpack.c.l.b16 %v3243
    %v3255 = vunpack.c.l.b16 %v3244
    %v3256 = vpack.c.b16 %v3255, %v3254
    %v3259 = vsel %vm2941, %v3251, 0
    %3261 = vmatpush.bf16.msra.mxu0 0
    %3262 = vmatpush.bf16.msra.mxu0 0
    %3263 = vmatpush.bf16.msra.mxu0 0
    %3264 = vmatpush.bf16.msra.mxu0 0
    %3265 = vmatpush.bf16.msra.mxu0 0
    %3266 = vmatpush.bf16.msra.mxu0 0
    %3267 = vmatpush.bf16.msra.mxu0 0
    %3268 = vmatpush.bf16.msra.mxu0 %v3256
    %3269 = vmatmul.bf16.gmra.mxu0 %v3259
    %v3270 = vpop.f32.mrf.mxu0
    %v3271 = vadd.f32 0.0, %v3270
    %v3272 = vpop.f32.mrf.mxu0
    %3273 = vdwg.mxu0
    %v3274 = vadd.f32 %v3237, %v3271
    %v3275 = vld [vmem:[#allocation3 + $0x9] sm:$0x1]
    %v3276 = vld [vmem:[#allocation3 + $0x19] sm:$0x1]
    %v3277 = vpack.c.bf16 %v3275, %v3275
    %v3278 = vpack.c.bf16 %v3276, %v3276
    %s3279 = scalar_lea.vmem %s6, 72
    %v3280 = vld [vmem:[%s3279] sm:$0xf]
    %v3281 = vld [vmem:[%s3279 + $0x4] sm:$0xf]
    %v3284 = vunpack.c.l.b16 %v3277
    %v3285 = vunpack.c.l.b16 %v3278
    %v3286 = vrot.slane %v3285, 7
    %v3287 = vsel %vm2932, %v3286, %v3284
    %v3288 = vpack.c.b16 %v3287, %v3287
    %v3291 = vunpack.c.l.b16 %v3280
    %v3292 = vunpack.c.l.b16 %v3281
    %v3293 = vpack.c.b16 %v3292, %v3291
    %v3296 = vsel %vm2941, %v3288, 0
    %3298 = vmatpush.bf16.msra.mxu0 0
    %3299 = vmatpush.bf16.msra.mxu0 0
    %3300 = vmatpush.bf16.msra.mxu0 0
    %3301 = vmatpush.bf16.msra.mxu0 0
    %3302 = vmatpush.bf16.msra.mxu0 0
    %3303 = vmatpush.bf16.msra.mxu0 0
    %3304 = vmatpush.bf16.msra.mxu0 0
    %3305 = vmatpush.bf16.msra.mxu0 %v3293
    %3306 = vmatmul.bf16.gmra.mxu0 %v3296
    %v3307 = vpop.f32.mrf.mxu0
    %v3308 = vadd.f32 0.0, %v3307
    %v3309 = vpop.f32.mrf.mxu0
    %3310 = vdwg.mxu0
    %v3311 = vadd.f32 %v3274, %v3308
    %v3312 = vld [vmem:[#allocation3 + $0xa] sm:$0x1]
    %v3313 = vld [vmem:[#allocation3 + $0x1a] sm:$0x1]
    %v3314 = vpack.c.bf16 %v3312, %v3312
    %v3315 = vpack.c.bf16 %v3313, %v3313
    %s3316 = scalar_lea.vmem %s6, 80
    %v3317 = vld [vmem:[%s3316] sm:$0xf]
    %v3318 = vld [vmem:[%s3316 + $0x4] sm:$0xf]
    %v3321 = vunpack.c.l.b16 %v3314
    %v3322 = vunpack.c.l.b16 %v3315
    %v3323 = vrot.slane %v3322, 7
    %v3324 = vsel %vm2932, %v3323, %v3321
    %v3325 = vpack.c.b16 %v3324, %v3324
    %v3328 = vunpack.c.l.b16 %v3317
    %v3329 = vunpack.c.l.b16 %v3318
    %v3330 = vpack.c.b16 %v3329, %v3328
    %v3333 = vsel %vm2941, %v3325, 0
    %3335 = vmatpush.bf16.msra.mxu0 0
    %3336 = vmatpush.bf16.msra.mxu0 0
    %3337 = vmatpush.bf16.msra.mxu0 0
    %3338 = vmatpush.bf16.msra.mxu0 0
    %3339 = vmatpush.bf16.msra.mxu0 0
    %3340 = vmatpush.bf16.msra.mxu0 0
    %3341 = vmatpush.bf16.msra.mxu0 0
    %3342 = vmatpush.bf16.msra.mxu0 %v3330
    %3343 = vmatmul.bf16.gmra.mxu0 %v3333
    %v3344 = vpop.f32.mrf.mxu0
    %v3345 = vadd.f32 0.0, %v3344
    %v3346 = vpop.f32.mrf.mxu0
    %3347 = vdwg.mxu0
    %v3348 = vadd.f32 %v3311, %v3345
    %v3349 = vld [vmem:[#allocation3 + $0xb] sm:$0x1]
    %v3350 = vld [vmem:[#allocation3 + $0x1b] sm:$0x1]
    %v3351 = vpack.c.bf16 %v3349, %v3349
    %v3352 = vpack.c.bf16 %v3350, %v3350
    %s3353 = scalar_lea.vmem %s6, 88
    %v3354 = vld [vmem:[%s3353] sm:$0xf]
    %v3355 = vld [vmem:[%s3353 + $0x4] sm:$0xf]
    %v3358 = vunpack.c.l.b16 %v3351
    %v3359 = vunpack.c.l.b16 %v3352
    %v3360 = vrot.slane %v3359, 7
    %v3361 = vsel %vm2932, %v3360, %v3358
    %v3362 = vpack.c.b16 %v3361, %v3361
    %v3365 = vunpack.c.l.b16 %v3354
    %v3366 = vunpack.c.l.b16 %v3355
    %v3367 = vpack.c.b16 %v3366, %v3365
    %v3370 = vsel %vm2941, %v3362, 0
    %3372 = vmatpush.bf16.msra.mxu0 0
    %3373 = vmatpush.bf16.msra.mxu0 0
    %3374 = vmatpush.bf16.msra.mxu0 0
    %3375 = vmatpush.bf16.msra.mxu0 0
    %3376 = vmatpush.bf16.msra.mxu0 0
    %3377 = vmatpush.bf16.msra.mxu0 0
    %3378 = vmatpush.bf16.msra.mxu0 0
    %3379 = vmatpush.bf16.msra.mxu0 %v3367
    %3380 = vmatmul.bf16.gmra.mxu0 %v3370
    %v3381 = vpop.f32.mrf.mxu0
    %v3382 = vadd.f32 0.0, %v3381
    %v3383 = vpop.f32.mrf.mxu0
    %3384 = vdwg.mxu0
    %v3385 = vadd.f32 %v3348, %v3382
    %v3386 = vld [vmem:[#allocation3 + $0xc] sm:$0x1]
    %v3387 = vld [vmem:[#allocation3 + $0x1c] sm:$0x1]
    %v3388 = vpack.c.bf16 %v3386, %v3386
    %v3389 = vpack.c.bf16 %v3387, %v3387
    %s3390 = scalar_lea.vmem %s6, 96
    %v3391 = vld [vmem:[%s3390] sm:$0xf]
    %v3392 = vld [vmem:[%s3390 + $0x4] sm:$0xf]
    %v3395 = vunpack.c.l.b16 %v3388
    %v3396 = vunpack.c.l.b16 %v3389
    %v3397 = vrot.slane %v3396, 7
    %v3398 = vsel %vm2932, %v3397, %v3395
    %v3399 = vpack.c.b16 %v3398, %v3398
    %v3402 = vunpack.c.l.b16 %v3391
    %v3403 = vunpack.c.l.b16 %v3392
    %v3404 = vpack.c.b16 %v3403, %v3402
    %v3407 = vsel %vm2941, %v3399, 0
    %3409 = vmatpush.bf16.msra.mxu0 0
    %3410 = vmatpush.bf16.msra.mxu0 0
    %3411 = vmatpush.bf16.msra.mxu0 0
    %3412 = vmatpush.bf16.msra.mxu0 0
    %3413 = vmatpush.bf16.msra.mxu0 0
    %3414 = vmatpush.bf16.msra.mxu0 0
    %3415 = vmatpush.bf16.msra.mxu0 0
    %3416 = vmatpush.bf16.msra.mxu0 %v3404
    %3417 = vmatmul.bf16.gmra.mxu0 %v3407
    %v3418 = vpop.f32.mrf.mxu0
    %v3419 = vadd.f32 0.0, %v3418
    %v3420 = vpop.f32.mrf.mxu0
    %3421 = vdwg.mxu0
    %v3422 = vadd.f32 %v3385, %v3419
    %v3423 = vld [vmem:[#allocation3 + $0xd] sm:$0x1]
    %v3424 = vld [vmem:[#allocation3 + $0x1d] sm:$0x1]
    %v3425 = vpack.c.bf16 %v3423, %v3423
    %v3426 = vpack.c.bf16 %v3424, %v3424
    %s3427 = scalar_lea.vmem %s6, 104
    %v3428 = vld [vmem:[%s3427] sm:$0xf]
    %v3429 = vld [vmem:[%s3427 + $0x4] sm:$0xf]
    %v3432 = vunpack.c.l.b16 %v3425
    %v3433 = vunpack.c.l.b16 %v3426
    %v3434 = vrot.slane %v3433, 7
    %v3435 = vsel %vm2932, %v3434, %v3432
    %v3436 = vpack.c.b16 %v3435, %v3435
    %v3439 = vunpack.c.l.b16 %v3428
    %v3440 = vunpack.c.l.b16 %v3429
    %v3441 = vpack.c.b16 %v3440, %v3439
    %v3444 = vsel %vm2941, %v3436, 0
    %3446 = vmatpush.bf16.msra.mxu0 0
    %3447 = vmatpush.bf16.msra.mxu0 0
    %3448 = vmatpush.bf16.msra.mxu0 0
    %3449 = vmatpush.bf16.msra.mxu0 0
    %3450 = vmatpush.bf16.msra.mxu0 0
    %3451 = vmatpush.bf16.msra.mxu0 0
    %3452 = vmatpush.bf16.msra.mxu0 0
    %3453 = vmatpush.bf16.msra.mxu0 %v3441
    %3454 = vmatmul.bf16.gmra.mxu0 %v3444
    %v3455 = vpop.f32.mrf.mxu0
    %v3456 = vadd.f32 0.0, %v3455
    %v3457 = vpop.f32.mrf.mxu0
    %3458 = vdwg.mxu0
    %v3459 = vadd.f32 %v3422, %v3456
    %v3460 = vld [vmem:[#allocation3 + $0xe] sm:$0x1]
    %v3461 = vld [vmem:[#allocation3 + $0x1e] sm:$0x1]
    %v3462 = vpack.c.bf16 %v3460, %v3460
    %v3463 = vpack.c.bf16 %v3461, %v3461
    %s3464 = scalar_lea.vmem %s6, 112
    %v3465 = vld [vmem:[%s3464] sm:$0xf]
    %v3466 = vld [vmem:[%s3464 + $0x4] sm:$0xf]
    %v3469 = vunpack.c.l.b16 %v3462
    %v3470 = vunpack.c.l.b16 %v3463
    %v3471 = vrot.slane %v3470, 7
    %v3472 = vsel %vm2932, %v3471, %v3469
    %v3473 = vpack.c.b16 %v3472, %v3472
    %v3476 = vunpack.c.l.b16 %v3465
    %v3477 = vunpack.c.l.b16 %v3466
    %v3478 = vpack.c.b16 %v3477, %v3476
    %v3481 = vsel %vm2941, %v3473, 0
    %3483 = vmatpush.bf16.msra.mxu0 0
    %3484 = vmatpush.bf16.msra.mxu0 0
    %3485 = vmatpush.bf16.msra.mxu0 0
    %3486 = vmatpush.bf16.msra.mxu0 0
    %3487 = vmatpush.bf16.msra.mxu0 0
    %3488 = vmatpush.bf16.msra.mxu0 0
    %3489 = vmatpush.bf16.msra.mxu0 0
    %3490 = vmatpush.bf16.msra.mxu0 %v3478
    %3491 = vmatmul.bf16.gmra.mxu0 %v3481
    %v3492 = vpop.f32.mrf.mxu0
    %v3493 = vadd.f32 0.0, %v3492
    %v3494 = vpop.f32.mrf.mxu0
    %3495 = vdwg.mxu0
    %v3496 = vadd.f32 %v3459, %v3493
    %v3497 = vld [vmem:[#allocation3 + $0xf] sm:$0x1]
    %v3498 = vld [vmem:[#allocation3 + $0x1f] sm:$0x1]
    %v3499 = vpack.c.bf16 %v3497, %v3497
    %v3500 = vpack.c.bf16 %v3498, %v3498
    %s3501 = scalar_lea.vmem %s6, 120
    %v3502 = vld [vmem:[%s3501] sm:$0xf]
    %v3503 = vld [vmem:[%s3501 + $0x4] sm:$0xf]
    %v3506 = vunpack.c.l.b16 %v3499
    %v3507 = vunpack.c.l.b16 %v3500
    %v3508 = vrot.slane %v3507, 7
    %v3509 = vsel %vm2932, %v3508, %v3506
    %v3510 = vpack.c.b16 %v3509, %v3509
    %v3513 = vunpack.c.l.b16 %v3502
    %v3514 = vunpack.c.l.b16 %v3503
    %v3515 = vpack.c.b16 %v3514, %v3513
    %v3518 = vsel %vm2941, %v3510, 0
    %3520 = vmatpush.bf16.msra.mxu0 0
    %3521 = vmatpush.bf16.msra.mxu0 0
    %3522 = vmatpush.bf16.msra.mxu0 0
    %3523 = vmatpush.bf16.msra.mxu0 0
    %3524 = vmatpush.bf16.msra.mxu0 0
    %3525 = vmatpush.bf16.msra.mxu0 0
    %3526 = vmatpush.bf16.msra.mxu0 0
    %3527 = vmatpush.bf16.msra.mxu0 %v3515
    %3528 = vmatmul.bf16.gmra.mxu0 %v3518
    %v3529 = vpop.f32.mrf.mxu0
    %v3530 = vadd.f32 0.0, %v3529
    %v3531 = vpop.f32.mrf.mxu0
    %3532 = vdwg.mxu0
    %v3533 = vadd.f32 %v3496, %v3530
    %v3534 = vld [vmem:[%s8] sm:$0x1]
    %v3536 = vperm.slane %v3534, 0
    %v3538 = vadd.f32 %v3533, %v3536
    %v3539 = vmax.f32 %v3538, 0.0
    %v3540 = vpack.c.bf16 %v3539, %v3539
    %v3541 = vld [vmem:[%s9] sm:$0xf]
    %v3542 = vld [vmem:[%s9 + $0x4] sm:$0xf]
    %v3543 = vld [vmem:[%s9 + $0x8] sm:$0xf]
    %v3544 = vld [vmem:[%s9 + $0xc] sm:$0xf]
    %v3545 = vld [vmem:[%s10] sm:$0x1]
    %v3547 = vperm.slane %v3545, 0
    %v3553 = vunpack.c.l.b16 %v3541
    %v3554 = vunpack.c.l.b16 %v3542
    %v3555 = vunpack.c.l.b16 %v3543
    %v3556 = vunpack.c.l.b16 %v3544
    %v3557 = vpack.c.b16 %v3554, %v3553
    %v3558 = vpack.c.b16 %v3556, %v3555
    %v3562 = vsel %vm1776, %v3540, 0
    %3564 = vmatpush.bf16.msra.mxu0 0
    %3565 = vmatpush.bf16.msra.mxu0 0
    %3566 = vmatpush.bf16.msra.mxu0 0
    %3567 = vmatpush.bf16.msra.mxu0 0
    %3568 = vmatpush.bf16.msra.mxu0 0
    %3569 = vmatpush.bf16.msra.mxu0 0
    %3570 = vmatpush.bf16.msra.mxu0 %v3558
    %3571 = vmatpush.bf16.msra.mxu0 %v3557
    %3572 = vmatmul.bf16.gmra.mxu0 %v3562
    %v3573 = vpop.f32.mrf.mxu0
    %v3574 = vadd.f32 %v3547, %v3573
    %v3575 = vpop.f32.mrf.mxu0
    %3576 = vdwg.mxu0
    %v3577 = vmax.f32 %v3574, 0.0
    %v3578 = vpack.c.bf16 %v3577, %v3577
    %v3579 = vld [vmem:[%s11] sm:$0xf]
    %v3580 = vld [vmem:[%s11 + $0x4] sm:$0xf]
    %v3581 = vld [vmem:[%s11 + $0x8] sm:$0xf]
    %v3582 = vld [vmem:[%s11 + $0xc] sm:$0xf]
    %v3583 = vld [vmem:[%s12] sm:$0x1]
    %v3585 = vperm.slane %v3583, 0
    %v3591 = vunpack.c.l.b16 %v3579
    %v3592 = vunpack.c.l.b16 %v3580
    %v3593 = vunpack.c.l.b16 %v3581
    %v3594 = vunpack.c.l.b16 %v3582
    %v3595 = vpack.c.b16 %v3592, %v3591
    %v3596 = vpack.c.b16 %v3594, %v3593
    %v3600 = vsel %vm1776, %v3578, 0
    %3602 = vmatpush.bf16.msra.mxu0 0
    %3603 = vmatpush.bf16.msra.mxu0 0
    %3604 = vmatpush.bf16.msra.mxu0 0
    %3605 = vmatpush.bf16.msra.mxu0 0
    %3606 = vmatpush.bf16.msra.mxu0 0
    %3607 = vmatpush.bf16.msra.mxu0 0
    %3608 = vmatpush.bf16.msra.mxu0 %v3596
    %3609 = vmatpush.bf16.msra.mxu0 %v3595
    %3610 = vmatmul.bf16.gmra.mxu0 %v3600
    %v3611 = vpop.f32.mrf.mxu0
    %v3612 = vadd.f32 %v3585, %v3611
    %v3613 = vpop.f32.mrf.mxu0
    %3614 = vdwg.mxu0
    %vm3615 = vcmask 25600
    %3616 = vst.msk [vmem:[#allocation4] sm:$0x3] %vm3615, %v3612
    // Predicated region
    $region54: #{policy_forward.1} parent=1 // pred_check
      _
    $region55: #{policy_forward.1} parent=1 // pred_check_branch
      %3618 = sbr.rel (0) target = $region57
    $region56: #{policy_forward.1} parent=1 // pred_region
      %3620 = vsyncadd [#allocation5], 0
      %s3622 = sshll.u32 [#allocation4], 4
      %s3623 = int_to_ptr.vmem [resolvable:$true] %s3622
      %s3624 = sshll.u32 %s13, 4
      %s3625 = int_to_ptr.hbm [resolvable:$true] %s3624
      %3627 = dma.vmem_to_hbm [thread:$0]  %s3623, 32, %s3625, [#allocation5]
    $region57: #{policy_forward.1} parent=1 // pred_fallthru
      _
    // Predicated region
    $region58: #{policy_forward.1} parent=1 // pred_check
      _
    $region59: #{policy_forward.1} parent=1 // pred_check_branch
      %3629 = sbr.rel (0) target = $region61
    $region60: #{policy_forward.1} parent=1 // pred_region
      %3631 = dma.done [#allocation5], 32
    $region61: #{policy_forward.1} parent=1 // pred_fallthru
      _
    %3632 = vsyncpa [#allocation5], 1

</llo_original>
